<compile_context>
chip_gen: v7x
topology: tpu7x:2x2x1
jax: 0.10.0
libtpu: 0.0.40
codegen_flags: <defaults>
</compile_context>

<pallas_src>
import functools

import jax
import jax.numpy as jnp
from jax.experimental import pallas as pl
from jax.experimental.pallas import tpu as pltpu

EPS = 1e-5  # nn.LayerNorm default eps


# ----------------------------- kernel helpers -------------------------------
def _layernorm(x, gamma, beta):
    mu = jnp.mean(x, axis=-1, keepdims=True)
    var = jnp.mean((x - mu) ** 2, axis=-1, keepdims=True)
    return (x - mu) * jax.lax.rsqrt(var + EPS) * gamma + beta


def _mha(q_in, kv_in, batch, lq, lk, num_heads,
         w_q, b_q, w_kv, b_kv, w_o, b_o, bias):
    """Multi-head attention on batch-flattened activations.

    q_in:  (batch*lq, D) f32        kv_in: (batch*lk, D) f32
    w_q:   (D, D)  bf16             b_q:   (1, D)  f32
    w_kv:  (D, 2D) bf16 (K|V fused) b_kv:  (1, 2D) f32
    w_o:   (D, D)  bf16             b_o:   (1, D)  f32
    bias:  optional (batch*num_heads, 1, lk) additive key-padding bias (f32)
    """
    d_model = q_in.shape[-1]
    d_head = d_model // num_heads
    cdt = w_q.dtype                       # bf16 compute dtype for the MXU
    scale = 1.0 / (d_head ** 0.5)

    # Projections: single wide matmul for K|V (N = 2D); Q is separate because it
    # comes from a different source sequence.  bf16 operands, f32 accumulation.
    q = jnp.dot(q_in.astype(cdt), w_q, preferred_element_type=jnp.float32) + b_q
    kv = jnp.dot(kv_in.astype(cdt), w_kv, preferred_element_type=jnp.float32) + b_kv
    k = kv[:, :d_model]
    v = kv[:, d_model:]
    q = q * scale

    def split_heads(t, seq):
        # (batch*seq, H*Dh) -> (batch*H, seq, Dh) using only static lane slices,
        # leading-dim stacks and leading-dim reshapes (layout-cheap on TPU).
        parts = [t[:, h * d_head:(h + 1) * d_head].reshape(batch, seq, d_head)
                 for h in range(num_heads)]
        return jnp.stack(parts, axis=1).reshape(batch * num_heads, seq, d_head)

    qh = split_heads(q, lq).astype(cdt)
    kh = split_heads(k, lk).astype(cdt)
    vh = split_heads(v, lk).astype(cdt)

    # One batched matmul over (batch*heads); contraction on the last dims of
    # both operands, so no explicit transpose of K is materialized.
    s = jnp.einsum("bqd,bkd->bqk", qh, kh, preferred_element_type=jnp.float32)
    if bias is not None:
        s = s + bias                                      # (B*H, 1, lk) bcast
    s = s - jnp.max(s, axis=-1, keepdims=True)
    p = jnp.exp(s)
    p = p * pl.reciprocal(jnp.sum(p, axis=-1, keepdims=True), approx=True)
    o = jnp.einsum("bqk,bkd->bqd", p.astype(cdt), vh,
                   preferred_element_type=jnp.float32)    # (B*H, lq, Dh)

    # Merge heads back to (batch*lq, D) and apply the output projection.
    o = o.reshape(batch, num_heads, lq, d_head)
    merged = jnp.concatenate([o[:, h] for h in range(num_heads)], axis=-1)
    merged = merged.reshape(batch * lq, d_model)
    return jnp.dot(merged.astype(cdt), w_o,
                   preferred_element_type=jnp.float32) + b_o


# -------------------------------- kernel ------------------------------------
def transformer_block_kernel(num_heads,
                             x_ref, xpre_ref, xdrug_ref, bias_ref,
                             ln_g_ref, ln_b_ref,
                             sa_wq_ref, sa_bq_ref, sa_wkv_ref, sa_bkv_ref,
                             sa_wo_ref, sa_bo_ref,
                             ca_wq_ref, ca_bq_ref, ca_wkv_ref, ca_bkv_ref,
                             ca_wo_ref, ca_bo_ref,
                             w12_ref, b12_ref, w3_ref, b3_ref,
                             out_ref):
    batch, lq, d_model = x_ref.shape
    lk = xpre_ref.shape[1]
    ld = xdrug_ref.shape[1]
    m_hidden = w3_ref.shape[0]

    ln_g = ln_g_ref[...]                 # (5, D)
    ln_b = ln_b_ref[...]                 # (5, D)

    # Fold batch into the row (sublane) dim; L is a multiple of 8 so these
    # reshapes are layout no-ops.
    x = x_ref[...].reshape(batch * lq, d_model)
    xp = xpre_ref[...].reshape(batch * lk, d_model)
    xd = xdrug_ref[...].reshape(batch * ld, d_model)

    # ---- self attention:  x = mha(q=norm2(x), k=v=norm1(x_pre)) + x ---------
    xp_n = _layernorm(xp, ln_g[0:1], ln_b[0:1])
    q_in = _layernorm(x, ln_g[1:2], ln_b[1:2])
    x = x + _mha(q_in, xp_n, batch, lq, lk, num_heads,
                 sa_wq_ref[...], sa_bq_ref[...], sa_wkv_ref[...], sa_bkv_ref[...],
                 sa_wo_ref[...], sa_bo_ref[...], None)

    # ---- cross attention: x = mhca(q=norm3(x), k=v=norm4(x_drug), mask) + x -
    xd_n = _layernorm(xd, ln_g[3:4], ln_b[3:4])
    q_in2 = _layernorm(x, ln_g[2:3], ln_b[2:3])
    x = x + _mha(q_in2, xd_n, batch, lq, ld, num_heads,
                 ca_wq_ref[...], ca_bq_ref[...], ca_wkv_ref[...], ca_bkv_ref[...],
                 ca_wo_ref[...], ca_bo_ref[...], bias_ref[...])

    # ---- gated MLP: x = W3( silu(W1 h) * (W2 h) ) + x -----------------------
    # TODO(synk): GatedMLP source not provided; SwiGLU-style gating assumed.
    h = _layernorm(x, ln_g[4:5], ln_b[4:5])
    gu = jnp.dot(h.astype(w12_ref.dtype), w12_ref[...],       # fused W1|W2
                 preferred_element_type=jnp.float32) + b12_ref[...]
    g = gu[:, :m_hidden]
    u = gu[:, m_hidden:]
    gated = (g * jax.nn.sigmoid(g)) * u
    ffn = jnp.dot(gated.astype(w3_ref.dtype), w3_ref[...],
                  preferred_element_type=jnp.float32) + b3_ref[...]
    x = x + ffn

    # NOTE: at production sizes D is a multiple of 128 so this store is already
    # lane-dense; at the toy D=32 a (B, Lq*D) re-layout would cost more inside
    # the kernel than the masked store it removes.
    out_ref[...] = x.reshape(batch, lq, d_model)


# ------------------------------- wrapper -------------------------------------
def basic_transformer_block(x, x_pre, x_drug, mask, params, num_heads):
    B, Lq, D = x.shape
    Ld = x_drug.shape[1]
    cdt = jnp.bfloat16

    def fuse_kv(wqkv, bqkv):
        w_q = wqkv[0].astype(cdt)                                        # (D, D)
        w_kv = jnp.concatenate([wqkv[1], wqkv[2]], axis=1).astype(cdt)   # (D, 2D)
        b_q = bqkv[0]                                                    # (1, D)
        b_kv = jnp.concatenate([bqkv[1], bqkv[2]], axis=1)               # (1, 2D)
        return w_q, b_q, w_kv, b_kv

    sa_wq, sa_bq, sa_wkv, sa_bkv = fuse_kv(params["sa_wqkv"], params["sa_bqkv"])
    ca_wq, ca_bq, ca_wkv, ca_bkv = fuse_kv(params["ca_wqkv"], params["ca_bqkv"])
    sa_wo = params["sa_wo"].astype(cdt)
    ca_wo = params["ca_wo"].astype(cdt)
    w12 = jnp.concatenate([params["ffn_w1"], params["ffn_w2"]], axis=1).astype(cdt)
    b12 = jnp.concatenate([params["ffn_b1"], params["ffn_b2"]], axis=1)
    w3 = params["ffn_w3"].astype(cdt)

    # key_padding_mask (True == ignore) -> precomputed additive bias, already
    # broadcast to one row per (batch, head).
    bias = jnp.where(mask, -1e30, 0.0).astype(jnp.float32)               # (B, Ld)
    bias = jnp.broadcast_to(bias[:, None, None, :], (B, num_heads, 1, Ld))
    bias = bias.reshape(B * num_heads, 1, Ld)

    kernel = functools.partial(transformer_block_kernel, num_heads)
    # Whole problem in one grid-less invocation: no per-grid-step overhead, no
    # double-buffered weight copies, everything VMEM-resident.  For large B,
    # reintroduce a "parallel" batch-block grid axis for megacore sharding.
    return pl.pallas_call(
        kernel,
        out_shape=jax.ShapeDtypeStruct((B, Lq, D), jnp.float32),
        compiler_params=pltpu.CompilerParams(
            vmem_limit_bytes=48 * 1024 * 1024),
    )(x, x_pre, x_drug, bias,
      params["ln_g"], params["ln_b"],
      sa_wq, sa_bq, sa_wkv, sa_bkv, sa_wo, params["sa_bo"],
      ca_wq, ca_bq, ca_wkv, ca_bkv, ca_wo, params["ca_bo"],
      w12, b12, w3, params["ffn_b3"])


# ---------------------- pure-JAX reference (for checking) --------------------
def _ref_layernorm(x, g, b):
    mu = jnp.mean(x, axis=-1, keepdims=True)
    var = jnp.mean((x - mu) ** 2, axis=-1, keepdims=True)
    return (x - mu) / jnp.sqrt(var + EPS) * g + b


def _ref_mha(q_in, kv_in, w_qkv, b_qkv, w_o, b_o, num_heads, key_pad=None):
    B, Lq, D = q_in.shape
    Lk = kv_in.shape[1]
    Dh = D // num_heads
    q = q_in @ w_qkv[0] + b_qkv[0]
    k = kv_in @ w_qkv[1] + b_qkv[1]
    v = kv_in @ w_qkv[2] + b_qkv[2]
    q = q.reshape(B, Lq, num_heads, Dh).transpose(0, 2, 1, 3)
    k = k.reshape(B, Lk, num_heads, Dh).transpose(0, 2, 1, 3)
    v = v.reshape(B, Lk, num_heads, Dh).transpose(0, 2, 1, 3)
    s = jnp.einsum("bhqd,bhkd->bhqk", q, k) / (Dh ** 0.5)
    if key_pad is not None:
        s = s + jnp.where(key_pad[:, None, None, :], -1e30, 0.0)
    p = jax.nn.softmax(s, axis=-1)
    o = jnp.einsum("bhqk,bhkd->bhqd", p, v).transpose(0, 2, 1, 3).reshape(B, Lq, D)
    return o @ w_o + b_o


def reference_block(x, x_pre, x_drug, mask, p, num_heads):
    xp_n = _ref_layernorm(x_pre, p["ln_g"][0], p["ln_b"][0])
    q = _ref_layernorm(x, p["ln_g"][1], p["ln_b"][1])
    x = _ref_mha(q, xp_n, p["sa_wqkv"], p["sa_bqkv"], p["sa_wo"], p["sa_bo"],
                 num_heads) + x
    xd_n = _ref_layernorm(x_drug, p["ln_g"][3], p["ln_b"][3])
    q = _ref_layernorm(x, p["ln_g"][2], p["ln_b"][2])
    x = _ref_mha(q, xd_n, p["ca_wqkv"], p["ca_bqkv"], p["ca_wo"], p["ca_bo"],
                 num_heads, key_pad=mask) + x
    h = _ref_layernorm(x, p["ln_g"][4], p["ln_b"][4])
    g = h @ p["ffn_w1"] + p["ffn_b1"]
    u = h @ p["ffn_w2"] + p["ffn_b2"]
    ffn = (jax.nn.silu(g) * u) @ p["ffn_w3"] + p["ffn_b3"]
    return x + ffn


# --------------------------------- main --------------------------------------
def init_params(key, d_model, mlp_hidden):
    ks = jax.random.split(key, 16)
    s = 0.05
    n = lambda k, shape: (s * jax.random.normal(k, shape)).astype(jnp.float32)
    return {
        "ln_g": jnp.ones((5, d_model), jnp.float32),
        "ln_b": jnp.zeros((5, d_model), jnp.float32),
        "sa_wqkv": n(ks[0], (3, d_model, d_model)),
        "sa_bqkv": n(ks[1], (3, 1, d_model)),
        "sa_wo": n(ks[2], (d_model, d_model)),
        "sa_bo": n(ks[3], (1, d_model)),
        "ca_wqkv": n(ks[4], (3, d_model, d_model)),
        "ca_bqkv": n(ks[5], (3, 1, d_model)),
        "ca_wo": n(ks[6], (d_model, d_model)),
        "ca_bo": n(ks[7], (1, d_model)),
        "ffn_w1": n(ks[8], (d_model, mlp_hidden)),
        "ffn_b1": n(ks[9], (1, mlp_hidden)),
        "ffn_w2": n(ks[10], (d_model, mlp_hidden)),
        "ffn_b2": n(ks[11], (1, mlp_hidden)),
        "ffn_w3": n(ks[12], (mlp_hidden, d_model)),
        "ffn_b3": n(ks[13], (1, d_model)),
    }


if __name__ == "__main__":
    B, Lq, Lk, Ld = 2, 8, 8, 8
    d_model, num_heads, mlp_hidden = 32, 4, 64

    key = jax.random.PRNGKey(0)
    kx, kp, kd, kparam = jax.random.split(key, 4)
    x = jax.random.normal(kx, (B, Lq, d_model), jnp.float32)
    x_pre = jax.random.normal(kp, (B, Lk, d_model), jnp.float32)
    x_drug = jax.random.normal(kd, (B, Ld, d_model), jnp.float32)
    # key_padding_mask: True == pad (ignore).  Keep at least one valid key/batch.
    mask = jnp.array([[False] * Ld,
                      [False, False, False, False, True, True, True, True]],
                     dtype=jnp.bool_)

    params = init_params(kparam, d_model, mlp_hidden)

    out = basic_transformer_block(x, x_pre, x_drug, mask, params, num_heads)
    out = jax.block_until_ready(out)

    ref = reference_block(x, x_pre, x_drug, mask, params, num_heads)
    assert out.shape == (B, Lq, d_model)
    assert jnp.all(jnp.isfinite(out))
    # bf16 MXU operands + approx-reciprocal softmax -> tolerance above f32 ref.
    assert jnp.allclose(out, ref, atol=2e-2, rtol=2e-2), float(
        jnp.max(jnp.abs(out - ref)))

    print("KERNEL_OK")
</pallas_src>

<mosaic_0001>
module attributes {stable_mosaic.version = 11 : i64} {
  func.func @transformer_block_kernel(%arg0: memref<2x8x32xf32, #tpu.memory_space<vmem>>, %arg1: memref<2x8x32xf32, #tpu.memory_space<vmem>>, %arg2: memref<2x8x32xf32, #tpu.memory_space<vmem>>, %arg3: memref<8x1x8xf32, #tpu.memory_space<vmem>>, %arg4: memref<5x32xf32, #tpu.memory_space<vmem>>, %arg5: memref<5x32xf32, #tpu.memory_space<vmem>>, %arg6: memref<32x32xbf16, #tpu.memory_space<vmem>>, %arg7: memref<1x32xf32, #tpu.memory_space<vmem>>, %arg8: memref<32x64xbf16, #tpu.memory_space<vmem>>, %arg9: memref<1x64xf32, #tpu.memory_space<vmem>>, %arg10: memref<32x32xbf16, #tpu.memory_space<vmem>>, %arg11: memref<1x32xf32, #tpu.memory_space<vmem>>, %arg12: memref<32x32xbf16, #tpu.memory_space<vmem>>, %arg13: memref<1x32xf32, #tpu.memory_space<vmem>>, %arg14: memref<32x64xbf16, #tpu.memory_space<vmem>>, %arg15: memref<1x64xf32, #tpu.memory_space<vmem>>, %arg16: memref<32x32xbf16, #tpu.memory_space<vmem>>, %arg17: memref<1x32xf32, #tpu.memory_space<vmem>>, %arg18: memref<32x128xbf16, #tpu.memory_space<vmem>>, %arg19: memref<1x128xf32, #tpu.memory_space<vmem>>, %arg20: memref<64x32xbf16, #tpu.memory_space<vmem>>, %arg21: memref<1x32xf32, #tpu.memory_space<vmem>>, %arg22: memref<2x8x32xf32, #tpu.memory_space<vmem>>) attributes {dimension_semantics = [], scalar_prefetch = 0 : i64, scratch_operands = 0 : i64, tpu.core_type = #tpu.core_type<tc>} {
    %c0 = arith.constant 0 : index
    %c0_0 = arith.constant 0 : index
    %0 = vector.load %arg4[%c0, %c0_0] : memref<5x32xf32, #tpu.memory_space<vmem>>, vector<5x32xf32>
    %c0_1 = arith.constant 0 : index
    %c0_2 = arith.constant 0 : index
    %1 = vector.load %arg5[%c0_1, %c0_2] : memref<5x32xf32, #tpu.memory_space<vmem>>, vector<5x32xf32>
    %c0_3 = arith.constant 0 : index
    %c0_4 = arith.constant 0 : index
    %c0_5 = arith.constant 0 : index
    %2 = vector.load %arg0[%c0_3, %c0_4, %c0_5] : memref<2x8x32xf32, #tpu.memory_space<vmem>>, vector<2x8x32xf32>
    %3 = vector.shape_cast %2 : vector<2x8x32xf32> to vector<16x32xf32>
    %c0_6 = arith.constant 0 : index
    %c0_7 = arith.constant 0 : index
    %c0_8 = arith.constant 0 : index
    %4 = vector.load %arg1[%c0_6, %c0_7, %c0_8] : memref<2x8x32xf32, #tpu.memory_space<vmem>>, vector<2x8x32xf32>
    %5 = vector.shape_cast %4 : vector<2x8x32xf32> to vector<16x32xf32>
    %c0_9 = arith.constant 0 : index
    %c0_10 = arith.constant 0 : index
    %c0_11 = arith.constant 0 : index
    %6 = vector.load %arg2[%c0_9, %c0_10, %c0_11] : memref<2x8x32xf32, #tpu.memory_space<vmem>>, vector<2x8x32xf32>
    %7 = vector.shape_cast %6 : vector<2x8x32xf32> to vector<16x32xf32>
    %8 = vector.extract_strided_slice %0 {offsets = [0, 0], sizes = [1, 32], strides = [1, 1]} : vector<5x32xf32> to vector<1x32xf32>
    %9 = vector.extract_strided_slice %1 {offsets = [0, 0], sizes = [1, 32], strides = [1, 1]} : vector<5x32xf32> to vector<1x32xf32>
    %cst = arith.constant dense<0.000000e+00> : vector<16xf32>
    %10 = vector.multi_reduction <add>, %5, %cst [1] : vector<16x32xf32> to vector<16xf32>
    %11 = vector.shape_cast %10 : vector<16xf32> to vector<16x1xf32>
    %cst_12 = arith.constant 3.200000e+01 : f32
    %12 = vector.broadcast %cst_12 : f32 to vector<16x1xf32>
    %13 = arith.divf %11, %12 : vector<16x1xf32>
    %14 = vector.broadcast %13 : vector<16x1xf32> to vector<16x32xf32>
    %15 = arith.subf %5, %14 : vector<16x32xf32>
    %16 = arith.mulf %15, %15 : vector<16x32xf32>
    %cst_13 = arith.constant dense<0.000000e+00> : vector<16xf32>
    %17 = vector.multi_reduction <add>, %16, %cst_13 [1] : vector<16x32xf32> to vector<16xf32>
    %18 = vector.shape_cast %17 : vector<16xf32> to vector<16x1xf32>
    %cst_14 = arith.constant 3.200000e+01 : f32
    %19 = vector.broadcast %cst_14 : f32 to vector<16x1xf32>
    %20 = arith.divf %18, %19 : vector<16x1xf32>
    %21 = vector.broadcast %13 : vector<16x1xf32> to vector<16x32xf32>
    %22 = arith.subf %5, %21 : vector<16x32xf32>
    %cst_15 = arith.constant 9.99999974E-6 : f32
    %23 = vector.broadcast %cst_15 : f32 to vector<16x1xf32>
    %24 = arith.addf %20, %23 : vector<16x1xf32>
    %25 = math.rsqrt %24 : vector<16x1xf32>
    %26 = vector.broadcast %25 : vector<16x1xf32> to vector<16x32xf32>
    %27 = arith.mulf %22, %26 : vector<16x32xf32>
    %28 = vector.broadcast %8 : vector<1x32xf32> to vector<16x32xf32>
    %29 = arith.mulf %27, %28 : vector<16x32xf32>
    %30 = vector.broadcast %9 : vector<1x32xf32> to vector<16x32xf32>
    %31 = arith.addf %29, %30 : vector<16x32xf32>
    %32 = vector.extract_strided_slice %0 {offsets = [1, 0], sizes = [1, 32], strides = [1, 1]} : vector<5x32xf32> to vector<1x32xf32>
    %33 = vector.extract_strided_slice %1 {offsets = [1, 0], sizes = [1, 32], strides = [1, 1]} : vector<5x32xf32> to vector<1x32xf32>
    %cst_16 = arith.constant dense<0.000000e+00> : vector<16xf32>
    %34 = vector.multi_reduction <add>, %3, %cst_16 [1] : vector<16x32xf32> to vector<16xf32>
    %35 = vector.shape_cast %34 : vector<16xf32> to vector<16x1xf32>
    %cst_17 = arith.constant 3.200000e+01 : f32
    %36 = vector.broadcast %cst_17 : f32 to vector<16x1xf32>
    %37 = arith.divf %35, %36 : vector<16x1xf32>
    %38 = vector.broadcast %37 : vector<16x1xf32> to vector<16x32xf32>
    %39 = arith.subf %3, %38 : vector<16x32xf32>
    %40 = arith.mulf %39, %39 : vector<16x32xf32>
    %cst_18 = arith.constant dense<0.000000e+00> : vector<16xf32>
    %41 = vector.multi_reduction <add>, %40, %cst_18 [1] : vector<16x32xf32> to vector<16xf32>
    %42 = vector.shape_cast %41 : vector<16xf32> to vector<16x1xf32>
    %cst_19 = arith.constant 3.200000e+01 : f32
    %43 = vector.broadcast %cst_19 : f32 to vector<16x1xf32>
    %44 = arith.divf %42, %43 : vector<16x1xf32>
    %45 = vector.broadcast %37 : vector<16x1xf32> to vector<16x32xf32>
    %46 = arith.subf %3, %45 : vector<16x32xf32>
    %cst_20 = arith.constant 9.99999974E-6 : f32
    %47 = vector.broadcast %cst_20 : f32 to vector<16x1xf32>
    %48 = arith.addf %44, %47 : vector<16x1xf32>
    %49 = math.rsqrt %48 : vector<16x1xf32>
    %50 = vector.broadcast %49 : vector<16x1xf32> to vector<16x32xf32>
    %51 = arith.mulf %46, %50 : vector<16x32xf32>
    %52 = vector.broadcast %32 : vector<1x32xf32> to vector<16x32xf32>
    %53 = arith.mulf %51, %52 : vector<16x32xf32>
    %54 = vector.broadcast %33 : vector<1x32xf32> to vector<16x32xf32>
    %55 = arith.addf %53, %54 : vector<16x32xf32>
    %c0_21 = arith.constant 0 : index
    %c0_22 = arith.constant 0 : index
    %56 = vector.load %arg6[%c0_21, %c0_22] : memref<32x32xbf16, #tpu.memory_space<vmem>>, vector<32x32xbf16>
    %c0_23 = arith.constant 0 : index
    %c0_24 = arith.constant 0 : index
    %57 = vector.load %arg7[%c0_23, %c0_24] : memref<1x32xf32, #tpu.memory_space<vmem>>, vector<1x32xf32>
    %c0_25 = arith.constant 0 : index
    %c0_26 = arith.constant 0 : index
    %58 = vector.load %arg8[%c0_25, %c0_26] : memref<32x64xbf16, #tpu.memory_space<vmem>>, vector<32x64xbf16>
    %c0_27 = arith.constant 0 : index
    %c0_28 = arith.constant 0 : index
    %59 = vector.load %arg9[%c0_27, %c0_28] : memref<1x64xf32, #tpu.memory_space<vmem>>, vector<1x64xf32>
    %c0_29 = arith.constant 0 : index
    %c0_30 = arith.constant 0 : index
    %60 = vector.load %arg10[%c0_29, %c0_30] : memref<32x32xbf16, #tpu.memory_space<vmem>>, vector<32x32xbf16>
    %c0_31 = arith.constant 0 : index
    %c0_32 = arith.constant 0 : index
    %61 = vector.load %arg11[%c0_31, %c0_32] : memref<1x32xf32, #tpu.memory_space<vmem>>, vector<1x32xf32>
    %62 = arith.truncf %55 : vector<16x32xf32> to vector<16x32xbf16>
    %cst_33 = arith.constant dense<0.000000e+00> : vector<16x32xf32>
    %63 = tpu.matmul %62, %56, %cst_33 {dimension_numbers = #tpu.dot_dimension_numbers<[1], [0], [0], [1], [0, 0, 1, 1], [], []>} : vector<16x32xbf16>, vector<32x32xbf16>, vector<16x32xf32> -> vector<16x32xf32>
    %64 = vector.broadcast %57 : vector<1x32xf32> to vector<16x32xf32>
    %65 = arith.addf %63, %64 : vector<16x32xf32>
    %66 = arith.truncf %31 : vector<16x32xf32> to vector<16x32xbf16>
    %cst_34 = arith.constant dense<0.000000e+00> : vector<16x64xf32>
    %67 = tpu.matmul %66, %58, %cst_34 {dimension_numbers = #tpu.dot_dimension_numbers<[1], [0], [0], [1], [0, 0, 1, 1], [], []>} : vector<16x32xbf16>, vector<32x64xbf16>, vector<16x64xf32> -> vector<16x64xf32>
    %68 = vector.broadcast %59 : vector<1x64xf32> to vector<16x64xf32>
    %69 = arith.addf %67, %68 : vector<16x64xf32>
    %70 = vector.extract_strided_slice %69 {offsets = [0, 0], sizes = [16, 32], strides = [1, 1]} : vector<16x64xf32> to vector<16x32xf32>
    %71 = vector.extract_strided_slice %69 {offsets = [0, 32], sizes = [16, 32], strides = [1, 1]} : vector<16x64xf32> to vector<16x32xf32>
    %cst_35 = arith.constant 0.353553385 : f32
    %72 = vector.broadcast %cst_35 : f32 to vector<16x32xf32>
    %73 = arith.mulf %65, %72 : vector<16x32xf32>
    %74 = vector.extract_strided_slice %73 {offsets = [0, 0], sizes = [16, 8], strides = [1, 1]} : vector<16x32xf32> to vector<16x8xf32>
    %75 = vector.shape_cast %74 : vector<16x8xf32> to vector<2x8x8xf32>
    %76 = vector.extract_strided_slice %73 {offsets = [0, 8], sizes = [16, 8], strides = [1, 1]} : vector<16x32xf32> to vector<16x8xf32>
    %77 = vector.shape_cast %76 : vector<16x8xf32> to vector<2x8x8xf32>
    %78 = vector.extract_strided_slice %73 {offsets = [0, 16], sizes = [16, 8], strides = [1, 1]} : vector<16x32xf32> to vector<16x8xf32>
    %79 = vector.shape_cast %78 : vector<16x8xf32> to vector<2x8x8xf32>
    %80 = vector.extract_strided_slice %73 {offsets = [0, 24], sizes = [16, 8], strides = [1, 1]} : vector<16x32xf32> to vector<16x8xf32>
    %81 = vector.shape_cast %80 : vector<16x8xf32> to vector<2x8x8xf32>
    %82 = vector.shape_cast %75 : vector<2x8x8xf32> to vector<2x1x8x8xf32>
    %83 = vector.shape_cast %77 : vector<2x8x8xf32> to vector<2x1x8x8xf32>
    %84 = vector.shape_cast %79 : vector<2x8x8xf32> to vector<2x1x8x8xf32>
    %85 = vector.shape_cast %81 : vector<2x8x8xf32> to vector<2x1x8x8xf32>
    %86 = tpu.concatenate %82, %83, %84, %85 in 1 : vector<2x1x8x8xf32>, vector<2x1x8x8xf32>, vector<2x1x8x8xf32>, vector<2x1x8x8xf32> -> vector<2x4x8x8xf32>
    %87 = vector.shape_cast %86 : vector<2x4x8x8xf32> to vector<8x8x8xf32>
    %88 = arith.truncf %87 : vector<8x8x8xf32> to vector<8x8x8xbf16>
    %89 = vector.extract_strided_slice %70 {offsets = [0, 0], sizes = [16, 8], strides = [1, 1]} : vector<16x32xf32> to vector<16x8xf32>
    %90 = vector.shape_cast %89 : vector<16x8xf32> to vector<2x8x8xf32>
    %91 = vector.extract_strided_slice %70 {offsets = [0, 8], sizes = [16, 8], strides = [1, 1]} : vector<16x32xf32> to vector<16x8xf32>
    %92 = vector.shape_cast %91 : vector<16x8xf32> to vector<2x8x8xf32>
    %93 = vector.extract_strided_slice %70 {offsets = [0, 16], sizes = [16, 8], strides = [1, 1]} : vector<16x32xf32> to vector<16x8xf32>
    %94 = vector.shape_cast %93 : vector<16x8xf32> to vector<2x8x8xf32>
    %95 = vector.extract_strided_slice %70 {offsets = [0, 24], sizes = [16, 8], strides = [1, 1]} : vector<16x32xf32> to vector<16x8xf32>
    %96 = vector.shape_cast %95 : vector<16x8xf32> to vector<2x8x8xf32>
    %97 = vector.shape_cast %90 : vector<2x8x8xf32> to vector<2x1x8x8xf32>
    %98 = vector.shape_cast %92 : vector<2x8x8xf32> to vector<2x1x8x8xf32>
    %99 = vector.shape_cast %94 : vector<2x8x8xf32> to vector<2x1x8x8xf32>
    %100 = vector.shape_cast %96 : vector<2x8x8xf32> to vector<2x1x8x8xf32>
    %101 = tpu.concatenate %97, %98, %99, %100 in 1 : vector<2x1x8x8xf32>, vector<2x1x8x8xf32>, vector<2x1x8x8xf32>, vector<2x1x8x8xf32> -> vector<2x4x8x8xf32>
    %102 = vector.shape_cast %101 : vector<2x4x8x8xf32> to vector<8x8x8xf32>
    %103 = arith.truncf %102 : vector<8x8x8xf32> to vector<8x8x8xbf16>
    %104 = vector.extract_strided_slice %71 {offsets = [0, 0], sizes = [16, 8], strides = [1, 1]} : vector<16x32xf32> to vector<16x8xf32>
    %105 = vector.shape_cast %104 : vector<16x8xf32> to vector<2x8x8xf32>
    %106 = vector.extract_strided_slice %71 {offsets = [0, 8], sizes = [16, 8], strides = [1, 1]} : vector<16x32xf32> to vector<16x8xf32>
    %107 = vector.shape_cast %106 : vector<16x8xf32> to vector<2x8x8xf32>
    %108 = vector.extract_strided_slice %71 {offsets = [0, 16], sizes = [16, 8], strides = [1, 1]} : vector<16x32xf32> to vector<16x8xf32>
    %109 = vector.shape_cast %108 : vector<16x8xf32> to vector<2x8x8xf32>
    %110 = vector.extract_strided_slice %71 {offsets = [0, 24], sizes = [16, 8], strides = [1, 1]} : vector<16x32xf32> to vector<16x8xf32>
    %111 = vector.shape_cast %110 : vector<16x8xf32> to vector<2x8x8xf32>
    %112 = vector.shape_cast %105 : vector<2x8x8xf32> to vector<2x1x8x8xf32>
    %113 = vector.shape_cast %107 : vector<2x8x8xf32> to vector<2x1x8x8xf32>
    %114 = vector.shape_cast %109 : vector<2x8x8xf32> to vector<2x1x8x8xf32>
    %115 = vector.shape_cast %111 : vector<2x8x8xf32> to vector<2x1x8x8xf32>
    %116 = tpu.concatenate %112, %113, %114, %115 in 1 : vector<2x1x8x8xf32>, vector<2x1x8x8xf32>, vector<2x1x8x8xf32>, vector<2x1x8x8xf32> -> vector<2x4x8x8xf32>
    %117 = vector.shape_cast %116 : vector<2x4x8x8xf32> to vector<8x8x8xf32>
    %118 = arith.truncf %117 : vector<8x8x8xf32> to vector<8x8x8xbf16>
    "tpu.trace_start"() <{level = 10 : i32, message = "bqd,bkd->bqk"}> : () -> ()
    %cst_36 = arith.constant dense<0.000000e+00> : vector<8x8x8xf32>
    %119 = tpu.matmul %88, %103, %cst_36 {dimension_numbers = #tpu.dot_dimension_numbers<[2], [2], [1], [1], [0, 0, 0, 1, 1, 1], [0], [0]>} : vector<8x8x8xbf16>, vector<8x8x8xbf16>, vector<8x8x8xf32> -> vector<8x8x8xf32>
    "tpu.trace_stop"() : () -> ()
    %cst_37 = arith.constant dense<0xFF800000> : vector<8x8xf32>
    %120 = vector.multi_reduction <maximumf>, %119, %cst_37 [2] : vector<8x8x8xf32> to vector<8x8xf32>
    %121 = vector.shape_cast %120 : vector<8x8xf32> to vector<8x8x1xf32>
    %122 = vector.broadcast %121 : vector<8x8x1xf32> to vector<8x8x8xf32>
    %123 = arith.subf %119, %122 : vector<8x8x8xf32>
    %124 = math.exp %123 : vector<8x8x8xf32>
    %cst_38 = arith.constant dense<0.000000e+00> : vector<8x8xf32>
    %125 = vector.multi_reduction <add>, %124, %cst_38 [2] : vector<8x8x8xf32> to vector<8x8xf32>
    %126 = vector.shape_cast %125 : vector<8x8xf32> to vector<8x8x1xf32>
    %127 = tpu.reciprocal %126 {approx = true} : vector<8x8x1xf32> -> vector<8x8x1xf32>
    %128 = vector.broadcast %127 : vector<8x8x1xf32> to vector<8x8x8xf32>
    %129 = arith.mulf %124, %128 : vector<8x8x8xf32>
    %130 = arith.truncf %129 : vector<8x8x8xf32> to vector<8x8x8xbf16>
    "tpu.trace_start"() <{level = 10 : i32, message = "bqk,bkd->bqd"}> : () -> ()
    %cst_39 = arith.constant dense<0.000000e+00> : vector<8x8x8xf32>
    %131 = tpu.matmul %130, %118, %cst_39 {dimension_numbers = #tpu.dot_dimension_numbers<[2], [1], [1], [2], [0, 0, 0, 1, 1, 2], [0], [0]>} : vector<8x8x8xbf16>, vector<8x8x8xbf16>, vector<8x8x8xf32> -> vector<8x8x8xf32>
    "tpu.trace_stop"() : () -> ()
    %132 = vector.shape_cast %131 : vector<8x8x8xf32> to vector<2x4x8x8xf32>
    %133 = vector.extract_strided_slice %132 {offsets = [0, 0, 0, 0], sizes = [2, 1, 8, 8], strides = [1, 1, 1, 1]} : vector<2x4x8x8xf32> to vector<2x1x8x8xf32>
    %134 = vector.shape_cast %133 : vector<2x1x8x8xf32> to vector<2x8x8xf32>
    %135 = vector.extract_strided_slice %132 {offsets = [0, 1, 0, 0], sizes = [2, 1, 8, 8], strides = [1, 1, 1, 1]} : vector<2x4x8x8xf32> to vector<2x1x8x8xf32>
    %136 = vector.shape_cast %135 : vector<2x1x8x8xf32> to vector<2x8x8xf32>
    %137 = vector.extract_strided_slice %132 {offsets = [0, 2, 0, 0], sizes = [2, 1, 8, 8], strides = [1, 1, 1, 1]} : vector<2x4x8x8xf32> to vector<2x1x8x8xf32>
    %138 = vector.shape_cast %137 : vector<2x1x8x8xf32> to vector<2x8x8xf32>
    %139 = vector.extract_strided_slice %132 {offsets = [0, 3, 0, 0], sizes = [2, 1, 8, 8], strides = [1, 1, 1, 1]} : vector<2x4x8x8xf32> to vector<2x1x8x8xf32>
    %140 = vector.shape_cast %139 : vector<2x1x8x8xf32> to vector<2x8x8xf32>
    %141 = tpu.concatenate %134, %136, %138, %140 in 2 : vector<2x8x8xf32>, vector<2x8x8xf32>, vector<2x8x8xf32>, vector<2x8x8xf32> -> vector<2x8x32xf32>
    %142 = vector.shape_cast %141 : vector<2x8x32xf32> to vector<16x32xf32>
    %143 = arith.truncf %142 : vector<16x32xf32> to vector<16x32xbf16>
    %cst_40 = arith.constant dense<0.000000e+00> : vector<16x32xf32>
    %144 = tpu.matmul %143, %60, %cst_40 {dimension_numbers = #tpu.dot_dimension_numbers<[1], [0], [0], [1], [0, 0, 1, 1], [], []>} : vector<16x32xbf16>, vector<32x32xbf16>, vector<16x32xf32> -> vector<16x32xf32>
    %145 = vector.broadcast %61 : vector<1x32xf32> to vector<16x32xf32>
    %146 = arith.addf %144, %145 : vector<16x32xf32>
    %147 = arith.addf %3, %146 : vector<16x32xf32>
    %148 = vector.extract_strided_slice %0 {offsets = [3, 0], sizes = [1, 32], strides = [1, 1]} : vector<5x32xf32> to vector<1x32xf32>
    %149 = vector.extract_strided_slice %1 {offsets = [3, 0], sizes = [1, 32], strides = [1, 1]} : vector<5x32xf32> to vector<1x32xf32>
    %cst_41 = arith.constant dense<0.000000e+00> : vector<16xf32>
    %150 = vector.multi_reduction <add>, %7, %cst_41 [1] : vector<16x32xf32> to vector<16xf32>
    %151 = vector.shape_cast %150 : vector<16xf32> to vector<16x1xf32>
    %cst_42 = arith.constant 3.200000e+01 : f32
    %152 = vector.broadcast %cst_42 : f32 to vector<16x1xf32>
    %153 = arith.divf %151, %152 : vector<16x1xf32>
    %154 = vector.broadcast %153 : vector<16x1xf32> to vector<16x32xf32>
    %155 = arith.subf %7, %154 : vector<16x32xf32>
    %156 = arith.mulf %155, %155 : vector<16x32xf32>
    %cst_43 = arith.constant dense<0.000000e+00> : vector<16xf32>
    %157 = vector.multi_reduction <add>, %156, %cst_43 [1] : vector<16x32xf32> to vector<16xf32>
    %158 = vector.shape_cast %157 : vector<16xf32> to vector<16x1xf32>
    %cst_44 = arith.constant 3.200000e+01 : f32
    %159 = vector.broadcast %cst_44 : f32 to vector<16x1xf32>
    %160 = arith.divf %158, %159 : vector<16x1xf32>
    %161 = vector.broadcast %153 : vector<16x1xf32> to vector<16x32xf32>
    %162 = arith.subf %7, %161 : vector<16x32xf32>
    %cst_45 = arith.constant 9.99999974E-6 : f32
    %163 = vector.broadcast %cst_45 : f32 to vector<16x1xf32>
    %164 = arith.addf %160, %163 : vector<16x1xf32>
    %165 = math.rsqrt %164 : vector<16x1xf32>
    %166 = vector.broadcast %165 : vector<16x1xf32> to vector<16x32xf32>
    %167 = arith.mulf %162, %166 : vector<16x32xf32>
    %168 = vector.broadcast %148 : vector<1x32xf32> to vector<16x32xf32>
    %169 = arith.mulf %167, %168 : vector<16x32xf32>
    %170 = vector.broadcast %149 : vector<1x32xf32> to vector<16x32xf32>
    %171 = arith.addf %169, %170 : vector<16x32xf32>
    %172 = vector.extract_strided_slice %0 {offsets = [2, 0], sizes = [1, 32], strides = [1, 1]} : vector<5x32xf32> to vector<1x32xf32>
    %173 = vector.extract_strided_slice %1 {offsets = [2, 0], sizes = [1, 32], strides = [1, 1]} : vector<5x32xf32> to vector<1x32xf32>
    %cst_46 = arith.constant dense<0.000000e+00> : vector<16xf32>
    %174 = vector.multi_reduction <add>, %147, %cst_46 [1] : vector<16x32xf32> to vector<16xf32>
    %175 = vector.shape_cast %174 : vector<16xf32> to vector<16x1xf32>
    %cst_47 = arith.constant 3.200000e+01 : f32
    %176 = vector.broadcast %cst_47 : f32 to vector<16x1xf32>
    %177 = arith.divf %175, %176 : vector<16x1xf32>
    %178 = vector.broadcast %177 : vector<16x1xf32> to vector<16x32xf32>
    %179 = arith.subf %147, %178 : vector<16x32xf32>
    %180 = arith.mulf %179, %179 : vector<16x32xf32>
    %cst_48 = arith.constant dense<0.000000e+00> : vector<16xf32>
    %181 = vector.multi_reduction <add>, %180, %cst_48 [1] : vector<16x32xf32> to vector<16xf32>
    %182 = vector.shape_cast %181 : vector<16xf32> to vector<16x1xf32>
    %cst_49 = arith.constant 3.200000e+01 : f32
    %183 = vector.broadcast %cst_49 : f32 to vector<16x1xf32>
    %184 = arith.divf %182, %183 : vector<16x1xf32>
    %185 = vector.broadcast %177 : vector<16x1xf32> to vector<16x32xf32>
    %186 = arith.subf %147, %185 : vector<16x32xf32>
    %cst_50 = arith.constant 9.99999974E-6 : f32
    %187 = vector.broadcast %cst_50 : f32 to vector<16x1xf32>
    %188 = arith.addf %184, %187 : vector<16x1xf32>
    %189 = math.rsqrt %188 : vector<16x1xf32>
    %190 = vector.broadcast %189 : vector<16x1xf32> to vector<16x32xf32>
    %191 = arith.mulf %186, %190 : vector<16x32xf32>
    %192 = vector.broadcast %172 : vector<1x32xf32> to vector<16x32xf32>
    %193 = arith.mulf %191, %192 : vector<16x32xf32>
    %194 = vector.broadcast %173 : vector<1x32xf32> to vector<16x32xf32>
    %195 = arith.addf %193, %194 : vector<16x32xf32>
    %c0_51 = arith.constant 0 : index
    %c0_52 = arith.constant 0 : index
    %196 = vector.load %arg12[%c0_51, %c0_52] : memref<32x32xbf16, #tpu.memory_space<vmem>>, vector<32x32xbf16>
    %c0_53 = arith.constant 0 : index
    %c0_54 = arith.constant 0 : index
    %197 = vector.load %arg13[%c0_53, %c0_54] : memref<1x32xf32, #tpu.memory_space<vmem>>, vector<1x32xf32>
    %c0_55 = arith.constant 0 : index
    %c0_56 = arith.constant 0 : index
    %198 = vector.load %arg14[%c0_55, %c0_56] : memref<32x64xbf16, #tpu.memory_space<vmem>>, vector<32x64xbf16>
    %c0_57 = arith.constant 0 : index
    %c0_58 = arith.constant 0 : index
    %199 = vector.load %arg15[%c0_57, %c0_58] : memref<1x64xf32, #tpu.memory_space<vmem>>, vector<1x64xf32>
    %c0_59 = arith.constant 0 : index
    %c0_60 = arith.constant 0 : index
    %200 = vector.load %arg16[%c0_59, %c0_60] : memref<32x32xbf16, #tpu.memory_space<vmem>>, vector<32x32xbf16>
    %c0_61 = arith.constant 0 : index
    %c0_62 = arith.constant 0 : index
    %201 = vector.load %arg17[%c0_61, %c0_62] : memref<1x32xf32, #tpu.memory_space<vmem>>, vector<1x32xf32>
    %c0_63 = arith.constant 0 : index
    %c0_64 = arith.constant 0 : index
    %c0_65 = arith.constant 0 : index
    %202 = vector.load %arg3[%c0_63, %c0_64, %c0_65] : memref<8x1x8xf32, #tpu.memory_space<vmem>>, vector<8x1x8xf32>
    %203 = arith.truncf %195 : vector<16x32xf32> to vector<16x32xbf16>
    %cst_66 = arith.constant dense<0.000000e+00> : vector<16x32xf32>
    %204 = tpu.matmul %203, %196, %cst_66 {dimension_numbers = #tpu.dot_dimension_numbers<[1], [0], [0], [1], [0, 0, 1, 1], [], []>} : vector<16x32xbf16>, vector<32x32xbf16>, vector<16x32xf32> -> vector<16x32xf32>
    %205 = vector.broadcast %197 : vector<1x32xf32> to vector<16x32xf32>
    %206 = arith.addf %204, %205 : vector<16x32xf32>
    %207 = arith.truncf %171 : vector<16x32xf32> to vector<16x32xbf16>
    %cst_67 = arith.constant dense<0.000000e+00> : vector<16x64xf32>
    %208 = tpu.matmul %207, %198, %cst_67 {dimension_numbers = #tpu.dot_dimension_numbers<[1], [0], [0], [1], [0, 0, 1, 1], [], []>} : vector<16x32xbf16>, vector<32x64xbf16>, vector<16x64xf32> -> vector<16x64xf32>
    %209 = vector.broadcast %199 : vector<1x64xf32> to vector<16x64xf32>
    %210 = arith.addf %208, %209 : vector<16x64xf32>
    %211 = vector.extract_strided_slice %210 {offsets = [0, 0], sizes = [16, 32], strides = [1, 1]} : vector<16x64xf32> to vector<16x32xf32>
    %212 = vector.extract_strided_slice %210 {offsets = [0, 32], sizes = [16, 32], strides = [1, 1]} : vector<16x64xf32> to vector<16x32xf32>
    %cst_68 = arith.constant 0.353553385 : f32
    %213 = vector.broadcast %cst_68 : f32 to vector<16x32xf32>
    %214 = arith.mulf %206, %213 : vector<16x32xf32>
    %215 = vector.extract_strided_slice %214 {offsets = [0, 0], sizes = [16, 8], strides = [1, 1]} : vector<16x32xf32> to vector<16x8xf32>
    %216 = vector.shape_cast %215 : vector<16x8xf32> to vector<2x8x8xf32>
    %217 = vector.extract_strided_slice %214 {offsets = [0, 8], sizes = [16, 8], strides = [1, 1]} : vector<16x32xf32> to vector<16x8xf32>
    %218 = vector.shape_cast %217 : vector<16x8xf32> to vector<2x8x8xf32>
    %219 = vector.extract_strided_slice %214 {offsets = [0, 16], sizes = [16, 8], strides = [1, 1]} : vector<16x32xf32> to vector<16x8xf32>
    %220 = vector.shape_cast %219 : vector<16x8xf32> to vector<2x8x8xf32>
    %221 = vector.extract_strided_slice %214 {offsets = [0, 24], sizes = [16, 8], strides = [1, 1]} : vector<16x32xf32> to vector<16x8xf32>
    %222 = vector.shape_cast %221 : vector<16x8xf32> to vector<2x8x8xf32>
    %223 = vector.shape_cast %216 : vector<2x8x8xf32> to vector<2x1x8x8xf32>
    %224 = vector.shape_cast %218 : vector<2x8x8xf32> to vector<2x1x8x8xf32>
    %225 = vector.shape_cast %220 : vector<2x8x8xf32> to vector<2x1x8x8xf32>
    %226 = vector.shape_cast %222 : vector<2x8x8xf32> to vector<2x1x8x8xf32>
    %227 = tpu.concatenate %223, %224, %225, %226 in 1 : vector<2x1x8x8xf32>, vector<2x1x8x8xf32>, vector<2x1x8x8xf32>, vector<2x1x8x8xf32> -> vector<2x4x8x8xf32>
    %228 = vector.shape_cast %227 : vector<2x4x8x8xf32> to vector<8x8x8xf32>
    %229 = arith.truncf %228 : vector<8x8x8xf32> to vector<8x8x8xbf16>
    %230 = vector.extract_strided_slice %211 {offsets = [0, 0], sizes = [16, 8], strides = [1, 1]} : vector<16x32xf32> to vector<16x8xf32>
    %231 = vector.shape_cast %230 : vector<16x8xf32> to vector<2x8x8xf32>
    %232 = vector.extract_strided_slice %211 {offsets = [0, 8], sizes = [16, 8], strides = [1, 1]} : vector<16x32xf32> to vector<16x8xf32>
    %233 = vector.shape_cast %232 : vector<16x8xf32> to vector<2x8x8xf32>
    %234 = vector.extract_strided_slice %211 {offsets = [0, 16], sizes = [16, 8], strides = [1, 1]} : vector<16x32xf32> to vector<16x8xf32>
    %235 = vector.shape_cast %234 : vector<16x8xf32> to vector<2x8x8xf32>
    %236 = vector.extract_strided_slice %211 {offsets = [0, 24], sizes = [16, 8], strides = [1, 1]} : vector<16x32xf32> to vector<16x8xf32>
    %237 = vector.shape_cast %236 : vector<16x8xf32> to vector<2x8x8xf32>
    %238 = vector.shape_cast %231 : vector<2x8x8xf32> to vector<2x1x8x8xf32>
    %239 = vector.shape_cast %233 : vector<2x8x8xf32> to vector<2x1x8x8xf32>
    %240 = vector.shape_cast %235 : vector<2x8x8xf32> to vector<2x1x8x8xf32>
    %241 = vector.shape_cast %237 : vector<2x8x8xf32> to vector<2x1x8x8xf32>
    %242 = tpu.concatenate %238, %239, %240, %241 in 1 : vector<2x1x8x8xf32>, vector<2x1x8x8xf32>, vector<2x1x8x8xf32>, vector<2x1x8x8xf32> -> vector<2x4x8x8xf32>
    %243 = vector.shape_cast %242 : vector<2x4x8x8xf32> to vector<8x8x8xf32>
    %244 = arith.truncf %243 : vector<8x8x8xf32> to vector<8x8x8xbf16>
    %245 = vector.extract_strided_slice %212 {offsets = [0, 0], sizes = [16, 8], strides = [1, 1]} : vector<16x32xf32> to vector<16x8xf32>
    %246 = vector.shape_cast %245 : vector<16x8xf32> to vector<2x8x8xf32>
    %247 = vector.extract_strided_slice %212 {offsets = [0, 8], sizes = [16, 8], strides = [1, 1]} : vector<16x32xf32> to vector<16x8xf32>
    %248 = vector.shape_cast %247 : vector<16x8xf32> to vector<2x8x8xf32>
    %249 = vector.extract_strided_slice %212 {offsets = [0, 16], sizes = [16, 8], strides = [1, 1]} : vector<16x32xf32> to vector<16x8xf32>
    %250 = vector.shape_cast %249 : vector<16x8xf32> to vector<2x8x8xf32>
    %251 = vector.extract_strided_slice %212 {offsets = [0, 24], sizes = [16, 8], strides = [1, 1]} : vector<16x32xf32> to vector<16x8xf32>
    %252 = vector.shape_cast %251 : vector<16x8xf32> to vector<2x8x8xf32>
    %253 = vector.shape_cast %246 : vector<2x8x8xf32> to vector<2x1x8x8xf32>
    %254 = vector.shape_cast %248 : vector<2x8x8xf32> to vector<2x1x8x8xf32>
    %255 = vector.shape_cast %250 : vector<2x8x8xf32> to vector<2x1x8x8xf32>
    %256 = vector.shape_cast %252 : vector<2x8x8xf32> to vector<2x1x8x8xf32>
    %257 = tpu.concatenate %253, %254, %255, %256 in 1 : vector<2x1x8x8xf32>, vector<2x1x8x8xf32>, vector<2x1x8x8xf32>, vector<2x1x8x8xf32> -> vector<2x4x8x8xf32>
    %258 = vector.shape_cast %257 : vector<2x4x8x8xf32> to vector<8x8x8xf32>
    %259 = arith.truncf %258 : vector<8x8x8xf32> to vector<8x8x8xbf16>
    "tpu.trace_start"() <{level = 10 : i32, message = "bqd,bkd->bqk"}> : () -> ()
    %cst_69 = arith.constant dense<0.000000e+00> : vector<8x8x8xf32>
    %260 = tpu.matmul %229, %244, %cst_69 {dimension_numbers = #tpu.dot_dimension_numbers<[2], [2], [1], [1], [0, 0, 0, 1, 1, 1], [0], [0]>} : vector<8x8x8xbf16>, vector<8x8x8xbf16>, vector<8x8x8xf32> -> vector<8x8x8xf32>
    "tpu.trace_stop"() : () -> ()
    %261 = vector.broadcast %202 : vector<8x1x8xf32> to vector<8x8x8xf32>
    %262 = arith.addf %260, %261 : vector<8x8x8xf32>
    %cst_70 = arith.constant dense<0xFF800000> : vector<8x8xf32>
    %263 = vector.multi_reduction <maximumf>, %262, %cst_70 [2] : vector<8x8x8xf32> to vector<8x8xf32>
    %264 = vector.shape_cast %263 : vector<8x8xf32> to vector<8x8x1xf32>
    %265 = vector.broadcast %264 : vector<8x8x1xf32> to vector<8x8x8xf32>
    %266 = arith.subf %262, %265 : vector<8x8x8xf32>
    %267 = math.exp %266 : vector<8x8x8xf32>
    %cst_71 = arith.constant dense<0.000000e+00> : vector<8x8xf32>
    %268 = vector.multi_reduction <add>, %267, %cst_71 [2] : vector<8x8x8xf32> to vector<8x8xf32>
    %269 = vector.shape_cast %268 : vector<8x8xf32> to vector<8x8x1xf32>
    %270 = tpu.reciprocal %269 {approx = true} : vector<8x8x1xf32> -> vector<8x8x1xf32>
    %271 = vector.broadcast %270 : vector<8x8x1xf32> to vector<8x8x8xf32>
    %272 = arith.mulf %267, %271 : vector<8x8x8xf32>
    %273 = arith.truncf %272 : vector<8x8x8xf32> to vector<8x8x8xbf16>
    "tpu.trace_start"() <{level = 10 : i32, message = "bqk,bkd->bqd"}> : () -> ()
    %cst_72 = arith.constant dense<0.000000e+00> : vector<8x8x8xf32>
    %274 = tpu.matmul %273, %259, %cst_72 {dimension_numbers = #tpu.dot_dimension_numbers<[2], [1], [1], [2], [0, 0, 0, 1, 1, 2], [0], [0]>} : vector<8x8x8xbf16>, vector<8x8x8xbf16>, vector<8x8x8xf32> -> vector<8x8x8xf32>
    "tpu.trace_stop"() : () -> ()
    %275 = vector.shape_cast %274 : vector<8x8x8xf32> to vector<2x4x8x8xf32>
    %276 = vector.extract_strided_slice %275 {offsets = [0, 0, 0, 0], sizes = [2, 1, 8, 8], strides = [1, 1, 1, 1]} : vector<2x4x8x8xf32> to vector<2x1x8x8xf32>
    %277 = vector.shape_cast %276 : vector<2x1x8x8xf32> to vector<2x8x8xf32>
    %278 = vector.extract_strided_slice %275 {offsets = [0, 1, 0, 0], sizes = [2, 1, 8, 8], strides = [1, 1, 1, 1]} : vector<2x4x8x8xf32> to vector<2x1x8x8xf32>
    %279 = vector.shape_cast %278 : vector<2x1x8x8xf32> to vector<2x8x8xf32>
    %280 = vector.extract_strided_slice %275 {offsets = [0, 2, 0, 0], sizes = [2, 1, 8, 8], strides = [1, 1, 1, 1]} : vector<2x4x8x8xf32> to vector<2x1x8x8xf32>
    %281 = vector.shape_cast %280 : vector<2x1x8x8xf32> to vector<2x8x8xf32>
    %282 = vector.extract_strided_slice %275 {offsets = [0, 3, 0, 0], sizes = [2, 1, 8, 8], strides = [1, 1, 1, 1]} : vector<2x4x8x8xf32> to vector<2x1x8x8xf32>
    %283 = vector.shape_cast %282 : vector<2x1x8x8xf32> to vector<2x8x8xf32>
    %284 = tpu.concatenate %277, %279, %281, %283 in 2 : vector<2x8x8xf32>, vector<2x8x8xf32>, vector<2x8x8xf32>, vector<2x8x8xf32> -> vector<2x8x32xf32>
    %285 = vector.shape_cast %284 : vector<2x8x32xf32> to vector<16x32xf32>
    %286 = arith.truncf %285 : vector<16x32xf32> to vector<16x32xbf16>
    %cst_73 = arith.constant dense<0.000000e+00> : vector<16x32xf32>
    %287 = tpu.matmul %286, %200, %cst_73 {dimension_numbers = #tpu.dot_dimension_numbers<[1], [0], [0], [1], [0, 0, 1, 1], [], []>} : vector<16x32xbf16>, vector<32x32xbf16>, vector<16x32xf32> -> vector<16x32xf32>
    %288 = vector.broadcast %201 : vector<1x32xf32> to vector<16x32xf32>
    %289 = arith.addf %287, %288 : vector<16x32xf32>
    %290 = arith.addf %147, %289 : vector<16x32xf32>
    %291 = vector.extract_strided_slice %0 {offsets = [4, 0], sizes = [1, 32], strides = [1, 1]} : vector<5x32xf32> to vector<1x32xf32>
    %292 = vector.extract_strided_slice %1 {offsets = [4, 0], sizes = [1, 32], strides = [1, 1]} : vector<5x32xf32> to vector<1x32xf32>
    %cst_74 = arith.constant dense<0.000000e+00> : vector<16xf32>
    %293 = vector.multi_reduction <add>, %290, %cst_74 [1] : vector<16x32xf32> to vector<16xf32>
    %294 = vector.shape_cast %293 : vector<16xf32> to vector<16x1xf32>
    %cst_75 = arith.constant 3.200000e+01 : f32
    %295 = vector.broadcast %cst_75 : f32 to vector<16x1xf32>
    %296 = arith.divf %294, %295 : vector<16x1xf32>
    %297 = vector.broadcast %296 : vector<16x1xf32> to vector<16x32xf32>
    %298 = arith.subf %290, %297 : vector<16x32xf32>
    %299 = arith.mulf %298, %298 : vector<16x32xf32>
    %cst_76 = arith.constant dense<0.000000e+00> : vector<16xf32>
    %300 = vector.multi_reduction <add>, %299, %cst_76 [1] : vector<16x32xf32> to vector<16xf32>
    %301 = vector.shape_cast %300 : vector<16xf32> to vector<16x1xf32>
    %cst_77 = arith.constant 3.200000e+01 : f32
    %302 = vector.broadcast %cst_77 : f32 to vector<16x1xf32>
    %303 = arith.divf %301, %302 : vector<16x1xf32>
    %304 = vector.broadcast %296 : vector<16x1xf32> to vector<16x32xf32>
    %305 = arith.subf %290, %304 : vector<16x32xf32>
    %cst_78 = arith.constant 9.99999974E-6 : f32
    %306 = vector.broadcast %cst_78 : f32 to vector<16x1xf32>
    %307 = arith.addf %303, %306 : vector<16x1xf32>
    %308 = math.rsqrt %307 : vector<16x1xf32>
    %309 = vector.broadcast %308 : vector<16x1xf32> to vector<16x32xf32>
    %310 = arith.mulf %305, %309 : vector<16x32xf32>
    %311 = vector.broadcast %291 : vector<1x32xf32> to vector<16x32xf32>
    %312 = arith.mulf %310, %311 : vector<16x32xf32>
    %313 = vector.broadcast %292 : vector<1x32xf32> to vector<16x32xf32>
    %314 = arith.addf %312, %313 : vector<16x32xf32>
    %315 = arith.truncf %314 : vector<16x32xf32> to vector<16x32xbf16>
    %c0_79 = arith.constant 0 : index
    %c0_80 = arith.constant 0 : index
    %316 = vector.load %arg18[%c0_79, %c0_80] : memref<32x128xbf16, #tpu.memory_space<vmem>>, vector<32x128xbf16>
    %cst_81 = arith.constant dense<0.000000e+00> : vector<16x128xf32>
    %317 = tpu.matmul %315, %316, %cst_81 {dimension_numbers = #tpu.dot_dimension_numbers<[1], [0], [0], [1], [0, 0, 1, 1], [], []>} : vector<16x32xbf16>, vector<32x128xbf16>, vector<16x128xf32> -> vector<16x128xf32>
    %c0_82 = arith.constant 0 : index
    %c0_83 = arith.constant 0 : index
    %318 = vector.load %arg19[%c0_82, %c0_83] : memref<1x128xf32, #tpu.memory_space<vmem>>, vector<1x128xf32>
    %319 = vector.broadcast %318 : vector<1x128xf32> to vector<16x128xf32>
    %320 = arith.addf %317, %319 : vector<16x128xf32>
    %321 = vector.extract_strided_slice %320 {offsets = [0, 0], sizes = [16, 64], strides = [1, 1]} : vector<16x128xf32> to vector<16x64xf32>
    %322 = vector.extract_strided_slice %320 {offsets = [0, 64], sizes = [16, 64], strides = [1, 1]} : vector<16x128xf32> to vector<16x64xf32>
    %323 = arith.negf %321 : vector<16x64xf32>
    %324 = math.exp %323 : vector<16x64xf32>
    %cst_84 = arith.constant 1.000000e+00 : f32
    %325 = vector.broadcast %cst_84 : f32 to vector<16x64xf32>
    %326 = arith.addf %325, %324 : vector<16x64xf32>
    %327 = arith.divf %325, %326 : vector<16x64xf32>
    %328 = arith.mulf %321, %327 : vector<16x64xf32>
    %329 = arith.mulf %328, %322 : vector<16x64xf32>
    %330 = arith.truncf %329 : vector<16x64xf32> to vector<16x64xbf16>
    %c0_85 = arith.constant 0 : index
    %c0_86 = arith.constant 0 : index
    %331 = vector.load %arg20[%c0_85, %c0_86] : memref<64x32xbf16, #tpu.memory_space<vmem>>, vector<64x32xbf16>
    %cst_87 = arith.constant dense<0.000000e+00> : vector<16x32xf32>
    %332 = tpu.matmul %330, %331, %cst_87 {dimension_numbers = #tpu.dot_dimension_numbers<[1], [0], [0], [1], [0, 0, 1, 1], [], []>} : vector<16x64xbf16>, vector<64x32xbf16>, vector<16x32xf32> -> vector<16x32xf32>
    %c0_88 = arith.constant 0 : index
    %c0_89 = arith.constant 0 : index
    %333 = vector.load %arg21[%c0_88, %c0_89] : memref<1x32xf32, #tpu.memory_space<vmem>>, vector<1x32xf32>
    %334 = vector.broadcast %333 : vector<1x32xf32> to vector<16x32xf32>
    %335 = arith.addf %332, %334 : vector<16x32xf32>
    %336 = arith.addf %290, %335 : vector<16x32xf32>
    %337 = vector.shape_cast %336 : vector<16x32xf32> to vector<2x8x32xf32>
    %c0_90 = arith.constant 0 : index
    %c0_91 = arith.constant 0 : index
    %c0_92 = arith.constant 0 : index
    %338 = vector.load %arg22[%c0_90, %c0_91, %c0_92] : memref<2x8x32xf32, #tpu.memory_space<vmem>>, vector<2x8x32xf32>
    tpu.vector_store %arg22[%c0_90, %c0_91, %c0_92], %337 {strides = array<i32>} : memref<2x8x32xf32, #tpu.memory_space<vmem>>, vector<2x8x32xf32>,
    return
  }
}

</mosaic_0001>

<llo_original>
// kernel: tpu_custom_call.1
$region0: #{tpu_custom_call.1}
  #allocation0 [shape = 'u32[]', space=smem, size = 0x4, offset = 0x4, fixed_abs, tag = 'smem constant byte address 0x4 - core index']
  #allocation1 [shape = 'u32[144,128]{1,0:T(1,128)}', space=vmem, size = 0x12000, scoped, tag = 'internal scratch']
  %s0 = inlined_call_operand.vmem [shape: f32[2,8,32], index: 0, kind: input, shape index: {}]
  %s1 = inlined_call_operand.vmem [shape: f32[2,8,32], index: 1, kind: input, shape index: {}]
  %s2 = inlined_call_operand.vmem [shape: f32[2,8,32], index: 2, kind: input, shape index: {}]
  %s3 = inlined_call_operand.hbm [shape: f32[8,1,8], index: 3, kind: input, shape index: {}]
  %s4 = inlined_call_operand.hbm [shape: f32[5,32], index: 4, kind: input, shape index: {}]
  %s5 = inlined_call_operand.hbm [shape: f32[5,32], index: 5, kind: input, shape index: {}]
  %s6 = inlined_call_operand.hbm [shape: bf16[32,32], index: 6, kind: input, shape index: {}]
  %s7 = inlined_call_operand.hbm [shape: f32[1,32], index: 7, kind: input, shape index: {}]
  %s8 = inlined_call_operand.hbm [shape: bf16[32,64], index: 8, kind: input, shape index: {}]
  %s9 = inlined_call_operand.hbm [shape: f32[1,64], index: 9, kind: input, shape index: {}]
  %s10 = inlined_call_operand.vmem [shape: bf16[32,32], index: 10, kind: input, shape index: {}]
  %s11 = inlined_call_operand.hbm [shape: f32[1,32], index: 11, kind: input, shape index: {}]
  %s12 = inlined_call_operand.hbm [shape: bf16[32,32], index: 12, kind: input, shape index: {}]
  %s13 = inlined_call_operand.hbm [shape: f32[1,32], index: 13, kind: input, shape index: {}]
  %s14 = inlined_call_operand.vmem [shape: bf16[32,64], index: 14, kind: input, shape index: {}]
  %s15 = inlined_call_operand.hbm [shape: f32[1,64], index: 15, kind: input, shape index: {}]
  %s16 = inlined_call_operand.hbm [shape: bf16[32,32], index: 16, kind: input, shape index: {}]
  %s17 = inlined_call_operand.hbm [shape: f32[1,32], index: 17, kind: input, shape index: {}]
  %s18 = inlined_call_operand.vmem [shape: bf16[32,128], index: 18, kind: input, shape index: {}]
  %s19 = inlined_call_operand.vmem [shape: f32[1,128], index: 19, kind: input, shape index: {}]
  %s20 = inlined_call_operand.vmem [shape: bf16[64,32], index: 20, kind: input, shape index: {}]
  %s21 = inlined_call_operand.vmem [shape: f32[1,32], index: 21, kind: input, shape index: {}]
  %s22 = inlined_call_operand.hbm [shape: f32[2,8,32], index: 22, kind: output, shape index: {}]
  %s23 = sld [smem:[#allocation0]]
  $region150: #{tpu_custom_call.1} parent=0
    _
  %s25 = ssub.s32 1, %s23
  %s26 = scalar_select 0, %s25, %s23
  $region1: #{tpu_custom_call.1} parent=0
    #allocation2 [shape = 'u8[4096]{0}', space=vmem, size = 0x1000, scoped, tag = 'input window, operand 3, single buffered']
    #allocation3 [shape = 's32[1]{0}', space=sflag, size = 0x4, scoped, tag = 'scoped memory for tpu_custom_call.1']
    #allocation4 [shape = 's32[1]{0}', space=sflag, size = 0x4, scoped, tag = 'scoped memory for tpu_custom_call.1']
    #allocation5 [shape = 'u8[4096]{0}', space=vmem, size = 0x1000, scoped, tag = 'input window, operand 4, single buffered']
    #allocation6 [shape = 's32[1]{0}', space=sflag, size = 0x4, scoped, tag = 'scoped memory for tpu_custom_call.1']
    #allocation7 [shape = 'u8[4096]{0}', space=vmem, size = 0x1000, scoped, tag = 'input window, operand 5, single buffered']
    #allocation8 [shape = 'u8[8192]{0}', space=vmem, size = 0x2000, scoped, tag = 'input window, operand 6, single buffered']
    #allocation9 [shape = 's32[1]{0}', space=sflag, size = 0x4, scoped, tag = 'scoped memory for tpu_custom_call.1']
    #allocation10 [shape = 'u8[512]{0}', space=vmem, size = 0x400, scoped, tag = 'input window, operand 7, single buffered']
    #allocation11 [shape = 'u8[8192]{0}', space=vmem, size = 0x2000, scoped, tag = 'input window, operand 8, single buffered']
    #allocation12 [shape = 's32[1]{0}', space=sflag, size = 0x4, scoped, tag = 'scoped memory for tpu_custom_call.1']
    #allocation13 [shape = 'u8[512]{0}', space=vmem, size = 0x400, scoped, tag = 'input window, operand 9, single buffered']
    #allocation14 [shape = 'u8[512]{0}', space=vmem, size = 0x400, scoped, tag = 'input window, operand 11, single buffered']
    #allocation15 [shape = 's32[1]{0}', space=sflag, size = 0x4, scoped, tag = 'scoped memory for tpu_custom_call.1']
    #allocation16 [shape = 'u8[8192]{0}', space=vmem, size = 0x2000, scoped, tag = 'input window, operand 12, single buffered']
    #allocation17 [shape = 'u8[512]{0}', space=vmem, size = 0x400, scoped, tag = 'input window, operand 13, single buffered']
    #allocation18 [shape = 's32[1]{0}', space=sflag, size = 0x4, scoped, tag = 'scoped memory for tpu_custom_call.1']
    #allocation19 [shape = 'u8[512]{0}', space=vmem, size = 0x400, scoped, tag = 'input window, operand 15, single buffered']
    #allocation20 [shape = 'u8[8192]{0}', space=vmem, size = 0x2000, scoped, tag = 'input window, operand 16, single buffered']
    #allocation21 [shape = 's32[1]{0}', space=sflag, size = 0x4, scoped, tag = 'scoped memory for tpu_custom_call.1']
    #allocation22 [shape = 'u8[512]{0}', space=vmem, size = 0x400, scoped, tag = 'input window, operand 17, single buffered']
    #allocation23 [shape = 'u8[8192]{0}', space=vmem, size = 0x2000, scoped, tag = 'output window, operand 0, single buffered']
    %27 = vsyncpa [#allocation3], 0
    %28 = vsyncpa [#allocation6], 0
    %29 = vsyncpa [#allocation9], 0
    %30 = vsyncpa [#allocation12], 0
    %31 = vsyncpa [#allocation15], 0
    %32 = vsyncpa [#allocation18], 0
    %33 = vsyncpa [#allocation21], 0
    %34 = vsyncpa [#allocation4], 0
    // Predicated region
    $region2: #{tpu_custom_call.1} parent=1 // pred_check
      _
    $region3: #{tpu_custom_call.1} parent=1 // pred_check_branch
      %36 = sbr.rel (0) target = $region5
    $region4: #{tpu_custom_call.1} parent=1 // pred_region
      _
    $region5: #{tpu_custom_call.1} parent=1 // pred_fallthru
      _
    // Predicated region
    $region6: #{tpu_custom_call.1} parent=1 // pred_check
      _
    $region7: #{tpu_custom_call.1} parent=1 // pred_check_branch
      %38 = sbr.rel (0) target = $region9
    $region8: #{tpu_custom_call.1} parent=1 // pred_region
      _
    $region9: #{tpu_custom_call.1} parent=1 // pred_fallthru
      _
    // Predicated region
    $region10: #{tpu_custom_call.1} parent=1 // pred_check
      _
    $region11: #{tpu_custom_call.1} parent=1 // pred_check_branch
      %40 = sbr.rel (0) target = $region13
    $region12: #{tpu_custom_call.1} parent=1 // pred_region
      _
    $region13: #{tpu_custom_call.1} parent=1 // pred_fallthru
      _
    // Predicated region
    $region14: #{tpu_custom_call.1} parent=1 // pred_check
      _
    $region15: #{tpu_custom_call.1} parent=1 // pred_check_branch
      %42 = sbr.rel (0) target = $region17
    $region16: #{tpu_custom_call.1} parent=1 // pred_region
      %s44 = ssub.s32 128, 128
      %45 = vsyncadd [#allocation3], %s44
      %s46 = sshll.u32 [#allocation2], 4
      %s47 = int_to_ptr.vmem [resolvable:$true] %s46
      %52 = dma.hbm_to_vmem [thread:$0]  %s3, 128, %s47, [#allocation3], 16, 16, 1
    $region17: #{tpu_custom_call.1} parent=1 // pred_fallthru
      _
    // Predicated region
    $region18: #{tpu_custom_call.1} parent=1 // pred_check
      _
    $region19: #{tpu_custom_call.1} parent=1 // pred_check_branch
      %54 = sbr.rel (0) target = $region21
    $region20: #{tpu_custom_call.1} parent=1 // pred_region
      %s56 = ssub.s32 128, 128
      %57 = vsyncadd [#allocation6], %s56
      %s59 = sshll.u32 [#allocation5], 4
      %s60 = int_to_ptr.vmem [resolvable:$true] %s59
      %62 = dma.hbm_to_vmem [thread:$0]  %s4, 128, %s60, [#allocation6]
    $region21: #{tpu_custom_call.1} parent=1 // pred_fallthru
      _
    // Predicated region
    $region22: #{tpu_custom_call.1} parent=1 // pred_check
      _
    $region23: #{tpu_custom_call.1} parent=1 // pred_check_branch
      %64 = sbr.rel (0) target = $region25
    $region24: #{tpu_custom_call.1} parent=1 // pred_region
      %s66 = ssub.s32 128, 128
      %67 = vsyncadd [#allocation6], %s66
      %s69 = sshll.u32 [#allocation7], 4
      %s70 = int_to_ptr.vmem [resolvable:$true] %s69
      %72 = dma.hbm_to_vmem [thread:$0]  %s5, 128, %s70, [#allocation6]
    $region25: #{tpu_custom_call.1} parent=1 // pred_fallthru
      _
    // Predicated region
    $region26: #{tpu_custom_call.1} parent=1 // pred_check
      _
    $region27: #{tpu_custom_call.1} parent=1 // pred_check_branch
      %74 = sbr.rel (0) target = $region29
    $region28: #{tpu_custom_call.1} parent=1 // pred_region
      %s76 = ssub.s32 256, 256
      %77 = vsyncadd [#allocation9], %s76
      %s78 = sshll.u32 [#allocation8], 4
      %s79 = int_to_ptr.vmem [resolvable:$true] %s78
      %84 = dma.hbm_to_vmem [thread:$0]  %s6, 256, %s79, [#allocation9], 64, 64, 4
    $region29: #{tpu_custom_call.1} parent=1 // pred_fallthru
      _
    // Predicated region
    $region30: #{tpu_custom_call.1} parent=1 // pred_check
      _
    $region31: #{tpu_custom_call.1} parent=1 // pred_check_branch
      %86 = sbr.rel (0) target = $region33
    $region32: #{tpu_custom_call.1} parent=1 // pred_region
      %s88 = ssub.s32 16, 16
      %89 = vsyncadd [#allocation9], %s88
      %s91 = sshll.u32 [#allocation10], 4
      %s92 = int_to_ptr.vmem [resolvable:$true] %s91
      %94 = dma.hbm_to_vmem [thread:$0]  %s7, 16, %s92, [#allocation9]
    $region33: #{tpu_custom_call.1} parent=1 // pred_fallthru
      _
    // Predicated region
    $region34: #{tpu_custom_call.1} parent=1 // pred_check
      _
    $region35: #{tpu_custom_call.1} parent=1 // pred_check_branch
      %96 = sbr.rel (0) target = $region37
    $region36: #{tpu_custom_call.1} parent=1 // pred_region
      %s98 = ssub.s32 256, 256
      %99 = vsyncadd [#allocation12], %s98
      %s100 = sshll.u32 [#allocation11], 4
      %s101 = int_to_ptr.vmem [resolvable:$true] %s100
      %106 = dma.hbm_to_vmem [thread:$0]  %s8, 256, %s101, [#allocation12], 64, 64, 4
    $region37: #{tpu_custom_call.1} parent=1 // pred_fallthru
      _
    // Predicated region
    $region38: #{tpu_custom_call.1} parent=1 // pred_check
      _
    $region39: #{tpu_custom_call.1} parent=1 // pred_check_branch
      %108 = sbr.rel (0) target = $region41
    $region40: #{tpu_custom_call.1} parent=1 // pred_region
      %s110 = ssub.s32 16, 16
      %111 = vsyncadd [#allocation12], %s110
      %s113 = sshll.u32 [#allocation13], 4
      %s114 = int_to_ptr.vmem [resolvable:$true] %s113
      %116 = dma.hbm_to_vmem [thread:$0]  %s9, 16, %s114, [#allocation12]
    $region41: #{tpu_custom_call.1} parent=1 // pred_fallthru
      _
    // Predicated region
    $region42: #{tpu_custom_call.1} parent=1 // pred_check
      _
    $region43: #{tpu_custom_call.1} parent=1 // pred_check_branch
      %118 = sbr.rel (0) target = $region45
    $region44: #{tpu_custom_call.1} parent=1 // pred_region
      _
    $region45: #{tpu_custom_call.1} parent=1 // pred_fallthru
      _
    // Predicated region
    $region46: #{tpu_custom_call.1} parent=1 // pred_check
      _
    $region47: #{tpu_custom_call.1} parent=1 // pred_check_branch
      %120 = sbr.rel (0) target = $region49
    $region48: #{tpu_custom_call.1} parent=1 // pred_region
      %s122 = ssub.s32 16, 16
      %123 = vsyncadd [#allocation15], %s122
      %s125 = sshll.u32 [#allocation14], 4
      %s126 = int_to_ptr.vmem [resolvable:$true] %s125
      %128 = dma.hbm_to_vmem [thread:$0]  %s11, 16, %s126, [#allocation15]
    $region49: #{tpu_custom_call.1} parent=1 // pred_fallthru
      _
    // Predicated region
    $region50: #{tpu_custom_call.1} parent=1 // pred_check
      _
    $region51: #{tpu_custom_call.1} parent=1 // pred_check_branch
      %130 = sbr.rel (0) target = $region53
    $region52: #{tpu_custom_call.1} parent=1 // pred_region
      %s132 = ssub.s32 256, 256
      %133 = vsyncadd [#allocation15], %s132
      %s134 = sshll.u32 [#allocation16], 4
      %s135 = int_to_ptr.vmem [resolvable:$true] %s134
      %140 = dma.hbm_to_vmem [thread:$0]  %s12, 256, %s135, [#allocation15], 64, 64, 4
    $region53: #{tpu_custom_call.1} parent=1 // pred_fallthru
      _
    // Predicated region
    $region54: #{tpu_custom_call.1} parent=1 // pred_check
      _
    $region55: #{tpu_custom_call.1} parent=1 // pred_check_branch
      %142 = sbr.rel (0) target = $region57
    $region56: #{tpu_custom_call.1} parent=1 // pred_region
      %s144 = ssub.s32 16, 16
      %145 = vsyncadd [#allocation18], %s144
      %s147 = sshll.u32 [#allocation17], 4
      %s148 = int_to_ptr.vmem [resolvable:$true] %s147
      %150 = dma.hbm_to_vmem [thread:$0]  %s13, 16, %s148, [#allocation18]
    $region57: #{tpu_custom_call.1} parent=1 // pred_fallthru
      _
    // Predicated region
    $region58: #{tpu_custom_call.1} parent=1 // pred_check
      _
    $region59: #{tpu_custom_call.1} parent=1 // pred_check_branch
      %152 = sbr.rel (0) target = $region61
    $region60: #{tpu_custom_call.1} parent=1 // pred_region
      _
    $region61: #{tpu_custom_call.1} parent=1 // pred_fallthru
      _
    // Predicated region
    $region62: #{tpu_custom_call.1} parent=1 // pred_check
      _
    $region63: #{tpu_custom_call.1} parent=1 // pred_check_branch
      %154 = sbr.rel (0) target = $region65
    $region64: #{tpu_custom_call.1} parent=1 // pred_region
      %s156 = ssub.s32 16, 16
      %157 = vsyncadd [#allocation18], %s156
      %s159 = sshll.u32 [#allocation19], 4
      %s160 = int_to_ptr.vmem [resolvable:$true] %s159
      %162 = dma.hbm_to_vmem [thread:$0]  %s15, 16, %s160, [#allocation18]
    $region65: #{tpu_custom_call.1} parent=1 // pred_fallthru
      _
    // Predicated region
    $region66: #{tpu_custom_call.1} parent=1 // pred_check
      _
    $region67: #{tpu_custom_call.1} parent=1 // pred_check_branch
      %164 = sbr.rel (0) target = $region69
    $region68: #{tpu_custom_call.1} parent=1 // pred_region
      %s166 = ssub.s32 256, 256
      %167 = vsyncadd [#allocation21], %s166
      %s168 = sshll.u32 [#allocation20], 4
      %s169 = int_to_ptr.vmem [resolvable:$true] %s168
      %174 = dma.hbm_to_vmem [thread:$0]  %s16, 256, %s169, [#allocation21], 64, 64, 4
    $region69: #{tpu_custom_call.1} parent=1 // pred_fallthru
      _
    // Predicated region
    $region70: #{tpu_custom_call.1} parent=1 // pred_check
      _
    $region71: #{tpu_custom_call.1} parent=1 // pred_check_branch
      %176 = sbr.rel (0) target = $region73
    $region72: #{tpu_custom_call.1} parent=1 // pred_region
      %s178 = ssub.s32 16, 16
      %179 = vsyncadd [#allocation21], %s178
      %s181 = sshll.u32 [#allocation22], 4
      %s182 = int_to_ptr.vmem [resolvable:$true] %s181
      %184 = dma.hbm_to_vmem [thread:$0]  %s17, 16, %s182, [#allocation21]
    $region73: #{tpu_custom_call.1} parent=1 // pred_fallthru
      _
    // Predicated region
    $region74: #{tpu_custom_call.1} parent=1 // pred_check
      _
    $region75: #{tpu_custom_call.1} parent=1 // pred_check_branch
      %186 = sbr.rel (0) target = $region77
    $region76: #{tpu_custom_call.1} parent=1 // pred_region
      _
    $region77: #{tpu_custom_call.1} parent=1 // pred_fallthru
      _
    // Predicated region
    $region78: #{tpu_custom_call.1} parent=1 // pred_check
      _
    $region79: #{tpu_custom_call.1} parent=1 // pred_check_branch
      %188 = sbr.rel (0) target = $region81
    $region80: #{tpu_custom_call.1} parent=1 // pred_region
      _
    $region81: #{tpu_custom_call.1} parent=1 // pred_fallthru
      _
    // Predicated region
    $region82: #{tpu_custom_call.1} parent=1 // pred_check
      _
    $region83: #{tpu_custom_call.1} parent=1 // pred_check_branch
      %190 = sbr.rel (0) target = $region85
    $region84: #{tpu_custom_call.1} parent=1 // pred_region
      _
    $region85: #{tpu_custom_call.1} parent=1 // pred_fallthru
      _
    // Predicated region
    $region86: #{tpu_custom_call.1} parent=1 // pred_check
      _
    $region87: #{tpu_custom_call.1} parent=1 // pred_check_branch
      %192 = sbr.rel (0) target = $region89
    $region88: #{tpu_custom_call.1} parent=1 // pred_region
      _
    $region89: #{tpu_custom_call.1} parent=1 // pred_fallthru
      _
    // Predicated region
    $region90: #{tpu_custom_call.1} parent=1 // pred_check
      _
    $region91: #{tpu_custom_call.1} parent=1 // pred_check_branch
      %194 = sbr.rel (0) target = $region93
    $region92: #{tpu_custom_call.1} parent=1 // pred_region
      %195 = dma.done [#allocation3], 128
    $region93: #{tpu_custom_call.1} parent=1 // pred_fallthru
      _
    // Predicated region
    $region94: #{tpu_custom_call.1} parent=1 // pred_check
      _
    $region95: #{tpu_custom_call.1} parent=1 // pred_check_branch
      %197 = sbr.rel (0) target = $region97
    $region96: #{tpu_custom_call.1} parent=1 // pred_region
      %198 = dma.done [#allocation6], 128
    $region97: #{tpu_custom_call.1} parent=1 // pred_fallthru
      _
    // Predicated region
    $region98: #{tpu_custom_call.1} parent=1 // pred_check
      _
    $region99: #{tpu_custom_call.1} parent=1 // pred_check_branch
      %200 = sbr.rel (0) target = $region101
    $region100: #{tpu_custom_call.1} parent=1 // pred_region
      %201 = dma.done [#allocation6], 128
    $region101: #{tpu_custom_call.1} parent=1 // pred_fallthru
      _
    // Predicated region
    $region102: #{tpu_custom_call.1} parent=1 // pred_check
      _
    $region103: #{tpu_custom_call.1} parent=1 // pred_check_branch
      %203 = sbr.rel (0) target = $region105
    $region104: #{tpu_custom_call.1} parent=1 // pred_region
      %204 = dma.done [#allocation9], 256
    $region105: #{tpu_custom_call.1} parent=1 // pred_fallthru
      _
    // Predicated region
    $region106: #{tpu_custom_call.1} parent=1 // pred_check
      _
    $region107: #{tpu_custom_call.1} parent=1 // pred_check_branch
      %206 = sbr.rel (0) target = $region109
    $region108: #{tpu_custom_call.1} parent=1 // pred_region
      %207 = dma.done [#allocation9], 16
    $region109: #{tpu_custom_call.1} parent=1 // pred_fallthru
      _
    // Predicated region
    $region110: #{tpu_custom_call.1} parent=1 // pred_check
      _
    $region111: #{tpu_custom_call.1} parent=1 // pred_check_branch
      %209 = sbr.rel (0) target = $region113
    $region112: #{tpu_custom_call.1} parent=1 // pred_region
      %210 = dma.done [#allocation12], 256
    $region113: #{tpu_custom_call.1} parent=1 // pred_fallthru
      _
    // Predicated region
    $region114: #{tpu_custom_call.1} parent=1 // pred_check
      _
    $region115: #{tpu_custom_call.1} parent=1 // pred_check_branch
      %212 = sbr.rel (0) target = $region117
    $region116: #{tpu_custom_call.1} parent=1 // pred_region
      %213 = dma.done [#allocation12], 16
    $region117: #{tpu_custom_call.1} parent=1 // pred_fallthru
      _
    // Predicated region
    $region118: #{tpu_custom_call.1} parent=1 // pred_check
      _
    $region119: #{tpu_custom_call.1} parent=1 // pred_check_branch
      %215 = sbr.rel (0) target = $region121
    $region120: #{tpu_custom_call.1} parent=1 // pred_region
      %216 = dma.done [#allocation15], 16
    $region121: #{tpu_custom_call.1} parent=1 // pred_fallthru
      _
    // Predicated region
    $region122: #{tpu_custom_call.1} parent=1 // pred_check
      _
    $region123: #{tpu_custom_call.1} parent=1 // pred_check_branch
      %218 = sbr.rel (0) target = $region125
    $region124: #{tpu_custom_call.1} parent=1 // pred_region
      %219 = dma.done [#allocation15], 256
    $region125: #{tpu_custom_call.1} parent=1 // pred_fallthru
      _
    // Predicated region
    $region126: #{tpu_custom_call.1} parent=1 // pred_check
      _
    $region127: #{tpu_custom_call.1} parent=1 // pred_check_branch
      %221 = sbr.rel (0) target = $region129
    $region128: #{tpu_custom_call.1} parent=1 // pred_region
      %222 = dma.done [#allocation18], 16
    $region129: #{tpu_custom_call.1} parent=1 // pred_fallthru
      _
    // Predicated region
    $region130: #{tpu_custom_call.1} parent=1 // pred_check
      _
    $region131: #{tpu_custom_call.1} parent=1 // pred_check_branch
      %224 = sbr.rel (0) target = $region133
    $region132: #{tpu_custom_call.1} parent=1 // pred_region
      %225 = dma.done [#allocation18], 16
    $region133: #{tpu_custom_call.1} parent=1 // pred_fallthru
      _
    // Predicated region
    $region134: #{tpu_custom_call.1} parent=1 // pred_check
      _
    $region135: #{tpu_custom_call.1} parent=1 // pred_check_branch
      %227 = sbr.rel (0) target = $region137
    $region136: #{tpu_custom_call.1} parent=1 // pred_region
      %228 = dma.done [#allocation21], 256
    $region137: #{tpu_custom_call.1} parent=1 // pred_fallthru
      _
    // Predicated region
    $region138: #{tpu_custom_call.1} parent=1 // pred_check
      _
    $region139: #{tpu_custom_call.1} parent=1 // pred_check_branch
      %230 = sbr.rel (0) target = $region141
    $region140: #{tpu_custom_call.1} parent=1 // pred_region
      %231 = dma.done [#allocation21], 16
    $region141: #{tpu_custom_call.1} parent=1 // pred_fallthru
      _
    %v233 = vld [vmem:[#allocation5] sm:$0x1f]
    %v234 = vld [vmem:[#allocation7] sm:$0x1f]
    %v235 = vld [vmem:[%s0] sm:$0xff]
    %v236 = vld [vmem:[%s0 + $0x8] sm:$0xff]
    %v237 = vld [vmem:[%s1] sm:$0xff]
    %v238 = vld [vmem:[%s1 + $0x8] sm:$0xff]
    %v239 = vld [vmem:[%s2] sm:$0xff]
    %v240 = vld [vmem:[%s2 + $0x8] sm:$0xff]
    %vm241 = vcmask 261120
    %v242 = vsel %vm241, %v237, 0.0
    %243 = vadd.xlane.f32.xlu0 %v242
    %v244 = vpop.xlane.xlu0 %243
    %v245 = vsel %vm241, %v238, 0.0
    %246 = vadd.xlane.f32.xlu0 %v245
    %v247 = vpop.xlane.xlu0 %246
    %v248 = vrcp.pop 32.0
    %v249 = vmul.f32 %v244, %v248
    %v250 = vmul.f32 %v247, %v248
    %v251 = vsub.f32 %v237, %v249
    %v252 = vsub.f32 %v238, %v250
    %v253 = vmul.f32 %v251, %v251
    %v254 = vmul.f32 %v252, %v252
    %v255 = vsel %vm241, %v253, 0.0
    %256 = vadd.xlane.f32.xlu0 %v255
    %v257 = vpop.xlane.xlu0 %256
    %v258 = vsel %vm241, %v254, 0.0
    %259 = vadd.xlane.f32.xlu0 %v258
    %v260 = vpop.xlane.xlu0 %259
    %v261 = vmul.f32 %v257, %v248
    %v262 = vmul.f32 %v260, %v248
    %v263 = vadd.f32 %v261, 1e-05
    %v264 = vadd.f32 %v262, 1e-05
    %v265 = vrsqrt.pop %v263
    %v266 = vrsqrt.pop %v264
    %v267 = vmul.f32 %v251, %v265
    %v268 = vmul.f32 %v252, %v266
    %v269 = vlaneseq
    %v270 = vshrl.u32 %v269, 7
    %v271 = vsub.s32 0, %v270
    %v272 = vrot.slane %v233, %v271
    %v273 = vmul.f32 %v267, %v272
    %v274 = vmul.f32 %v268, %v272
    %v275 = vlaneseq
    %v276 = vshrl.u32 %v275, 7
    %v277 = vsub.s32 0, %v276
    %v278 = vrot.slane %v234, %v277
    %v279 = vadd.f32 %v273, %v278
    %v280 = vadd.f32 %v274, %v278
    %v281 = vsel %vm241, %v235, 0.0
    %282 = vadd.xlane.f32.xlu0 %v281
    %v283 = vpop.xlane.xlu0 %282
    %v284 = vsel %vm241, %v236, 0.0
    %285 = vadd.xlane.f32.xlu0 %v284
    %v286 = vpop.xlane.xlu0 %285
    %v287 = vmul.f32 %v283, %v248
    %v288 = vmul.f32 %v286, %v248
    %v289 = vsub.f32 %v235, %v287
    %v290 = vsub.f32 %v236, %v288
    %v291 = vmul.f32 %v289, %v289
    %v292 = vmul.f32 %v290, %v290
    %v293 = vsel %vm241, %v291, 0.0
    %294 = vadd.xlane.f32.xlu0 %v293
    %v295 = vpop.xlane.xlu0 %294
    %v296 = vsel %vm241, %v292, 0.0
    %297 = vadd.xlane.f32.xlu0 %v296
    %v298 = vpop.xlane.xlu0 %297
    %v299 = vmul.f32 %v295, %v248
    %v300 = vmul.f32 %v298, %v248
    %v301 = vadd.f32 %v299, 1e-05
    %v302 = vadd.f32 %v300, 1e-05
    %v303 = vrsqrt.pop %v301
    %v304 = vrsqrt.pop %v302
    %v305 = vmul.f32 %v289, %v303
    %v306 = vmul.f32 %v290, %v304
    %v307 = vlaneseq
    %v308 = vshrl.u32 %v307, 7
    %v309 = vsub.s32 1, %v308
    %v310 = vrot.slane %v233, %v309
    %v311 = vmul.f32 %v305, %v310
    %v312 = vmul.f32 %v306, %v310
    %v313 = vlaneseq
    %v314 = vshrl.u32 %v313, 7
    %v315 = vsub.s32 1, %v314
    %v316 = vrot.slane %v234, %v315
    %v317 = vadd.f32 %v311, %v316
    %v318 = vadd.f32 %v312, %v316
    %v319 = vld [vmem:[#allocation8] sm:$0xf]
    %v320 = vld [vmem:[#allocation8 + $0x4] sm:$0xf]
    %v321 = vld [vmem:[#allocation8 + $0x8] sm:$0xf]
    %v322 = vld [vmem:[#allocation8 + $0xc] sm:$0xf]
    %v323 = vld [vmem:[#allocation10] sm:$0x1]
    %v324 = vld [vmem:[#allocation11] sm:$0xf]
    %v325 = vld [vmem:[#allocation11 + $0x4] sm:$0xf]
    %v326 = vld [vmem:[#allocation11 + $0x8] sm:$0xf]
    %v327 = vld [vmem:[#allocation11 + $0xc] sm:$0xf]
    %v328 = vld [vmem:[#allocation13] sm:$0x1]
    %v329 = vld [vmem:[%s10] sm:$0xf]
    %v330 = vld [vmem:[%s10 + $0x4] sm:$0xf]
    %v331 = vld [vmem:[%s10 + $0x8] sm:$0xf]
    %v332 = vld [vmem:[%s10 + $0xc] sm:$0xf]
    %v333 = vld [vmem:[#allocation14] sm:$0x1]
    %v334 = vpack.c.bf16 %v318, %v317
    %v336 = vlaneseq
    %v337 = vshrl.u32 %v336, 7
    %v338 = vsub.s32 0, %v337
    %v339 = vrot.slane %v323, %v338
    %v345 = vunpack.c.l.b16 %v319
    %v346 = vunpack.c.l.b16 %v320
    %v347 = vunpack.c.l.b16 %v321
    %v348 = vunpack.c.l.b16 %v322
    %v349 = vpack.c.b16 %v346, %v345
    %v350 = vpack.c.b16 %v348, %v347
    %v354 = vsel %vm241, %v334, 0
    %356 = vmatprep.subr.bf16.mxu0 0
    %357 = vmatpush1.bf16.msra.mxu0 %v349
    %358 = vmatprep.subr.bf16.mxu0 0
    %359 = vmatpush1.bf16.msra.mxu0 %v350
    %360 = vmatprep.subr.bf16.mxu0 0
    %361 = vmatpush1.bf16.msra.mxu0 0
    %362 = vmatprep.subr.bf16.mxu0 0
    %363 = vmatpush1.bf16.msra.mxu0 0
    %364 = vmatprep.subr.bf16.mxu0 0
    %365 = vmatpush1.bf16.msra.mxu0 0
    %366 = vmatprep.subr.bf16.mxu0 0
    %367 = vmatpush1.bf16.msra.mxu0 0
    %368 = vmatprep.subr.bf16.mxu0 0
    %369 = vmatpush1.bf16.msra.mxu0 0
    %370 = vmatprep.subr.bf16.mxu0 0
    %371 = vmatpush1.bf16.msra.mxu0 0
    %372 = vmatprep.subr.bf16.mxu0 0
    %373 = vmatpush1.bf16.msra.mxu0 0
    %374 = vmatprep.subr.bf16.mxu0 0
    %375 = vmatpush1.bf16.msra.mxu0 0
    %376 = vmatprep.subr.bf16.mxu0 0
    %377 = vmatpush1.bf16.msra.mxu0 0
    %378 = vmatprep.subr.bf16.mxu0 0
    %379 = vmatpush1.bf16.msra.mxu0 0
    %380 = vmatprep.subr.bf16.mxu0 0
    %381 = vmatpush1.bf16.msra.mxu0 0
    %382 = vmatprep.subr.bf16.mxu0 0
    %383 = vmatpush1.bf16.msra.mxu0 0
    %384 = vmatprep.subr.bf16.mxu0 0
    %385 = vmatpush1.bf16.msra.mxu0 0
    %386 = vmatprep.subr.bf16.mxu0 0
    %387 = vmatpush1.bf16.msra.mxu0 0
    %388 = vmatprep.mubr.bf16.mxu0 0
    %389 = vmatmul.mubr.bf16.gmra.mrb[0].mxu0 %v354
    %v390 = vpop.f32.mrb[0].mxu0
    %v391 = vadd.f32 %v339, %v390
    %v392 = vpop.f32.mrb[0].mxu0
    %v393 = vpop.f32.mrb[0].mxu0
    %v394 = vadd.f32 %v339, %v393
    %v395 = vpop.f32.mrb[0].mxu0
    %396 = vdwg.mxu0
    %v397 = vpack.c.bf16 %v280, %v279
    %v399 = vlaneseq
    %v400 = vshrl.u32 %v399, 7
    %v401 = vsub.s32 0, %v400
    %v402 = vrot.slane %v328, %v401
    %v408 = vunpack.c.l.b16 %v324
    %v409 = vunpack.c.l.b16 %v325
    %v410 = vunpack.c.l.b16 %v326
    %v411 = vunpack.c.l.b16 %v327
    %v412 = vpack.c.b16 %v409, %v408
    %v413 = vpack.c.b16 %v411, %v410
    %v417 = vsel %vm241, %v397, 0
    %419 = vmatprep.subr.bf16.mxu0 0
    %420 = vmatpush1.bf16.msra.mxu0 %v412
    %421 = vmatprep.subr.bf16.mxu0 0
    %422 = vmatpush1.bf16.msra.mxu0 %v413
    %423 = vmatprep.subr.bf16.mxu0 0
    %424 = vmatpush1.bf16.msra.mxu0 0
    %425 = vmatprep.subr.bf16.mxu0 0
    %426 = vmatpush1.bf16.msra.mxu0 0
    %427 = vmatprep.subr.bf16.mxu0 0
    %428 = vmatpush1.bf16.msra.mxu0 0
    %429 = vmatprep.subr.bf16.mxu0 0
    %430 = vmatpush1.bf16.msra.mxu0 0
    %431 = vmatprep.subr.bf16.mxu0 0
    %432 = vmatpush1.bf16.msra.mxu0 0
    %433 = vmatprep.subr.bf16.mxu0 0
    %434 = vmatpush1.bf16.msra.mxu0 0
    %435 = vmatprep.subr.bf16.mxu0 0
    %436 = vmatpush1.bf16.msra.mxu0 0
    %437 = vmatprep.subr.bf16.mxu0 0
    %438 = vmatpush1.bf16.msra.mxu0 0
    %439 = vmatprep.subr.bf16.mxu0 0
    %440 = vmatpush1.bf16.msra.mxu0 0
    %441 = vmatprep.subr.bf16.mxu0 0
    %442 = vmatpush1.bf16.msra.mxu0 0
    %443 = vmatprep.subr.bf16.mxu0 0
    %444 = vmatpush1.bf16.msra.mxu0 0
    %445 = vmatprep.subr.bf16.mxu0 0
    %446 = vmatpush1.bf16.msra.mxu0 0
    %447 = vmatprep.subr.bf16.mxu0 0
    %448 = vmatpush1.bf16.msra.mxu0 0
    %449 = vmatprep.subr.bf16.mxu0 0
    %450 = vmatpush1.bf16.msra.mxu0 0
    %451 = vmatprep.mubr.bf16.mxu0 0
    %452 = vmatmul.mubr.bf16.gmra.mrb[0].mxu0 %v417
    %v453 = vpop.f32.mrb[0].mxu0
    %v454 = vadd.f32 %v402, %v453
    %v455 = vpop.f32.mrb[0].mxu0
    %v456 = vpop.f32.mrb[0].mxu0
    %v457 = vadd.f32 %v402, %v456
    %v458 = vpop.f32.mrb[0].mxu0
    %459 = vdwg.mxu0
    %v460 = vmul.f32 %v391, 0.35355338
    %v461 = vmul.f32 %v394, 0.35355338
    %464 = vrot.lane.b32.xlu0 %v460, 120
    %v465 = vpop.permute.xlu0 %464
    %466 = vrot.lane.b32.xlu0 %v461, 120
    %v467 = vpop.permute.xlu0 %466
    %470 = vrot.lane.b32.xlu0 %v460, 112
    %v471 = vpop.permute.xlu0 %470
    %472 = vrot.lane.b32.xlu0 %v461, 112
    %v473 = vpop.permute.xlu0 %472
    %476 = vrot.lane.b32.xlu0 %v460, 104
    %v477 = vpop.permute.xlu0 %476
    %478 = vrot.lane.b32.xlu0 %v461, 104
    %v479 = vpop.permute.xlu0 %478
    %v482 = vpack.c.bf16 %v460, %v460
    %v483 = vpack.c.bf16 %v465, %v465
    %v484 = vpack.c.bf16 %v471, %v471
    %v485 = vpack.c.bf16 %v477, %v477
    %v486 = vpack.c.bf16 %v461, %v461
    %v487 = vpack.c.bf16 %v467, %v467
    %v488 = vpack.c.bf16 %v473, %v473
    %v489 = vpack.c.bf16 %v479, %v479
    %492 = vrot.lane.b32.xlu0 %v454, 120
    %v493 = vpop.permute.xlu0 %492
    %494 = vrot.lane.b32.xlu0 %v457, 120
    %v495 = vpop.permute.xlu0 %494
    %498 = vrot.lane.b32.xlu0 %v454, 112
    %v499 = vpop.permute.xlu0 %498
    %500 = vrot.lane.b32.xlu0 %v457, 112
    %v501 = vpop.permute.xlu0 %500
    %504 = vrot.lane.b32.xlu0 %v454, 104
    %v505 = vpop.permute.xlu0 %504
    %506 = vrot.lane.b32.xlu0 %v457, 104
    %v507 = vpop.permute.xlu0 %506
    %v510 = vpack.c.bf16 %v454, %v454
    %v511 = vpack.c.bf16 %v493, %v493
    %v512 = vpack.c.bf16 %v499, %v499
    %v513 = vpack.c.bf16 %v505, %v505
    %v514 = vpack.c.bf16 %v457, %v457
    %v515 = vpack.c.bf16 %v495, %v495
    %v516 = vpack.c.bf16 %v501, %v501
    %v517 = vpack.c.bf16 %v507, %v507
    %vm518 = vcmask 64512
    %v520 = vsel %vm518, %v482, 0
    %v523 = vsel %vm518, %v510, 0
    %525 = vmatprep.subr.bf16.mxu0 0
    %526 = vmatpush1.bf16.xpose.msra.mxu0 %v523
    %527 = vmatprep.subr.bf16.mxu0 0
    %528 = vmatpush1.bf16.xpose.msra.mxu0 0
    %529 = vmatprep.subr.bf16.mxu0 0
    %530 = vmatpush1.bf16.xpose.msra.mxu0 0
    %531 = vmatprep.subr.bf16.mxu0 0
    %532 = vmatpush1.bf16.xpose.msra.mxu0 0
    %533 = vmatprep.subr.bf16.mxu0 0
    %534 = vmatpush1.bf16.xpose.msra.mxu0 0
    %535 = vmatprep.subr.bf16.mxu0 0
    %536 = vmatpush1.bf16.xpose.msra.mxu0 0
    %537 = vmatprep.subr.bf16.mxu0 0
    %538 = vmatpush1.bf16.xpose.msra.mxu0 0
    %539 = vmatprep.subr.bf16.mxu0 0
    %540 = vmatpush1.bf16.xpose.msra.mxu0 0
    %541 = vmatprep.subr.bf16.mxu0 0
    %542 = vmatpush1.bf16.xpose.msra.mxu0 0
    %543 = vmatprep.subr.bf16.mxu0 0
    %544 = vmatpush1.bf16.xpose.msra.mxu0 0
    %545 = vmatprep.subr.bf16.mxu0 0
    %546 = vmatpush1.bf16.xpose.msra.mxu0 0
    %547 = vmatprep.subr.bf16.mxu0 0
    %548 = vmatpush1.bf16.xpose.msra.mxu0 0
    %549 = vmatprep.subr.bf16.mxu0 0
    %550 = vmatpush1.bf16.xpose.msra.mxu0 0
    %551 = vmatprep.subr.bf16.mxu0 0
    %552 = vmatpush1.bf16.xpose.msra.mxu0 0
    %553 = vmatprep.subr.bf16.mxu0 0
    %554 = vmatpush1.bf16.xpose.msra.mxu0 0
    %555 = vmatprep.subr.bf16.mxu0 0
    %556 = vmatpush1.bf16.xpose.msra.mxu0 0
    %557 = vmatprep.mubr.bf16.mxu0 0
    %558 = vmatmul.mubr.bf16.gmra.mrb[0].mxu0 %v520
    %v559 = vpop.f32.mrb[0].mxu0
    %v560 = vadd.f32 0.0, %v559
    %v561 = vpop.f32.mrb[0].mxu0
    %v562 = vpop.f32.mrb[0].mxu0
    %v563 = vpop.f32.mrb[0].mxu0
    %564 = vdwg.mxu0
    %v566 = vsel %vm518, %v483, 0
    %v569 = vsel %vm518, %v511, 0
    %571 = vmatprep.subr.bf16.mxu0 0
    %572 = vmatpush1.bf16.xpose.msra.mxu0 %v569
    %573 = vmatprep.subr.bf16.mxu0 0
    %574 = vmatpush1.bf16.xpose.msra.mxu0 0
    %575 = vmatprep.subr.bf16.mxu0 0
    %576 = vmatpush1.bf16.xpose.msra.mxu0 0
    %577 = vmatprep.subr.bf16.mxu0 0
    %578 = vmatpush1.bf16.xpose.msra.mxu0 0
    %579 = vmatprep.subr.bf16.mxu0 0
    %580 = vmatpush1.bf16.xpose.msra.mxu0 0
    %581 = vmatprep.subr.bf16.mxu0 0
    %582 = vmatpush1.bf16.xpose.msra.mxu0 0
    %583 = vmatprep.subr.bf16.mxu0 0
    %584 = vmatpush1.bf16.xpose.msra.mxu0 0
    %585 = vmatprep.subr.bf16.mxu0 0
    %586 = vmatpush1.bf16.xpose.msra.mxu0 0
    %587 = vmatprep.subr.bf16.mxu0 0
    %588 = vmatpush1.bf16.xpose.msra.mxu0 0
    %589 = vmatprep.subr.bf16.mxu0 0
    %590 = vmatpush1.bf16.xpose.msra.mxu0 0
    %591 = vmatprep.subr.bf16.mxu0 0
    %592 = vmatpush1.bf16.xpose.msra.mxu0 0
    %593 = vmatprep.subr.bf16.mxu0 0
    %594 = vmatpush1.bf16.xpose.msra.mxu0 0
    %595 = vmatprep.subr.bf16.mxu0 0
    %596 = vmatpush1.bf16.xpose.msra.mxu0 0
    %597 = vmatprep.subr.bf16.mxu0 0
    %598 = vmatpush1.bf16.xpose.msra.mxu0 0
    %599 = vmatprep.subr.bf16.mxu0 0
    %600 = vmatpush1.bf16.xpose.msra.mxu0 0
    %601 = vmatprep.subr.bf16.mxu0 0
    %602 = vmatpush1.bf16.xpose.msra.mxu0 0
    %603 = vmatprep.mubr.bf16.mxu0 0
    %604 = vmatmul.mubr.bf16.gmra.mrb[0].mxu0 %v566
    %v605 = vpop.f32.mrb[0].mxu0
    %v606 = vadd.f32 0.0, %v605
    %v607 = vpop.f32.mrb[0].mxu0
    %v608 = vpop.f32.mrb[0].mxu0
    %v609 = vpop.f32.mrb[0].mxu0
    %610 = vdwg.mxu0
    %v612 = vsel %vm518, %v484, 0
    %v615 = vsel %vm518, %v512, 0
    %617 = vmatprep.subr.bf16.mxu0 0
    %618 = vmatpush1.bf16.xpose.msra.mxu0 %v615
    %619 = vmatprep.subr.bf16.mxu0 0
    %620 = vmatpush1.bf16.xpose.msra.mxu0 0
    %621 = vmatprep.subr.bf16.mxu0 0
    %622 = vmatpush1.bf16.xpose.msra.mxu0 0
    %623 = vmatprep.subr.bf16.mxu0 0
    %624 = vmatpush1.bf16.xpose.msra.mxu0 0
    %625 = vmatprep.subr.bf16.mxu0 0
    %626 = vmatpush1.bf16.xpose.msra.mxu0 0
    %627 = vmatprep.subr.bf16.mxu0 0
    %628 = vmatpush1.bf16.xpose.msra.mxu0 0
    %629 = vmatprep.subr.bf16.mxu0 0
    %630 = vmatpush1.bf16.xpose.msra.mxu0 0
    %631 = vmatprep.subr.bf16.mxu0 0
    %632 = vmatpush1.bf16.xpose.msra.mxu0 0
    %633 = vmatprep.subr.bf16.mxu0 0
    %634 = vmatpush1.bf16.xpose.msra.mxu0 0
    %635 = vmatprep.subr.bf16.mxu0 0
    %636 = vmatpush1.bf16.xpose.msra.mxu0 0
    %637 = vmatprep.subr.bf16.mxu0 0
    %638 = vmatpush1.bf16.xpose.msra.mxu0 0
    %639 = vmatprep.subr.bf16.mxu0 0
    %640 = vmatpush1.bf16.xpose.msra.mxu0 0
    %641 = vmatprep.subr.bf16.mxu0 0
    %642 = vmatpush1.bf16.xpose.msra.mxu0 0
    %643 = vmatprep.subr.bf16.mxu0 0
    %644 = vmatpush1.bf16.xpose.msra.mxu0 0
    %645 = vmatprep.subr.bf16.mxu0 0
    %646 = vmatpush1.bf16.xpose.msra.mxu0 0
    %647 = vmatprep.subr.bf16.mxu0 0
    %648 = vmatpush1.bf16.xpose.msra.mxu0 0
    %649 = vmatprep.mubr.bf16.mxu0 0
    %650 = vmatmul.mubr.bf16.gmra.mrb[0].mxu0 %v612
    %v651 = vpop.f32.mrb[0].mxu0
    %v652 = vadd.f32 0.0, %v651
    %v653 = vpop.f32.mrb[0].mxu0
    %v654 = vpop.f32.mrb[0].mxu0
    %v655 = vpop.f32.mrb[0].mxu0
    %656 = vdwg.mxu0
    %v658 = vsel %vm518, %v485, 0
    %v661 = vsel %vm518, %v513, 0
    %663 = vmatprep.subr.bf16.mxu0 0
    %664 = vmatpush1.bf16.xpose.msra.mxu0 %v661
    %665 = vmatprep.subr.bf16.mxu0 0
    %666 = vmatpush1.bf16.xpose.msra.mxu0 0
    %667 = vmatprep.subr.bf16.mxu0 0
    %668 = vmatpush1.bf16.xpose.msra.mxu0 0
    %669 = vmatprep.subr.bf16.mxu0 0
    %670 = vmatpush1.bf16.xpose.msra.mxu0 0
    %671 = vmatprep.subr.bf16.mxu0 0
    %672 = vmatpush1.bf16.xpose.msra.mxu0 0
    %673 = vmatprep.subr.bf16.mxu0 0
    %674 = vmatpush1.bf16.xpose.msra.mxu0 0
    %675 = vmatprep.subr.bf16.mxu0 0
    %676 = vmatpush1.bf16.xpose.msra.mxu0 0
    %677 = vmatprep.subr.bf16.mxu0 0
    %678 = vmatpush1.bf16.xpose.msra.mxu0 0
    %679 = vmatprep.subr.bf16.mxu0 0
    %680 = vmatpush1.bf16.xpose.msra.mxu0 0
    %681 = vmatprep.subr.bf16.mxu0 0
    %682 = vmatpush1.bf16.xpose.msra.mxu0 0
    %683 = vmatprep.subr.bf16.mxu0 0
    %684 = vmatpush1.bf16.xpose.msra.mxu0 0
    %685 = vmatprep.subr.bf16.mxu0 0
    %686 = vmatpush1.bf16.xpose.msra.mxu0 0
    %687 = vmatprep.subr.bf16.mxu0 0
    %688 = vmatpush1.bf16.xpose.msra.mxu0 0
    %689 = vmatprep.subr.bf16.mxu0 0
    %690 = vmatpush1.bf16.xpose.msra.mxu0 0
    %691 = vmatprep.subr.bf16.mxu0 0
    %692 = vmatpush1.bf16.xpose.msra.mxu0 0
    %693 = vmatprep.subr.bf16.mxu0 0
    %694 = vmatpush1.bf16.xpose.msra.mxu0 0
    %695 = vmatprep.mubr.bf16.mxu0 0
    %696 = vmatmul.mubr.bf16.gmra.mrb[0].mxu0 %v658
    %v697 = vpop.f32.mrb[0].mxu0
    %v698 = vadd.f32 0.0, %v697
    %v699 = vpop.f32.mrb[0].mxu0
    %v700 = vpop.f32.mrb[0].mxu0
    %v701 = vpop.f32.mrb[0].mxu0
    %702 = vdwg.mxu0
    %v704 = vsel %vm518, %v486, 0
    %v707 = vsel %vm518, %v514, 0
    %709 = vmatprep.subr.bf16.mxu0 0
    %710 = vmatpush1.bf16.xpose.msra.mxu0 %v707
    %711 = vmatprep.subr.bf16.mxu0 0
    %712 = vmatpush1.bf16.xpose.msra.mxu0 0
    %713 = vmatprep.subr.bf16.mxu0 0
    %714 = vmatpush1.bf16.xpose.msra.mxu0 0
    %715 = vmatprep.subr.bf16.mxu0 0
    %716 = vmatpush1.bf16.xpose.msra.mxu0 0
    %717 = vmatprep.subr.bf16.mxu0 0
    %718 = vmatpush1.bf16.xpose.msra.mxu0 0
    %719 = vmatprep.subr.bf16.mxu0 0
    %720 = vmatpush1.bf16.xpose.msra.mxu0 0
    %721 = vmatprep.subr.bf16.mxu0 0
    %722 = vmatpush1.bf16.xpose.msra.mxu0 0
    %723 = vmatprep.subr.bf16.mxu0 0
    %724 = vmatpush1.bf16.xpose.msra.mxu0 0
    %725 = vmatprep.subr.bf16.mxu0 0
    %726 = vmatpush1.bf16.xpose.msra.mxu0 0
    %727 = vmatprep.subr.bf16.mxu0 0
    %728 = vmatpush1.bf16.xpose.msra.mxu0 0
    %729 = vmatprep.subr.bf16.mxu0 0
    %730 = vmatpush1.bf16.xpose.msra.mxu0 0
    %731 = vmatprep.subr.bf16.mxu0 0
    %732 = vmatpush1.bf16.xpose.msra.mxu0 0
    %733 = vmatprep.subr.bf16.mxu0 0
    %734 = vmatpush1.bf16.xpose.msra.mxu0 0
    %735 = vmatprep.subr.bf16.mxu0 0
    %736 = vmatpush1.bf16.xpose.msra.mxu0 0
    %737 = vmatprep.subr.bf16.mxu0 0
    %738 = vmatpush1.bf16.xpose.msra.mxu0 0
    %739 = vmatprep.subr.bf16.mxu0 0
    %740 = vmatpush1.bf16.xpose.msra.mxu0 0
    %741 = vmatprep.mubr.bf16.mxu0 0
    %742 = vmatmul.mubr.bf16.gmra.mrb[0].mxu0 %v704
    %v743 = vpop.f32.mrb[0].mxu0
    %v744 = vadd.f32 0.0, %v743
    %v745 = vpop.f32.mrb[0].mxu0
    %v746 = vpop.f32.mrb[0].mxu0
    %v747 = vpop.f32.mrb[0].mxu0
    %748 = vdwg.mxu0
    %v750 = vsel %vm518, %v487, 0
    %v753 = vsel %vm518, %v515, 0
    %755 = vmatprep.subr.bf16.mxu0 0
    %756 = vmatpush1.bf16.xpose.msra.mxu0 %v753
    %757 = vmatprep.subr.bf16.mxu0 0
    %758 = vmatpush1.bf16.xpose.msra.mxu0 0
    %759 = vmatprep.subr.bf16.mxu0 0
    %760 = vmatpush1.bf16.xpose.msra.mxu0 0
    %761 = vmatprep.subr.bf16.mxu0 0
    %762 = vmatpush1.bf16.xpose.msra.mxu0 0
    %763 = vmatprep.subr.bf16.mxu0 0
    %764 = vmatpush1.bf16.xpose.msra.mxu0 0
    %765 = vmatprep.subr.bf16.mxu0 0
    %766 = vmatpush1.bf16.xpose.msra.mxu0 0
    %767 = vmatprep.subr.bf16.mxu0 0
    %768 = vmatpush1.bf16.xpose.msra.mxu0 0
    %769 = vmatprep.subr.bf16.mxu0 0
    %770 = vmatpush1.bf16.xpose.msra.mxu0 0
    %771 = vmatprep.subr.bf16.mxu0 0
    %772 = vmatpush1.bf16.xpose.msra.mxu0 0
    %773 = vmatprep.subr.bf16.mxu0 0
    %774 = vmatpush1.bf16.xpose.msra.mxu0 0
    %775 = vmatprep.subr.bf16.mxu0 0
    %776 = vmatpush1.bf16.xpose.msra.mxu0 0
    %777 = vmatprep.subr.bf16.mxu0 0
    %778 = vmatpush1.bf16.xpose.msra.mxu0 0
    %779 = vmatprep.subr.bf16.mxu0 0
    %780 = vmatpush1.bf16.xpose.msra.mxu0 0
    %781 = vmatprep.subr.bf16.mxu0 0
    %782 = vmatpush1.bf16.xpose.msra.mxu0 0
    %783 = vmatprep.subr.bf16.mxu0 0
    %784 = vmatpush1.bf16.xpose.msra.mxu0 0
    %785 = vmatprep.subr.bf16.mxu0 0
    %786 = vmatpush1.bf16.xpose.msra.mxu0 0
    %787 = vmatprep.mubr.bf16.mxu0 0
    %788 = vmatmul.mubr.bf16.gmra.mrb[0].mxu0 %v750
    %v789 = vpop.f32.mrb[0].mxu0
    %v790 = vadd.f32 0.0, %v789
    %v791 = vpop.f32.mrb[0].mxu0
    %v792 = vpop.f32.mrb[0].mxu0
    %v793 = vpop.f32.mrb[0].mxu0
    %794 = vdwg.mxu0
    %v796 = vsel %vm518, %v488, 0
    %v799 = vsel %vm518, %v516, 0
    %801 = vmatprep.subr.bf16.mxu0 0
    %802 = vmatpush1.bf16.xpose.msra.mxu0 %v799
    %803 = vmatprep.subr.bf16.mxu0 0
    %804 = vmatpush1.bf16.xpose.msra.mxu0 0
    %805 = vmatprep.subr.bf16.mxu0 0
    %806 = vmatpush1.bf16.xpose.msra.mxu0 0
    %807 = vmatprep.subr.bf16.mxu0 0
    %808 = vmatpush1.bf16.xpose.msra.mxu0 0
    %809 = vmatprep.subr.bf16.mxu0 0
    %810 = vmatpush1.bf16.xpose.msra.mxu0 0
    %811 = vmatprep.subr.bf16.mxu0 0
    %812 = vmatpush1.bf16.xpose.msra.mxu0 0
    %813 = vmatprep.subr.bf16.mxu0 0
    %814 = vmatpush1.bf16.xpose.msra.mxu0 0
    %815 = vmatprep.subr.bf16.mxu0 0
    %816 = vmatpush1.bf16.xpose.msra.mxu0 0
    %817 = vmatprep.subr.bf16.mxu0 0
    %818 = vmatpush1.bf16.xpose.msra.mxu0 0
    %819 = vmatprep.subr.bf16.mxu0 0
    %820 = vmatpush1.bf16.xpose.msra.mxu0 0
    %821 = vmatprep.subr.bf16.mxu0 0
    %822 = vmatpush1.bf16.xpose.msra.mxu0 0
    %823 = vmatprep.subr.bf16.mxu0 0
    %824 = vmatpush1.bf16.xpose.msra.mxu0 0
    %825 = vmatprep.subr.bf16.mxu0 0
    %826 = vmatpush1.bf16.xpose.msra.mxu0 0
    %827 = vmatprep.subr.bf16.mxu0 0
    %828 = vmatpush1.bf16.xpose.msra.mxu0 0
    %829 = vmatprep.subr.bf16.mxu0 0
    %830 = vmatpush1.bf16.xpose.msra.mxu0 0
    %831 = vmatprep.subr.bf16.mxu0 0
    %832 = vmatpush1.bf16.xpose.msra.mxu0 0
    %833 = vmatprep.mubr.bf16.mxu0 0
    %834 = vmatmul.mubr.bf16.gmra.mrb[0].mxu0 %v796
    %v835 = vpop.f32.mrb[0].mxu0
    %v836 = vadd.f32 0.0, %v835
    %v837 = vpop.f32.mrb[0].mxu0
    %v838 = vpop.f32.mrb[0].mxu0
    %v839 = vpop.f32.mrb[0].mxu0
    %840 = vdwg.mxu0
    %v842 = vsel %vm518, %v489, 0
    %v845 = vsel %vm518, %v517, 0
    %847 = vmatprep.subr.bf16.mxu0 0
    %848 = vmatpush1.bf16.xpose.msra.mxu0 %v845
    %849 = vmatprep.subr.bf16.mxu0 0
    %850 = vmatpush1.bf16.xpose.msra.mxu0 0
    %851 = vmatprep.subr.bf16.mxu0 0
    %852 = vmatpush1.bf16.xpose.msra.mxu0 0
    %853 = vmatprep.subr.bf16.mxu0 0
    %854 = vmatpush1.bf16.xpose.msra.mxu0 0
    %855 = vmatprep.subr.bf16.mxu0 0
    %856 = vmatpush1.bf16.xpose.msra.mxu0 0
    %857 = vmatprep.subr.bf16.mxu0 0
    %858 = vmatpush1.bf16.xpose.msra.mxu0 0
    %859 = vmatprep.subr.bf16.mxu0 0
    %860 = vmatpush1.bf16.xpose.msra.mxu0 0
    %861 = vmatprep.subr.bf16.mxu0 0
    %862 = vmatpush1.bf16.xpose.msra.mxu0 0
    %863 = vmatprep.subr.bf16.mxu0 0
    %864 = vmatpush1.bf16.xpose.msra.mxu0 0
    %865 = vmatprep.subr.bf16.mxu0 0
    %866 = vmatpush1.bf16.xpose.msra.mxu0 0
    %867 = vmatprep.subr.bf16.mxu0 0
    %868 = vmatpush1.bf16.xpose.msra.mxu0 0
    %869 = vmatprep.subr.bf16.mxu0 0
    %870 = vmatpush1.bf16.xpose.msra.mxu0 0
    %871 = vmatprep.subr.bf16.mxu0 0
    %872 = vmatpush1.bf16.xpose.msra.mxu0 0
    %873 = vmatprep.subr.bf16.mxu0 0
    %874 = vmatpush1.bf16.xpose.msra.mxu0 0
    %875 = vmatprep.subr.bf16.mxu0 0
    %876 = vmatpush1.bf16.xpose.msra.mxu0 0
    %877 = vmatprep.subr.bf16.mxu0 0
    %878 = vmatpush1.bf16.xpose.msra.mxu0 0
    %879 = vmatprep.mubr.bf16.mxu0 0
    %880 = vmatmul.mubr.bf16.gmra.mrb[0].mxu0 %v842
    %v881 = vpop.f32.mrb[0].mxu0
    %v882 = vadd.f32 0.0, %v881
    %v883 = vpop.f32.mrb[0].mxu0
    %v884 = vpop.f32.mrb[0].mxu0
    %v885 = vpop.f32.mrb[0].mxu0
    %886 = vdwg.mxu0
    %v887 = vsel %vm518, %v560, -inf
    %888 = vmax.xlane.f32.xlu0 %v887
    %v889 = vpop.xlane.xlu0 %888
    %v890 = vsel %vm518, %v606, -inf
    %891 = vmax.xlane.f32.xlu0 %v890
    %v892 = vpop.xlane.xlu0 %891
    %v893 = vsel %vm518, %v652, -inf
    %894 = vmax.xlane.f32.xlu0 %v893
    %v895 = vpop.xlane.xlu0 %894
    %v896 = vsel %vm518, %v698, -inf
    %897 = vmax.xlane.f32.xlu0 %v896
    %v898 = vpop.xlane.xlu0 %897
    %v899 = vsel %vm518, %v744, -inf
    %900 = vmax.xlane.f32.xlu0 %v899
    %v901 = vpop.xlane.xlu0 %900
    %v902 = vsel %vm518, %v790, -inf
    %903 = vmax.xlane.f32.xlu0 %v902
    %v904 = vpop.xlane.xlu0 %903
    %v905 = vsel %vm518, %v836, -inf
    %906 = vmax.xlane.f32.xlu0 %v905
    %v907 = vpop.xlane.xlu0 %906
    %v908 = vsel %vm518, %v882, -inf
    %909 = vmax.xlane.f32.xlu0 %v908
    %v910 = vpop.xlane.xlu0 %909
    %v911 = vsub.f32 %v560, %v889
    %v912 = vsub.f32 %v606, %v892
    %v913 = vsub.f32 %v652, %v895
    %v914 = vsub.f32 %v698, %v898
    %v915 = vsub.f32 %v744, %v901
    %v916 = vsub.f32 %v790, %v904
    %v917 = vsub.f32 %v836, %v907
    %v918 = vsub.f32 %v882, %v910
    %v919 = vmul.f32 %v911, 1.442695
    %v920 = vpow.pop %v919
    %v921 = vmul.f32 %v912, 1.442695
    %v922 = vpow.pop %v921
    %v923 = vmul.f32 %v913, 1.442695
    %v924 = vpow.pop %v923
    %v925 = vmul.f32 %v914, 1.442695
    %v926 = vpow.pop %v925
    %v927 = vmul.f32 %v915, 1.442695
    %v928 = vpow.pop %v927
    %v929 = vmul.f32 %v916, 1.442695
    %v930 = vpow.pop %v929
    %v931 = vmul.f32 %v917, 1.442695
    %v932 = vpow.pop %v931
    %v933 = vmul.f32 %v918, 1.442695
    %v934 = vpow.pop %v933
    %v935 = vsel %vm518, %v920, 0.0
    %936 = vadd.xlane.f32.xlu0 %v935
    %v937 = vpop.xlane.xlu0 %936
    %v938 = vsel %vm518, %v922, 0.0
    %939 = vadd.xlane.f32.xlu0 %v938
    %v940 = vpop.xlane.xlu0 %939
    %v941 = vsel %vm518, %v924, 0.0
    %942 = vadd.xlane.f32.xlu0 %v941
    %v943 = vpop.xlane.xlu0 %942
    %v944 = vsel %vm518, %v926, 0.0
    %945 = vadd.xlane.f32.xlu0 %v944
    %v946 = vpop.xlane.xlu0 %945
    %v947 = vsel %vm518, %v928, 0.0
    %948 = vadd.xlane.f32.xlu0 %v947
    %v949 = vpop.xlane.xlu0 %948
    %v950 = vsel %vm518, %v930, 0.0
    %951 = vadd.xlane.f32.xlu0 %v950
    %v952 = vpop.xlane.xlu0 %951
    %v953 = vsel %vm518, %v932, 0.0
    %954 = vadd.xlane.f32.xlu0 %v953
    %v955 = vpop.xlane.xlu0 %954
    %v956 = vsel %vm518, %v934, 0.0
    %957 = vadd.xlane.f32.xlu0 %v956
    %v958 = vpop.xlane.xlu0 %957
    %v959 = vrcp.pop %v937
    %v960 = vrcp.pop %v940
    %v961 = vrcp.pop %v943
    %v962 = vrcp.pop %v946
    %v963 = vrcp.pop %v949
    %v964 = vrcp.pop %v952
    %v965 = vrcp.pop %v955
    %v966 = vrcp.pop %v958
    %v967 = vmul.f32 %v920, %v959
    %v968 = vmul.f32 %v922, %v960
    %v969 = vmul.f32 %v924, %v961
    %v970 = vmul.f32 %v926, %v962
    %v971 = vmul.f32 %v928, %v963
    %v972 = vmul.f32 %v930, %v964
    %v973 = vmul.f32 %v932, %v965
    %v974 = vmul.f32 %v934, %v966
    %v975 = vpack.c.bf16 %v967, %v967
    %v976 = vpack.c.bf16 %v968, %v968
    %v977 = vpack.c.bf16 %v969, %v969
    %v978 = vpack.c.bf16 %v970, %v970
    %v979 = vpack.c.bf16 %v971, %v971
    %v980 = vpack.c.bf16 %v972, %v972
    %v981 = vpack.c.bf16 %v973, %v973
    %v982 = vpack.c.bf16 %v974, %v974
    %984 = vrot.lane.b32.xlu0 %v510, 96
    %v985 = vpop.permute.xlu0 %984
    %v987 = vsel %vm518, %v975, 0
    %vm989 = vcmask 1043456
    %v991 = vsel %vm989, %v985, 0
    %993 = vmatprep.subr.bf16.mxu0 0
    %994 = vmatpush1.bf16.msra.mxu0 %v991
    %995 = vmatprep.subr.bf16.mxu0 0
    %996 = vmatpush1.bf16.msra.mxu0 0
    %997 = vmatprep.subr.bf16.mxu0 0
    %998 = vmatpush1.bf16.msra.mxu0 0
    %999 = vmatprep.subr.bf16.mxu0 0
    %1000 = vmatpush1.bf16.msra.mxu0 0
    %1001 = vmatprep.subr.bf16.mxu0 0
    %1002 = vmatpush1.bf16.msra.mxu0 0
    %1003 = vmatprep.subr.bf16.mxu0 0
    %1004 = vmatpush1.bf16.msra.mxu0 0
    %1005 = vmatprep.subr.bf16.mxu0 0
    %1006 = vmatpush1.bf16.msra.mxu0 0
    %1007 = vmatprep.subr.bf16.mxu0 0
    %1008 = vmatpush1.bf16.msra.mxu0 0
    %1009 = vmatprep.subr.bf16.mxu0 0
    %1010 = vmatpush1.bf16.msra.mxu0 0
    %1011 = vmatprep.subr.bf16.mxu0 0
    %1012 = vmatpush1.bf16.msra.mxu0 0
    %1013 = vmatprep.subr.bf16.mxu0 0
    %1014 = vmatpush1.bf16.msra.mxu0 0
    %1015 = vmatprep.subr.bf16.mxu0 0
    %1016 = vmatpush1.bf16.msra.mxu0 0
    %1017 = vmatprep.subr.bf16.mxu0 0
    %1018 = vmatpush1.bf16.msra.mxu0 0
    %1019 = vmatprep.subr.bf16.mxu0 0
    %1020 = vmatpush1.bf16.msra.mxu0 0
    %1021 = vmatprep.subr.bf16.mxu0 0
    %1022 = vmatpush1.bf16.msra.mxu0 0
    %1023 = vmatprep.subr.bf16.mxu0 0
    %1024 = vmatpush1.bf16.msra.mxu0 0
    %1025 = vmatprep.mubr.bf16.mxu0 0
    %1026 = vmatmul.mubr.bf16.gmra.mrb[0].mxu0 %v987
    %v1027 = vpop.f32.mrb[0].mxu0
    %v1028 = vadd.f32 0.0, %v1027
    %v1029 = vpop.f32.mrb[0].mxu0
    %v1030 = vpop.f32.mrb[0].mxu0
    %v1031 = vpop.f32.mrb[0].mxu0
    %1032 = vdwg.mxu0
    %1034 = vrot.lane.b32.xlu0 %v511, 96
    %v1035 = vpop.permute.xlu0 %1034
    %v1037 = vsel %vm518, %v976, 0
    %v1040 = vsel %vm989, %v1035, 0
    %1042 = vmatprep.subr.bf16.mxu0 0
    %1043 = vmatpush1.bf16.msra.mxu0 %v1040
    %1044 = vmatprep.subr.bf16.mxu0 0
    %1045 = vmatpush1.bf16.msra.mxu0 0
    %1046 = vmatprep.subr.bf16.mxu0 0
    %1047 = vmatpush1.bf16.msra.mxu0 0
    %1048 = vmatprep.subr.bf16.mxu0 0
    %1049 = vmatpush1.bf16.msra.mxu0 0
    %1050 = vmatprep.subr.bf16.mxu0 0
    %1051 = vmatpush1.bf16.msra.mxu0 0
    %1052 = vmatprep.subr.bf16.mxu0 0
    %1053 = vmatpush1.bf16.msra.mxu0 0
    %1054 = vmatprep.subr.bf16.mxu0 0
    %1055 = vmatpush1.bf16.msra.mxu0 0
    %1056 = vmatprep.subr.bf16.mxu0 0
    %1057 = vmatpush1.bf16.msra.mxu0 0
    %1058 = vmatprep.subr.bf16.mxu0 0
    %1059 = vmatpush1.bf16.msra.mxu0 0
    %1060 = vmatprep.subr.bf16.mxu0 0
    %1061 = vmatpush1.bf16.msra.mxu0 0
    %1062 = vmatprep.subr.bf16.mxu0 0
    %1063 = vmatpush1.bf16.msra.mxu0 0
    %1064 = vmatprep.subr.bf16.mxu0 0
    %1065 = vmatpush1.bf16.msra.mxu0 0
    %1066 = vmatprep.subr.bf16.mxu0 0
    %1067 = vmatpush1.bf16.msra.mxu0 0
    %1068 = vmatprep.subr.bf16.mxu0 0
    %1069 = vmatpush1.bf16.msra.mxu0 0
    %1070 = vmatprep.subr.bf16.mxu0 0
    %1071 = vmatpush1.bf16.msra.mxu0 0
    %1072 = vmatprep.subr.bf16.mxu0 0
    %1073 = vmatpush1.bf16.msra.mxu0 0
    %1074 = vmatprep.mubr.bf16.mxu0 0
    %1075 = vmatmul.mubr.bf16.gmra.mrb[0].mxu0 %v1037
    %v1076 = vpop.f32.mrb[0].mxu0
    %v1077 = vadd.f32 0.0, %v1076
    %v1078 = vpop.f32.mrb[0].mxu0
    %v1079 = vpop.f32.mrb[0].mxu0
    %v1080 = vpop.f32.mrb[0].mxu0
    %1081 = vdwg.mxu0
    %1083 = vrot.lane.b32.xlu0 %v512, 96
    %v1084 = vpop.permute.xlu0 %1083
    %v1086 = vsel %vm518, %v977, 0
    %v1089 = vsel %vm989, %v1084, 0
    %1091 = vmatprep.subr.bf16.mxu0 0
    %1092 = vmatpush1.bf16.msra.mxu0 %v1089
    %1093 = vmatprep.subr.bf16.mxu0 0
    %1094 = vmatpush1.bf16.msra.mxu0 0
    %1095 = vmatprep.subr.bf16.mxu0 0
    %1096 = vmatpush1.bf16.msra.mxu0 0
    %1097 = vmatprep.subr.bf16.mxu0 0
    %1098 = vmatpush1.bf16.msra.mxu0 0
    %1099 = vmatprep.subr.bf16.mxu0 0
    %1100 = vmatpush1.bf16.msra.mxu0 0
    %1101 = vmatprep.subr.bf16.mxu0 0
    %1102 = vmatpush1.bf16.msra.mxu0 0
    %1103 = vmatprep.subr.bf16.mxu0 0
    %1104 = vmatpush1.bf16.msra.mxu0 0
    %1105 = vmatprep.subr.bf16.mxu0 0
    %1106 = vmatpush1.bf16.msra.mxu0 0
    %1107 = vmatprep.subr.bf16.mxu0 0
    %1108 = vmatpush1.bf16.msra.mxu0 0
    %1109 = vmatprep.subr.bf16.mxu0 0
    %1110 = vmatpush1.bf16.msra.mxu0 0
    %1111 = vmatprep.subr.bf16.mxu0 0
    %1112 = vmatpush1.bf16.msra.mxu0 0
    %1113 = vmatprep.subr.bf16.mxu0 0
    %1114 = vmatpush1.bf16.msra.mxu0 0
    %1115 = vmatprep.subr.bf16.mxu0 0
    %1116 = vmatpush1.bf16.msra.mxu0 0
    %1117 = vmatprep.subr.bf16.mxu0 0
    %1118 = vmatpush1.bf16.msra.mxu0 0
    %1119 = vmatprep.subr.bf16.mxu0 0
    %1120 = vmatpush1.bf16.msra.mxu0 0
    %1121 = vmatprep.subr.bf16.mxu0 0
    %1122 = vmatpush1.bf16.msra.mxu0 0
    %1123 = vmatprep.mubr.bf16.mxu0 0
    %1124 = vmatmul.mubr.bf16.gmra.mrb[0].mxu0 %v1086
    %v1125 = vpop.f32.mrb[0].mxu0
    %v1126 = vadd.f32 0.0, %v1125
    %v1127 = vpop.f32.mrb[0].mxu0
    %v1128 = vpop.f32.mrb[0].mxu0
    %v1129 = vpop.f32.mrb[0].mxu0
    %1130 = vdwg.mxu0
    %1132 = vrot.lane.b32.xlu0 %v513, 96
    %v1133 = vpop.permute.xlu0 %1132
    %v1135 = vsel %vm518, %v978, 0
    %v1138 = vsel %vm989, %v1133, 0
    %1140 = vmatprep.subr.bf16.mxu0 0
    %1141 = vmatpush1.bf16.msra.mxu0 %v1138
    %1142 = vmatprep.subr.bf16.mxu0 0
    %1143 = vmatpush1.bf16.msra.mxu0 0
    %1144 = vmatprep.subr.bf16.mxu0 0
    %1145 = vmatpush1.bf16.msra.mxu0 0
    %1146 = vmatprep.subr.bf16.mxu0 0
    %1147 = vmatpush1.bf16.msra.mxu0 0
    %1148 = vmatprep.subr.bf16.mxu0 0
    %1149 = vmatpush1.bf16.msra.mxu0 0
    %1150 = vmatprep.subr.bf16.mxu0 0
    %1151 = vmatpush1.bf16.msra.mxu0 0
    %1152 = vmatprep.subr.bf16.mxu0 0
    %1153 = vmatpush1.bf16.msra.mxu0 0
    %1154 = vmatprep.subr.bf16.mxu0 0
    %1155 = vmatpush1.bf16.msra.mxu0 0
    %1156 = vmatprep.subr.bf16.mxu0 0
    %1157 = vmatpush1.bf16.msra.mxu0 0
    %1158 = vmatprep.subr.bf16.mxu0 0
    %1159 = vmatpush1.bf16.msra.mxu0 0
    %1160 = vmatprep.subr.bf16.mxu0 0
    %1161 = vmatpush1.bf16.msra.mxu0 0
    %1162 = vmatprep.subr.bf16.mxu0 0
    %1163 = vmatpush1.bf16.msra.mxu0 0
    %1164 = vmatprep.subr.bf16.mxu0 0
    %1165 = vmatpush1.bf16.msra.mxu0 0
    %1166 = vmatprep.subr.bf16.mxu0 0
    %1167 = vmatpush1.bf16.msra.mxu0 0
    %1168 = vmatprep.subr.bf16.mxu0 0
    %1169 = vmatpush1.bf16.msra.mxu0 0
    %1170 = vmatprep.subr.bf16.mxu0 0
    %1171 = vmatpush1.bf16.msra.mxu0 0
    %1172 = vmatprep.mubr.bf16.mxu0 0
    %1173 = vmatmul.mubr.bf16.gmra.mrb[0].mxu0 %v1135
    %v1174 = vpop.f32.mrb[0].mxu0
    %v1175 = vadd.f32 0.0, %v1174
    %v1176 = vpop.f32.mrb[0].mxu0
    %v1177 = vpop.f32.mrb[0].mxu0
    %v1178 = vpop.f32.mrb[0].mxu0
    %1179 = vdwg.mxu0
    %1181 = vrot.lane.b32.xlu0 %v514, 96
    %v1182 = vpop.permute.xlu0 %1181
    %v1184 = vsel %vm518, %v979, 0
    %v1187 = vsel %vm989, %v1182, 0
    %1189 = vmatprep.subr.bf16.mxu0 0
    %1190 = vmatpush1.bf16.msra.mxu0 %v1187
    %1191 = vmatprep.subr.bf16.mxu0 0
    %1192 = vmatpush1.bf16.msra.mxu0 0
    %1193 = vmatprep.subr.bf16.mxu0 0
    %1194 = vmatpush1.bf16.msra.mxu0 0
    %1195 = vmatprep.subr.bf16.mxu0 0
    %1196 = vmatpush1.bf16.msra.mxu0 0
    %1197 = vmatprep.subr.bf16.mxu0 0
    %1198 = vmatpush1.bf16.msra.mxu0 0
    %1199 = vmatprep.subr.bf16.mxu0 0
    %1200 = vmatpush1.bf16.msra.mxu0 0
    %1201 = vmatprep.subr.bf16.mxu0 0
    %1202 = vmatpush1.bf16.msra.mxu0 0
    %1203 = vmatprep.subr.bf16.mxu0 0
    %1204 = vmatpush1.bf16.msra.mxu0 0
    %1205 = vmatprep.subr.bf16.mxu0 0
    %1206 = vmatpush1.bf16.msra.mxu0 0
    %1207 = vmatprep.subr.bf16.mxu0 0
    %1208 = vmatpush1.bf16.msra.mxu0 0
    %1209 = vmatprep.subr.bf16.mxu0 0
    %1210 = vmatpush1.bf16.msra.mxu0 0
    %1211 = vmatprep.subr.bf16.mxu0 0
    %1212 = vmatpush1.bf16.msra.mxu0 0
    %1213 = vmatprep.subr.bf16.mxu0 0
    %1214 = vmatpush1.bf16.msra.mxu0 0
    %1215 = vmatprep.subr.bf16.mxu0 0
    %1216 = vmatpush1.bf16.msra.mxu0 0
    %1217 = vmatprep.subr.bf16.mxu0 0
    %1218 = vmatpush1.bf16.msra.mxu0 0
    %1219 = vmatprep.subr.bf16.mxu0 0
    %1220 = vmatpush1.bf16.msra.mxu0 0
    %1221 = vmatprep.mubr.bf16.mxu0 0
    %1222 = vmatmul.mubr.bf16.gmra.mrb[0].mxu0 %v1184
    %v1223 = vpop.f32.mrb[0].mxu0
    %v1224 = vadd.f32 0.0, %v1223
    %v1225 = vpop.f32.mrb[0].mxu0
    %v1226 = vpop.f32.mrb[0].mxu0
    %v1227 = vpop.f32.mrb[0].mxu0
    %1228 = vdwg.mxu0
    %1230 = vrot.lane.b32.xlu0 %v515, 96
    %v1231 = vpop.permute.xlu0 %1230
    %v1233 = vsel %vm518, %v980, 0
    %v1236 = vsel %vm989, %v1231, 0
    %1238 = vmatprep.subr.bf16.mxu0 0
    %1239 = vmatpush1.bf16.msra.mxu0 %v1236
    %1240 = vmatprep.subr.bf16.mxu0 0
    %1241 = vmatpush1.bf16.msra.mxu0 0
    %1242 = vmatprep.subr.bf16.mxu0 0
    %1243 = vmatpush1.bf16.msra.mxu0 0
    %1244 = vmatprep.subr.bf16.mxu0 0
    %1245 = vmatpush1.bf16.msra.mxu0 0
    %1246 = vmatprep.subr.bf16.mxu0 0
    %1247 = vmatpush1.bf16.msra.mxu0 0
    %1248 = vmatprep.subr.bf16.mxu0 0
    %1249 = vmatpush1.bf16.msra.mxu0 0
    %1250 = vmatprep.subr.bf16.mxu0 0
    %1251 = vmatpush1.bf16.msra.mxu0 0
    %1252 = vmatprep.subr.bf16.mxu0 0
    %1253 = vmatpush1.bf16.msra.mxu0 0
    %1254 = vmatprep.subr.bf16.mxu0 0
    %1255 = vmatpush1.bf16.msra.mxu0 0
    %1256 = vmatprep.subr.bf16.mxu0 0
    %1257 = vmatpush1.bf16.msra.mxu0 0
    %1258 = vmatprep.subr.bf16.mxu0 0
    %1259 = vmatpush1.bf16.msra.mxu0 0
    %1260 = vmatprep.subr.bf16.mxu0 0
    %1261 = vmatpush1.bf16.msra.mxu0 0
    %1262 = vmatprep.subr.bf16.mxu0 0
    %1263 = vmatpush1.bf16.msra.mxu0 0
    %1264 = vmatprep.subr.bf16.mxu0 0
    %1265 = vmatpush1.bf16.msra.mxu0 0
    %1266 = vmatprep.subr.bf16.mxu0 0
    %1267 = vmatpush1.bf16.msra.mxu0 0
    %1268 = vmatprep.subr.bf16.mxu0 0
    %1269 = vmatpush1.bf16.msra.mxu0 0
    %1270 = vmatprep.mubr.bf16.mxu0 0
    %1271 = vmatmul.mubr.bf16.gmra.mrb[0].mxu0 %v1233
    %v1272 = vpop.f32.mrb[0].mxu0
    %v1273 = vadd.f32 0.0, %v1272
    %v1274 = vpop.f32.mrb[0].mxu0
    %v1275 = vpop.f32.mrb[0].mxu0
    %v1276 = vpop.f32.mrb[0].mxu0
    %1277 = vdwg.mxu0
    %1279 = vrot.lane.b32.xlu0 %v516, 96
    %v1280 = vpop.permute.xlu0 %1279
    %v1282 = vsel %vm518, %v981, 0
    %v1285 = vsel %vm989, %v1280, 0
    %1287 = vmatprep.subr.bf16.mxu0 0
    %1288 = vmatpush1.bf16.msra.mxu0 %v1285
    %1289 = vmatprep.subr.bf16.mxu0 0
    %1290 = vmatpush1.bf16.msra.mxu0 0
    %1291 = vmatprep.subr.bf16.mxu0 0
    %1292 = vmatpush1.bf16.msra.mxu0 0
    %1293 = vmatprep.subr.bf16.mxu0 0
    %1294 = vmatpush1.bf16.msra.mxu0 0
    %1295 = vmatprep.subr.bf16.mxu0 0
    %1296 = vmatpush1.bf16.msra.mxu0 0
    %1297 = vmatprep.subr.bf16.mxu0 0
    %1298 = vmatpush1.bf16.msra.mxu0 0
    %1299 = vmatprep.subr.bf16.mxu0 0
    %1300 = vmatpush1.bf16.msra.mxu0 0
    %1301 = vmatprep.subr.bf16.mxu0 0
    %1302 = vmatpush1.bf16.msra.mxu0 0
    %1303 = vmatprep.subr.bf16.mxu0 0
    %1304 = vmatpush1.bf16.msra.mxu0 0
    %1305 = vmatprep.subr.bf16.mxu0 0
    %1306 = vmatpush1.bf16.msra.mxu0 0
    %1307 = vmatprep.subr.bf16.mxu0 0
    %1308 = vmatpush1.bf16.msra.mxu0 0
    %1309 = vmatprep.subr.bf16.mxu0 0
    %1310 = vmatpush1.bf16.msra.mxu0 0
    %1311 = vmatprep.subr.bf16.mxu0 0
    %1312 = vmatpush1.bf16.msra.mxu0 0
    %1313 = vmatprep.subr.bf16.mxu0 0
    %1314 = vmatpush1.bf16.msra.mxu0 0
    %1315 = vmatprep.subr.bf16.mxu0 0
    %1316 = vmatpush1.bf16.msra.mxu0 0
    %1317 = vmatprep.subr.bf16.mxu0 0
    %1318 = vmatpush1.bf16.msra.mxu0 0
    %1319 = vmatprep.mubr.bf16.mxu0 0
    %1320 = vmatmul.mubr.bf16.gmra.mrb[0].mxu0 %v1282
    %v1321 = vpop.f32.mrb[0].mxu0
    %v1322 = vadd.f32 0.0, %v1321
    %v1323 = vpop.f32.mrb[0].mxu0
    %v1324 = vpop.f32.mrb[0].mxu0
    %v1325 = vpop.f32.mrb[0].mxu0
    %1326 = vdwg.mxu0
    %1328 = vrot.lane.b32.xlu0 %v517, 96
    %v1329 = vpop.permute.xlu0 %1328
    %v1331 = vsel %vm518, %v982, 0
    %v1334 = vsel %vm989, %v1329, 0
    %1336 = vmatprep.subr.bf16.mxu0 0
    %1337 = vmatpush1.bf16.msra.mxu0 %v1334
    %1338 = vmatprep.subr.bf16.mxu0 0
    %1339 = vmatpush1.bf16.msra.mxu0 0
    %1340 = vmatprep.subr.bf16.mxu0 0
    %1341 = vmatpush1.bf16.msra.mxu0 0
    %1342 = vmatprep.subr.bf16.mxu0 0
    %1343 = vmatpush1.bf16.msra.mxu0 0
    %1344 = vmatprep.subr.bf16.mxu0 0
    %1345 = vmatpush1.bf16.msra.mxu0 0
    %1346 = vmatprep.subr.bf16.mxu0 0
    %1347 = vmatpush1.bf16.msra.mxu0 0
    %1348 = vmatprep.subr.bf16.mxu0 0
    %1349 = vmatpush1.bf16.msra.mxu0 0
    %1350 = vmatprep.subr.bf16.mxu0 0
    %1351 = vmatpush1.bf16.msra.mxu0 0
    %1352 = vmatprep.subr.bf16.mxu0 0
    %1353 = vmatpush1.bf16.msra.mxu0 0
    %1354 = vmatprep.subr.bf16.mxu0 0
    %1355 = vmatpush1.bf16.msra.mxu0 0
    %1356 = vmatprep.subr.bf16.mxu0 0
    %1357 = vmatpush1.bf16.msra.mxu0 0
    %1358 = vmatprep.subr.bf16.mxu0 0
    %1359 = vmatpush1.bf16.msra.mxu0 0
    %1360 = vmatprep.subr.bf16.mxu0 0
    %1361 = vmatpush1.bf16.msra.mxu0 0
    %1362 = vmatprep.subr.bf16.mxu0 0
    %1363 = vmatpush1.bf16.msra.mxu0 0
    %1364 = vmatprep.subr.bf16.mxu0 0
    %1365 = vmatpush1.bf16.msra.mxu0 0
    %1366 = vmatprep.subr.bf16.mxu0 0
    %1367 = vmatpush1.bf16.msra.mxu0 0
    %1368 = vmatprep.mubr.bf16.mxu0 0
    %1369 = vmatmul.mubr.bf16.gmra.mrb[0].mxu0 %v1331
    %v1370 = vpop.f32.mrb[0].mxu0
    %v1371 = vadd.f32 0.0, %v1370
    %v1372 = vpop.f32.mrb[0].mxu0
    %v1373 = vpop.f32.mrb[0].mxu0
    %v1374 = vpop.f32.mrb[0].mxu0
    %1375 = vdwg.mxu0
    %1378 = vrot.lane.b32.xlu0 %v1077, 8
    %v1379 = vpop.permute.xlu0 %1378
    %1380 = vrot.lane.b32.xlu0 %v1273, 8
    %v1381 = vpop.permute.xlu0 %1380
    %1386 = vrot.lane.b32.xlu0 %v1126, 16
    %v1387 = vpop.permute.xlu0 %1386
    %1388 = vrot.lane.b32.xlu0 %v1322, 16
    %v1389 = vpop.permute.xlu0 %1388
    %1394 = vrot.lane.b32.xlu0 %v1175, 24
    %v1395 = vpop.permute.xlu0 %1394
    %1396 = vrot.lane.b32.xlu0 %v1371, 24
    %v1397 = vpop.permute.xlu0 %1396
    %v1400 = vsel %vm518, %v1028, %v1379
    %v1401 = vsel %vm518, %v1224, %v1381
    %vm1402 = vcmask 130048
    %v1403 = vsel %vm1402, %v1400, %v1387
    %v1404 = vsel %vm1402, %v1401, %v1389
    %vm1405 = vcmask 195584
    %v1406 = vsel %vm1405, %v1403, %v1395
    %v1407 = vsel %vm1405, %v1404, %v1397
    %v1408 = vpack.c.bf16 %v1407, %v1406
    %v1410 = vlaneseq
    %v1411 = vshrl.u32 %v1410, 7
    %v1412 = vsub.s32 0, %v1411
    %v1413 = vrot.slane %v333, %v1412
    %v1419 = vunpack.c.l.b16 %v329
    %v1420 = vunpack.c.l.b16 %v330
    %v1421 = vunpack.c.l.b16 %v331
    %v1422 = vunpack.c.l.b16 %v332
    %v1423 = vpack.c.b16 %v1420, %v1419
    %v1424 = vpack.c.b16 %v1422, %v1421
    %v1428 = vsel %vm241, %v1408, 0
    %1430 = vmatprep.subr.bf16.mxu0 0
    %1431 = vmatpush1.bf16.msra.mxu0 %v1423
    %1432 = vmatprep.subr.bf16.mxu0 0
    %1433 = vmatpush1.bf16.msra.mxu0 %v1424
    %1434 = vmatprep.subr.bf16.mxu0 0
    %1435 = vmatpush1.bf16.msra.mxu0 0
    %1436 = vmatprep.subr.bf16.mxu0 0
    %1437 = vmatpush1.bf16.msra.mxu0 0
    %1438 = vmatprep.subr.bf16.mxu0 0
    %1439 = vmatpush1.bf16.msra.mxu0 0
    %1440 = vmatprep.subr.bf16.mxu0 0
    %1441 = vmatpush1.bf16.msra.mxu0 0
    %1442 = vmatprep.subr.bf16.mxu0 0
    %1443 = vmatpush1.bf16.msra.mxu0 0
    %1444 = vmatprep.subr.bf16.mxu0 0
    %1445 = vmatpush1.bf16.msra.mxu0 0
    %1446 = vmatprep.subr.bf16.mxu0 0
    %1447 = vmatpush1.bf16.msra.mxu0 0
    %1448 = vmatprep.subr.bf16.mxu0 0
    %1449 = vmatpush1.bf16.msra.mxu0 0
    %1450 = vmatprep.subr.bf16.mxu0 0
    %1451 = vmatpush1.bf16.msra.mxu0 0
    %1452 = vmatprep.subr.bf16.mxu0 0
    %1453 = vmatpush1.bf16.msra.mxu0 0
    %1454 = vmatprep.subr.bf16.mxu0 0
    %1455 = vmatpush1.bf16.msra.mxu0 0
    %1456 = vmatprep.subr.bf16.mxu0 0
    %1457 = vmatpush1.bf16.msra.mxu0 0
    %1458 = vmatprep.subr.bf16.mxu0 0
    %1459 = vmatpush1.bf16.msra.mxu0 0
    %1460 = vmatprep.subr.bf16.mxu0 0
    %1461 = vmatpush1.bf16.msra.mxu0 0
    %1462 = vmatprep.mubr.bf16.mxu0 0
    %1463 = vmatmul.mubr.bf16.gmra.mrb[0].mxu0 %v1428
    %v1464 = vpop.f32.mrb[0].mxu0
    %v1465 = vadd.f32 %v1413, %v1464
    %v1466 = vpop.f32.mrb[0].mxu0
    %v1467 = vpop.f32.mrb[0].mxu0
    %v1468 = vadd.f32 %v1413, %v1467
    %v1469 = vpop.f32.mrb[0].mxu0
    %1470 = vdwg.mxu0
    %v1471 = vadd.f32 %v235, %v1465
    %v1472 = vadd.f32 %v236, %v1468
    %v1473 = vsel %vm241, %v239, 0.0
    %1474 = vadd.xlane.f32.xlu0 %v1473
    %v1475 = vpop.xlane.xlu0 %1474
    %v1476 = vsel %vm241, %v240, 0.0
    %1477 = vadd.xlane.f32.xlu0 %v1476
    %v1478 = vpop.xlane.xlu0 %1477
    %v1479 = vmul.f32 %v1475, %v248
    %v1480 = vmul.f32 %v1478, %v248
    %v1481 = vsub.f32 %v239, %v1479
    %v1482 = vsub.f32 %v240, %v1480
    %v1483 = vmul.f32 %v1481, %v1481
    %v1484 = vmul.f32 %v1482, %v1482
    %v1485 = vsel %vm241, %v1483, 0.0
    %1486 = vadd.xlane.f32.xlu0 %v1485
    %v1487 = vpop.xlane.xlu0 %1486
    %v1488 = vsel %vm241, %v1484, 0.0
    %1489 = vadd.xlane.f32.xlu0 %v1488
    %v1490 = vpop.xlane.xlu0 %1489
    %v1491 = vmul.f32 %v1487, %v248
    %v1492 = vmul.f32 %v1490, %v248
    %v1493 = vadd.f32 %v1491, 1e-05
    %v1494 = vadd.f32 %v1492, 1e-05
    %v1495 = vrsqrt.pop %v1493
    %v1496 = vrsqrt.pop %v1494
    %v1497 = vmul.f32 %v1481, %v1495
    %v1498 = vmul.f32 %v1482, %v1496
    %v1499 = vlaneseq
    %v1500 = vshrl.u32 %v1499, 7
    %v1501 = vsub.s32 3, %v1500
    %v1502 = vrot.slane %v233, %v1501
    %v1503 = vmul.f32 %v1497, %v1502
    %v1504 = vmul.f32 %v1498, %v1502
    %v1505 = vlaneseq
    %v1506 = vshrl.u32 %v1505, 7
    %v1507 = vsub.s32 3, %v1506
    %v1508 = vrot.slane %v234, %v1507
    %v1509 = vadd.f32 %v1503, %v1508
    %v1510 = vadd.f32 %v1504, %v1508
    %v1511 = vsel %vm241, %v1471, 0.0
    %1512 = vadd.xlane.f32.xlu0 %v1511
    %v1513 = vpop.xlane.xlu0 %1512
    %v1514 = vsel %vm241, %v1472, 0.0
    %1515 = vadd.xlane.f32.xlu0 %v1514
    %v1516 = vpop.xlane.xlu0 %1515
    %v1517 = vmul.f32 %v1513, %v248
    %v1518 = vmul.f32 %v1516, %v248
    %v1519 = vsub.f32 %v1471, %v1517
    %v1520 = vsub.f32 %v1472, %v1518
    %v1521 = vmul.f32 %v1519, %v1519
    %v1522 = vmul.f32 %v1520, %v1520
    %v1523 = vsel %vm241, %v1521, 0.0
    %1524 = vadd.xlane.f32.xlu0 %v1523
    %v1525 = vpop.xlane.xlu0 %1524
    %v1526 = vsel %vm241, %v1522, 0.0
    %1527 = vadd.xlane.f32.xlu0 %v1526
    %v1528 = vpop.xlane.xlu0 %1527
    %v1529 = vmul.f32 %v1525, %v248
    %v1530 = vmul.f32 %v1528, %v248
    %v1531 = vadd.f32 %v1529, 1e-05
    %v1532 = vadd.f32 %v1530, 1e-05
    %v1533 = vrsqrt.pop %v1531
    %v1534 = vrsqrt.pop %v1532
    %v1535 = vmul.f32 %v1519, %v1533
    %v1536 = vmul.f32 %v1520, %v1534
    %v1537 = vlaneseq
    %v1538 = vshrl.u32 %v1537, 7
    %v1539 = vsub.s32 2, %v1538
    %v1540 = vrot.slane %v233, %v1539
    %v1541 = vmul.f32 %v1535, %v1540
    %v1542 = vmul.f32 %v1536, %v1540
    %v1543 = vlaneseq
    %v1544 = vshrl.u32 %v1543, 7
    %v1545 = vsub.s32 2, %v1544
    %v1546 = vrot.slane %v234, %v1545
    %v1547 = vadd.f32 %v1541, %v1546
    %v1548 = vadd.f32 %v1542, %v1546
    %v1549 = vld [vmem:[#allocation16] sm:$0xf]
    %v1550 = vld [vmem:[#allocation16 + $0x4] sm:$0xf]
    %v1551 = vld [vmem:[#allocation16 + $0x8] sm:$0xf]
    %v1552 = vld [vmem:[#allocation16 + $0xc] sm:$0xf]
    %v1553 = vld [vmem:[#allocation17] sm:$0x1]
    %v1554 = vld [vmem:[%s14] sm:$0xf]
    %v1555 = vld [vmem:[%s14 + $0x4] sm:$0xf]
    %v1556 = vld [vmem:[%s14 + $0x8] sm:$0xf]
    %v1557 = vld [vmem:[%s14 + $0xc] sm:$0xf]
    %v1558 = vld [vmem:[#allocation19] sm:$0x1]
    %v1559 = vld [vmem:[#allocation20] sm:$0xf]
    %v1560 = vld [vmem:[#allocation20 + $0x4] sm:$0xf]
    %v1561 = vld [vmem:[#allocation20 + $0x8] sm:$0xf]
    %v1562 = vld [vmem:[#allocation20 + $0xc] sm:$0xf]
    %v1563 = vld [vmem:[#allocation22] sm:$0x1]
    %v1564 = vld [vmem:[#allocation2] sm:$0x1]
    %v1565 = vld [vmem:[#allocation2 + $0x1] sm:$0x1]
    %v1566 = vld [vmem:[#allocation2 + $0x2] sm:$0x1]
    %v1567 = vld [vmem:[#allocation2 + $0x3] sm:$0x1]
    %v1568 = vld [vmem:[#allocation2 + $0x4] sm:$0x1]
    %v1569 = vld [vmem:[#allocation2 + $0x5] sm:$0x1]
    %v1570 = vld [vmem:[#allocation2 + $0x6] sm:$0x1]
    %v1571 = vld [vmem:[#allocation2 + $0x7] sm:$0x1]
    %v1572 = vpack.c.bf16 %v1548, %v1547
    %v1574 = vlaneseq
    %v1575 = vshrl.u32 %v1574, 7
    %v1576 = vsub.s32 0, %v1575
    %v1577 = vrot.slane %v1553, %v1576
    %v1583 = vunpack.c.l.b16 %v1549
    %v1584 = vunpack.c.l.b16 %v1550
    %v1585 = vunpack.c.l.b16 %v1551
    %v1586 = vunpack.c.l.b16 %v1552
    %v1587 = vpack.c.b16 %v1584, %v1583
    %v1588 = vpack.c.b16 %v1586, %v1585
    %v1592 = vsel %vm241, %v1572, 0
    %1594 = vmatprep.subr.bf16.mxu0 0
    %1595 = vmatpush1.bf16.msra.mxu0 %v1587
    %1596 = vmatprep.subr.bf16.mxu0 0
    %1597 = vmatpush1.bf16.msra.mxu0 %v1588
    %1598 = vmatprep.subr.bf16.mxu0 0
    %1599 = vmatpush1.bf16.msra.mxu0 0
    %1600 = vmatprep.subr.bf16.mxu0 0
    %1601 = vmatpush1.bf16.msra.mxu0 0
    %1602 = vmatprep.subr.bf16.mxu0 0
    %1603 = vmatpush1.bf16.msra.mxu0 0
    %1604 = vmatprep.subr.bf16.mxu0 0
    %1605 = vmatpush1.bf16.msra.mxu0 0
    %1606 = vmatprep.subr.bf16.mxu0 0
    %1607 = vmatpush1.bf16.msra.mxu0 0
    %1608 = vmatprep.subr.bf16.mxu0 0
    %1609 = vmatpush1.bf16.msra.mxu0 0
    %1610 = vmatprep.subr.bf16.mxu0 0
    %1611 = vmatpush1.bf16.msra.mxu0 0
    %1612 = vmatprep.subr.bf16.mxu0 0
    %1613 = vmatpush1.bf16.msra.mxu0 0
    %1614 = vmatprep.subr.bf16.mxu0 0
    %1615 = vmatpush1.bf16.msra.mxu0 0
    %1616 = vmatprep.subr.bf16.mxu0 0
    %1617 = vmatpush1.bf16.msra.mxu0 0
    %1618 = vmatprep.subr.bf16.mxu0 0
    %1619 = vmatpush1.bf16.msra.mxu0 0
    %1620 = vmatprep.subr.bf16.mxu0 0
    %1621 = vmatpush1.bf16.msra.mxu0 0
    %1622 = vmatprep.subr.bf16.mxu0 0
    %1623 = vmatpush1.bf16.msra.mxu0 0
    %1624 = vmatprep.subr.bf16.mxu0 0
    %1625 = vmatpush1.bf16.msra.mxu0 0
    %1626 = vmatprep.mubr.bf16.mxu0 0
    %1627 = vmatmul.mubr.bf16.gmra.mrb[0].mxu0 %v1592
    %v1628 = vpop.f32.mrb[0].mxu0
    %v1629 = vadd.f32 %v1577, %v1628
    %v1630 = vpop.f32.mrb[0].mxu0
    %v1631 = vpop.f32.mrb[0].mxu0
    %v1632 = vadd.f32 %v1577, %v1631
    %v1633 = vpop.f32.mrb[0].mxu0
    %1634 = vdwg.mxu0
    %v1635 = vpack.c.bf16 %v1510, %v1509
    %v1637 = vlaneseq
    %v1638 = vshrl.u32 %v1637, 7
    %v1639 = vsub.s32 0, %v1638
    %v1640 = vrot.slane %v1558, %v1639
    %v1646 = vunpack.c.l.b16 %v1554
    %v1647 = vunpack.c.l.b16 %v1555
    %v1648 = vunpack.c.l.b16 %v1556
    %v1649 = vunpack.c.l.b16 %v1557
    %v1650 = vpack.c.b16 %v1647, %v1646
    %v1651 = vpack.c.b16 %v1649, %v1648
    %v1655 = vsel %vm241, %v1635, 0
    %1657 = vmatprep.subr.bf16.mxu0 0
    %1658 = vmatpush1.bf16.msra.mxu0 %v1650
    %1659 = vmatprep.subr.bf16.mxu0 0
    %1660 = vmatpush1.bf16.msra.mxu0 %v1651
    %1661 = vmatprep.subr.bf16.mxu0 0
    %1662 = vmatpush1.bf16.msra.mxu0 0
    %1663 = vmatprep.subr.bf16.mxu0 0
    %1664 = vmatpush1.bf16.msra.mxu0 0
    %1665 = vmatprep.subr.bf16.mxu0 0
    %1666 = vmatpush1.bf16.msra.mxu0 0
    %1667 = vmatprep.subr.bf16.mxu0 0
    %1668 = vmatpush1.bf16.msra.mxu0 0
    %1669 = vmatprep.subr.bf16.mxu0 0
    %1670 = vmatpush1.bf16.msra.mxu0 0
    %1671 = vmatprep.subr.bf16.mxu0 0
    %1672 = vmatpush1.bf16.msra.mxu0 0
    %1673 = vmatprep.subr.bf16.mxu0 0
    %1674 = vmatpush1.bf16.msra.mxu0 0
    %1675 = vmatprep.subr.bf16.mxu0 0
    %1676 = vmatpush1.bf16.msra.mxu0 0
    %1677 = vmatprep.subr.bf16.mxu0 0
    %1678 = vmatpush1.bf16.msra.mxu0 0
    %1679 = vmatprep.subr.bf16.mxu0 0
    %1680 = vmatpush1.bf16.msra.mxu0 0
    %1681 = vmatprep.subr.bf16.mxu0 0
    %1682 = vmatpush1.bf16.msra.mxu0 0
    %1683 = vmatprep.subr.bf16.mxu0 0
    %1684 = vmatpush1.bf16.msra.mxu0 0
    %1685 = vmatprep.subr.bf16.mxu0 0
    %1686 = vmatpush1.bf16.msra.mxu0 0
    %1687 = vmatprep.subr.bf16.mxu0 0
    %1688 = vmatpush1.bf16.msra.mxu0 0
    %1689 = vmatprep.mubr.bf16.mxu0 0
    %1690 = vmatmul.mubr.bf16.gmra.mrb[0].mxu0 %v1655
    %v1691 = vpop.f32.mrb[0].mxu0
    %v1692 = vadd.f32 %v1640, %v1691
    %v1693 = vpop.f32.mrb[0].mxu0
    %v1694 = vpop.f32.mrb[0].mxu0
    %v1695 = vadd.f32 %v1640, %v1694
    %v1696 = vpop.f32.mrb[0].mxu0
    %1697 = vdwg.mxu0
    %v1698 = vmul.f32 %v1629, 0.35355338
    %v1699 = vmul.f32 %v1632, 0.35355338
    %1702 = vrot.lane.b32.xlu0 %v1698, 120
    %v1703 = vpop.permute.xlu0 %1702
    %1704 = vrot.lane.b32.xlu0 %v1699, 120
    %v1705 = vpop.permute.xlu0 %1704
    %1708 = vrot.lane.b32.xlu0 %v1698, 112
    %v1709 = vpop.permute.xlu0 %1708
    %1710 = vrot.lane.b32.xlu0 %v1699, 112
    %v1711 = vpop.permute.xlu0 %1710
    %1714 = vrot.lane.b32.xlu0 %v1698, 104
    %v1715 = vpop.permute.xlu0 %1714
    %1716 = vrot.lane.b32.xlu0 %v1699, 104
    %v1717 = vpop.permute.xlu0 %1716
    %v1720 = vpack.c.bf16 %v1698, %v1698
    %v1721 = vpack.c.bf16 %v1703, %v1703
    %v1722 = vpack.c.bf16 %v1709, %v1709
    %v1723 = vpack.c.bf16 %v1715, %v1715
    %v1724 = vpack.c.bf16 %v1699, %v1699
    %v1725 = vpack.c.bf16 %v1705, %v1705
    %v1726 = vpack.c.bf16 %v1711, %v1711
    %v1727 = vpack.c.bf16 %v1717, %v1717
    %1730 = vrot.lane.b32.xlu0 %v1692, 120
    %v1731 = vpop.permute.xlu0 %1730
    %1732 = vrot.lane.b32.xlu0 %v1695, 120
    %v1733 = vpop.permute.xlu0 %1732
    %1736 = vrot.lane.b32.xlu0 %v1692, 112
    %v1737 = vpop.permute.xlu0 %1736
    %1738 = vrot.lane.b32.xlu0 %v1695, 112
    %v1739 = vpop.permute.xlu0 %1738
    %1742 = vrot.lane.b32.xlu0 %v1692, 104
    %v1743 = vpop.permute.xlu0 %1742
    %1744 = vrot.lane.b32.xlu0 %v1695, 104
    %v1745 = vpop.permute.xlu0 %1744
    %v1748 = vpack.c.bf16 %v1692, %v1692
    %v1749 = vpack.c.bf16 %v1731, %v1731
    %v1750 = vpack.c.bf16 %v1737, %v1737
    %v1751 = vpack.c.bf16 %v1743, %v1743
    %v1752 = vpack.c.bf16 %v1695, %v1695
    %v1753 = vpack.c.bf16 %v1733, %v1733
    %v1754 = vpack.c.bf16 %v1739, %v1739
    %v1755 = vpack.c.bf16 %v1745, %v1745
    %v1764 = vlaneseq
    %v1765 = vshrl.u32 %v1764, 7
    %v1766 = vsub.s32 0, %v1765
    %v1767 = vrot.slane %v1564, %v1766
    %v1768 = vlaneseq
    %v1769 = vshrl.u32 %v1768, 7
    %v1770 = vsub.s32 0, %v1769
    %v1771 = vrot.slane %v1565, %v1770
    %v1772 = vlaneseq
    %v1773 = vshrl.u32 %v1772, 7
    %v1774 = vsub.s32 0, %v1773
    %v1775 = vrot.slane %v1566, %v1774
    %v1776 = vlaneseq
    %v1777 = vshrl.u32 %v1776, 7
    %v1778 = vsub.s32 0, %v1777
    %v1779 = vrot.slane %v1567, %v1778
    %v1780 = vlaneseq
    %v1781 = vshrl.u32 %v1780, 7
    %v1782 = vsub.s32 0, %v1781
    %v1783 = vrot.slane %v1568, %v1782
    %v1784 = vlaneseq
    %v1785 = vshrl.u32 %v1784, 7
    %v1786 = vsub.s32 0, %v1785
    %v1787 = vrot.slane %v1569, %v1786
    %v1788 = vlaneseq
    %v1789 = vshrl.u32 %v1788, 7
    %v1790 = vsub.s32 0, %v1789
    %v1791 = vrot.slane %v1570, %v1790
    %v1792 = vlaneseq
    %v1793 = vshrl.u32 %v1792, 7
    %v1794 = vsub.s32 0, %v1793
    %v1795 = vrot.slane %v1571, %v1794
    %v1805 = vsel %vm518, %v1720, 0
    %v1808 = vsel %vm518, %v1748, 0
    %1810 = vmatprep.subr.bf16.mxu0 0
    %1811 = vmatpush1.bf16.xpose.msra.mxu0 %v1808
    %1812 = vmatprep.subr.bf16.mxu0 0
    %1813 = vmatpush1.bf16.xpose.msra.mxu0 0
    %1814 = vmatprep.subr.bf16.mxu0 0
    %1815 = vmatpush1.bf16.xpose.msra.mxu0 0
    %1816 = vmatprep.subr.bf16.mxu0 0
    %1817 = vmatpush1.bf16.xpose.msra.mxu0 0
    %1818 = vmatprep.subr.bf16.mxu0 0
    %1819 = vmatpush1.bf16.xpose.msra.mxu0 0
    %1820 = vmatprep.subr.bf16.mxu0 0
    %1821 = vmatpush1.bf16.xpose.msra.mxu0 0
    %1822 = vmatprep.subr.bf16.mxu0 0
    %1823 = vmatpush1.bf16.xpose.msra.mxu0 0
    %1824 = vmatprep.subr.bf16.mxu0 0
    %1825 = vmatpush1.bf16.xpose.msra.mxu0 0
    %1826 = vmatprep.subr.bf16.mxu0 0
    %1827 = vmatpush1.bf16.xpose.msra.mxu0 0
    %1828 = vmatprep.subr.bf16.mxu0 0
    %1829 = vmatpush1.bf16.xpose.msra.mxu0 0
    %1830 = vmatprep.subr.bf16.mxu0 0
    %1831 = vmatpush1.bf16.xpose.msra.mxu0 0
    %1832 = vmatprep.subr.bf16.mxu0 0
    %1833 = vmatpush1.bf16.xpose.msra.mxu0 0
    %1834 = vmatprep.subr.bf16.mxu0 0
    %1835 = vmatpush1.bf16.xpose.msra.mxu0 0
    %1836 = vmatprep.subr.bf16.mxu0 0
    %1837 = vmatpush1.bf16.xpose.msra.mxu0 0
    %1838 = vmatprep.subr.bf16.mxu0 0
    %1839 = vmatpush1.bf16.xpose.msra.mxu0 0
    %1840 = vmatprep.subr.bf16.mxu0 0
    %1841 = vmatpush1.bf16.xpose.msra.mxu0 0
    %1842 = vmatprep.mubr.bf16.mxu0 0
    %1843 = vmatmul.mubr.bf16.gmra.mrb[0].mxu0 %v1805
    %v1844 = vpop.f32.mrb[0].mxu0
    %v1845 = vadd.f32 %v1767, %v1844
    %v1846 = vpop.f32.mrb[0].mxu0
    %v1847 = vpop.f32.mrb[0].mxu0
    %v1848 = vpop.f32.mrb[0].mxu0
    %1849 = vdwg.mxu0
    %v1851 = vsel %vm518, %v1721, 0
    %v1854 = vsel %vm518, %v1749, 0
    %1856 = vmatprep.subr.bf16.mxu0 0
    %1857 = vmatpush1.bf16.xpose.msra.mxu0 %v1854
    %1858 = vmatprep.subr.bf16.mxu0 0
    %1859 = vmatpush1.bf16.xpose.msra.mxu0 0
    %1860 = vmatprep.subr.bf16.mxu0 0
    %1861 = vmatpush1.bf16.xpose.msra.mxu0 0
    %1862 = vmatprep.subr.bf16.mxu0 0
    %1863 = vmatpush1.bf16.xpose.msra.mxu0 0
    %1864 = vmatprep.subr.bf16.mxu0 0
    %1865 = vmatpush1.bf16.xpose.msra.mxu0 0
    %1866 = vmatprep.subr.bf16.mxu0 0
    %1867 = vmatpush1.bf16.xpose.msra.mxu0 0
    %1868 = vmatprep.subr.bf16.mxu0 0
    %1869 = vmatpush1.bf16.xpose.msra.mxu0 0
    %1870 = vmatprep.subr.bf16.mxu0 0
    %1871 = vmatpush1.bf16.xpose.msra.mxu0 0
    %1872 = vmatprep.subr.bf16.mxu0 0
    %1873 = vmatpush1.bf16.xpose.msra.mxu0 0
    %1874 = vmatprep.subr.bf16.mxu0 0
    %1875 = vmatpush1.bf16.xpose.msra.mxu0 0
    %1876 = vmatprep.subr.bf16.mxu0 0
    %1877 = vmatpush1.bf16.xpose.msra.mxu0 0
    %1878 = vmatprep.subr.bf16.mxu0 0
    %1879 = vmatpush1.bf16.xpose.msra.mxu0 0
    %1880 = vmatprep.subr.bf16.mxu0 0
    %1881 = vmatpush1.bf16.xpose.msra.mxu0 0
    %1882 = vmatprep.subr.bf16.mxu0 0
    %1883 = vmatpush1.bf16.xpose.msra.mxu0 0
    %1884 = vmatprep.subr.bf16.mxu0 0
    %1885 = vmatpush1.bf16.xpose.msra.mxu0 0
    %1886 = vmatprep.subr.bf16.mxu0 0
    %1887 = vmatpush1.bf16.xpose.msra.mxu0 0
    %1888 = vmatprep.mubr.bf16.mxu0 0
    %1889 = vmatmul.mubr.bf16.gmra.mrb[0].mxu0 %v1851
    %v1890 = vpop.f32.mrb[0].mxu0
    %v1891 = vadd.f32 %v1771, %v1890
    %v1892 = vpop.f32.mrb[0].mxu0
    %v1893 = vpop.f32.mrb[0].mxu0
    %v1894 = vpop.f32.mrb[0].mxu0
    %1895 = vdwg.mxu0
    %v1897 = vsel %vm518, %v1722, 0
    %v1900 = vsel %vm518, %v1750, 0
    %1902 = vmatprep.subr.bf16.mxu0 0
    %1903 = vmatpush1.bf16.xpose.msra.mxu0 %v1900
    %1904 = vmatprep.subr.bf16.mxu0 0
    %1905 = vmatpush1.bf16.xpose.msra.mxu0 0
    %1906 = vmatprep.subr.bf16.mxu0 0
    %1907 = vmatpush1.bf16.xpose.msra.mxu0 0
    %1908 = vmatprep.subr.bf16.mxu0 0
    %1909 = vmatpush1.bf16.xpose.msra.mxu0 0
    %1910 = vmatprep.subr.bf16.mxu0 0
    %1911 = vmatpush1.bf16.xpose.msra.mxu0 0
    %1912 = vmatprep.subr.bf16.mxu0 0
    %1913 = vmatpush1.bf16.xpose.msra.mxu0 0
    %1914 = vmatprep.subr.bf16.mxu0 0
    %1915 = vmatpush1.bf16.xpose.msra.mxu0 0
    %1916 = vmatprep.subr.bf16.mxu0 0
    %1917 = vmatpush1.bf16.xpose.msra.mxu0 0
    %1918 = vmatprep.subr.bf16.mxu0 0
    %1919 = vmatpush1.bf16.xpose.msra.mxu0 0
    %1920 = vmatprep.subr.bf16.mxu0 0
    %1921 = vmatpush1.bf16.xpose.msra.mxu0 0
    %1922 = vmatprep.subr.bf16.mxu0 0
    %1923 = vmatpush1.bf16.xpose.msra.mxu0 0
    %1924 = vmatprep.subr.bf16.mxu0 0
    %1925 = vmatpush1.bf16.xpose.msra.mxu0 0
    %1926 = vmatprep.subr.bf16.mxu0 0
    %1927 = vmatpush1.bf16.xpose.msra.mxu0 0
    %1928 = vmatprep.subr.bf16.mxu0 0
    %1929 = vmatpush1.bf16.xpose.msra.mxu0 0
    %1930 = vmatprep.subr.bf16.mxu0 0
    %1931 = vmatpush1.bf16.xpose.msra.mxu0 0
    %1932 = vmatprep.subr.bf16.mxu0 0
    %1933 = vmatpush1.bf16.xpose.msra.mxu0 0
    %1934 = vmatprep.mubr.bf16.mxu0 0
    %1935 = vmatmul.mubr.bf16.gmra.mrb[0].mxu0 %v1897
    %v1936 = vpop.f32.mrb[0].mxu0
    %v1937 = vadd.f32 %v1775, %v1936
    %v1938 = vpop.f32.mrb[0].mxu0
    %v1939 = vpop.f32.mrb[0].mxu0
    %v1940 = vpop.f32.mrb[0].mxu0
    %1941 = vdwg.mxu0
    %v1943 = vsel %vm518, %v1723, 0
    %v1946 = vsel %vm518, %v1751, 0
    %1948 = vmatprep.subr.bf16.mxu0 0
    %1949 = vmatpush1.bf16.xpose.msra.mxu0 %v1946
    %1950 = vmatprep.subr.bf16.mxu0 0
    %1951 = vmatpush1.bf16.xpose.msra.mxu0 0
    %1952 = vmatprep.subr.bf16.mxu0 0
    %1953 = vmatpush1.bf16.xpose.msra.mxu0 0
    %1954 = vmatprep.subr.bf16.mxu0 0
    %1955 = vmatpush1.bf16.xpose.msra.mxu0 0
    %1956 = vmatprep.subr.bf16.mxu0 0
    %1957 = vmatpush1.bf16.xpose.msra.mxu0 0
    %1958 = vmatprep.subr.bf16.mxu0 0
    %1959 = vmatpush1.bf16.xpose.msra.mxu0 0
    %1960 = vmatprep.subr.bf16.mxu0 0
    %1961 = vmatpush1.bf16.xpose.msra.mxu0 0
    %1962 = vmatprep.subr.bf16.mxu0 0
    %1963 = vmatpush1.bf16.xpose.msra.mxu0 0
    %1964 = vmatprep.subr.bf16.mxu0 0
    %1965 = vmatpush1.bf16.xpose.msra.mxu0 0
    %1966 = vmatprep.subr.bf16.mxu0 0
    %1967 = vmatpush1.bf16.xpose.msra.mxu0 0
    %1968 = vmatprep.subr.bf16.mxu0 0
    %1969 = vmatpush1.bf16.xpose.msra.mxu0 0
    %1970 = vmatprep.subr.bf16.mxu0 0
    %1971 = vmatpush1.bf16.xpose.msra.mxu0 0
    %1972 = vmatprep.subr.bf16.mxu0 0
    %1973 = vmatpush1.bf16.xpose.msra.mxu0 0
    %1974 = vmatprep.subr.bf16.mxu0 0
    %1975 = vmatpush1.bf16.xpose.msra.mxu0 0
    %1976 = vmatprep.subr.bf16.mxu0 0
    %1977 = vmatpush1.bf16.xpose.msra.mxu0 0
    %1978 = vmatprep.subr.bf16.mxu0 0
    %1979 = vmatpush1.bf16.xpose.msra.mxu0 0
    %1980 = vmatprep.mubr.bf16.mxu0 0
    %1981 = vmatmul.mubr.bf16.gmra.mrb[0].mxu0 %v1943
    %v1982 = vpop.f32.mrb[0].mxu0
    %v1983 = vadd.f32 %v1779, %v1982
    %v1984 = vpop.f32.mrb[0].mxu0
    %v1985 = vpop.f32.mrb[0].mxu0
    %v1986 = vpop.f32.mrb[0].mxu0
    %1987 = vdwg.mxu0
    %v1989 = vsel %vm518, %v1724, 0
    %v1992 = vsel %vm518, %v1752, 0
    %1994 = vmatprep.subr.bf16.mxu0 0
    %1995 = vmatpush1.bf16.xpose.msra.mxu0 %v1992
    %1996 = vmatprep.subr.bf16.mxu0 0
    %1997 = vmatpush1.bf16.xpose.msra.mxu0 0
    %1998 = vmatprep.subr.bf16.mxu0 0
    %1999 = vmatpush1.bf16.xpose.msra.mxu0 0
    %2000 = vmatprep.subr.bf16.mxu0 0
    %2001 = vmatpush1.bf16.xpose.msra.mxu0 0
    %2002 = vmatprep.subr.bf16.mxu0 0
    %2003 = vmatpush1.bf16.xpose.msra.mxu0 0
    %2004 = vmatprep.subr.bf16.mxu0 0
    %2005 = vmatpush1.bf16.xpose.msra.mxu0 0
    %2006 = vmatprep.subr.bf16.mxu0 0
    %2007 = vmatpush1.bf16.xpose.msra.mxu0 0
    %2008 = vmatprep.subr.bf16.mxu0 0
    %2009 = vmatpush1.bf16.xpose.msra.mxu0 0
    %2010 = vmatprep.subr.bf16.mxu0 0
    %2011 = vmatpush1.bf16.xpose.msra.mxu0 0
    %2012 = vmatprep.subr.bf16.mxu0 0
    %2013 = vmatpush1.bf16.xpose.msra.mxu0 0
    %2014 = vmatprep.subr.bf16.mxu0 0
    %2015 = vmatpush1.bf16.xpose.msra.mxu0 0
    %2016 = vmatprep.subr.bf16.mxu0 0
    %2017 = vmatpush1.bf16.xpose.msra.mxu0 0
    %2018 = vmatprep.subr.bf16.mxu0 0
    %2019 = vmatpush1.bf16.xpose.msra.mxu0 0
    %2020 = vmatprep.subr.bf16.mxu0 0
    %2021 = vmatpush1.bf16.xpose.msra.mxu0 0
    %2022 = vmatprep.subr.bf16.mxu0 0
    %2023 = vmatpush1.bf16.xpose.msra.mxu0 0
    %2024 = vmatprep.subr.bf16.mxu0 0
    %2025 = vmatpush1.bf16.xpose.msra.mxu0 0
    %2026 = vmatprep.mubr.bf16.mxu0 0
    %2027 = vmatmul.mubr.bf16.gmra.mrb[0].mxu0 %v1989
    %v2028 = vpop.f32.mrb[0].mxu0
    %v2029 = vadd.f32 %v1783, %v2028
    %v2030 = vpop.f32.mrb[0].mxu0
    %v2031 = vpop.f32.mrb[0].mxu0
    %v2032 = vpop.f32.mrb[0].mxu0
    %2033 = vdwg.mxu0
    %v2035 = vsel %vm518, %v1725, 0
    %v2038 = vsel %vm518, %v1753, 0
    %2040 = vmatprep.subr.bf16.mxu0 0
    %2041 = vmatpush1.bf16.xpose.msra.mxu0 %v2038
    %2042 = vmatprep.subr.bf16.mxu0 0
    %2043 = vmatpush1.bf16.xpose.msra.mxu0 0
    %2044 = vmatprep.subr.bf16.mxu0 0
    %2045 = vmatpush1.bf16.xpose.msra.mxu0 0
    %2046 = vmatprep.subr.bf16.mxu0 0
    %2047 = vmatpush1.bf16.xpose.msra.mxu0 0
    %2048 = vmatprep.subr.bf16.mxu0 0
    %2049 = vmatpush1.bf16.xpose.msra.mxu0 0
    %2050 = vmatprep.subr.bf16.mxu0 0
    %2051 = vmatpush1.bf16.xpose.msra.mxu0 0
    %2052 = vmatprep.subr.bf16.mxu0 0
    %2053 = vmatpush1.bf16.xpose.msra.mxu0 0
    %2054 = vmatprep.subr.bf16.mxu0 0
    %2055 = vmatpush1.bf16.xpose.msra.mxu0 0
    %2056 = vmatprep.subr.bf16.mxu0 0
    %2057 = vmatpush1.bf16.xpose.msra.mxu0 0
    %2058 = vmatprep.subr.bf16.mxu0 0
    %2059 = vmatpush1.bf16.xpose.msra.mxu0 0
    %2060 = vmatprep.subr.bf16.mxu0 0
    %2061 = vmatpush1.bf16.xpose.msra.mxu0 0
    %2062 = vmatprep.subr.bf16.mxu0 0
    %2063 = vmatpush1.bf16.xpose.msra.mxu0 0
    %2064 = vmatprep.subr.bf16.mxu0 0
    %2065 = vmatpush1.bf16.xpose.msra.mxu0 0
    %2066 = vmatprep.subr.bf16.mxu0 0
    %2067 = vmatpush1.bf16.xpose.msra.mxu0 0
    %2068 = vmatprep.subr.bf16.mxu0 0
    %2069 = vmatpush1.bf16.xpose.msra.mxu0 0
    %2070 = vmatprep.subr.bf16.mxu0 0
    %2071 = vmatpush1.bf16.xpose.msra.mxu0 0
    %2072 = vmatprep.mubr.bf16.mxu0 0
    %2073 = vmatmul.mubr.bf16.gmra.mrb[0].mxu0 %v2035
    %v2074 = vpop.f32.mrb[0].mxu0
    %v2075 = vadd.f32 %v1787, %v2074
    %v2076 = vpop.f32.mrb[0].mxu0
    %v2077 = vpop.f32.mrb[0].mxu0
    %v2078 = vpop.f32.mrb[0].mxu0
    %2079 = vdwg.mxu0
    %v2081 = vsel %vm518, %v1726, 0
    %v2084 = vsel %vm518, %v1754, 0
    %2086 = vmatprep.subr.bf16.mxu0 0
    %2087 = vmatpush1.bf16.xpose.msra.mxu0 %v2084
    %2088 = vmatprep.subr.bf16.mxu0 0
    %2089 = vmatpush1.bf16.xpose.msra.mxu0 0
    %2090 = vmatprep.subr.bf16.mxu0 0
    %2091 = vmatpush1.bf16.xpose.msra.mxu0 0
    %2092 = vmatprep.subr.bf16.mxu0 0
    %2093 = vmatpush1.bf16.xpose.msra.mxu0 0
    %2094 = vmatprep.subr.bf16.mxu0 0
    %2095 = vmatpush1.bf16.xpose.msra.mxu0 0
    %2096 = vmatprep.subr.bf16.mxu0 0
    %2097 = vmatpush1.bf16.xpose.msra.mxu0 0
    %2098 = vmatprep.subr.bf16.mxu0 0
    %2099 = vmatpush1.bf16.xpose.msra.mxu0 0
    %2100 = vmatprep.subr.bf16.mxu0 0
    %2101 = vmatpush1.bf16.xpose.msra.mxu0 0
    %2102 = vmatprep.subr.bf16.mxu0 0
    %2103 = vmatpush1.bf16.xpose.msra.mxu0 0
    %2104 = vmatprep.subr.bf16.mxu0 0
    %2105 = vmatpush1.bf16.xpose.msra.mxu0 0
    %2106 = vmatprep.subr.bf16.mxu0 0
    %2107 = vmatpush1.bf16.xpose.msra.mxu0 0
    %2108 = vmatprep.subr.bf16.mxu0 0
    %2109 = vmatpush1.bf16.xpose.msra.mxu0 0
    %2110 = vmatprep.subr.bf16.mxu0 0
    %2111 = vmatpush1.bf16.xpose.msra.mxu0 0
    %2112 = vmatprep.subr.bf16.mxu0 0
    %2113 = vmatpush1.bf16.xpose.msra.mxu0 0
    %2114 = vmatprep.subr.bf16.mxu0 0
    %2115 = vmatpush1.bf16.xpose.msra.mxu0 0
    %2116 = vmatprep.subr.bf16.mxu0 0
    %2117 = vmatpush1.bf16.xpose.msra.mxu0 0
    %2118 = vmatprep.mubr.bf16.mxu0 0
    %2119 = vmatmul.mubr.bf16.gmra.mrb[0].mxu0 %v2081
    %v2120 = vpop.f32.mrb[0].mxu0
    %v2121 = vadd.f32 %v1791, %v2120
    %v2122 = vpop.f32.mrb[0].mxu0
    %v2123 = vpop.f32.mrb[0].mxu0
    %v2124 = vpop.f32.mrb[0].mxu0
    %2125 = vdwg.mxu0
    %v2127 = vsel %vm518, %v1727, 0
    %v2130 = vsel %vm518, %v1755, 0
    %2132 = vmatprep.subr.bf16.mxu0 0
    %2133 = vmatpush1.bf16.xpose.msra.mxu0 %v2130
    %2134 = vmatprep.subr.bf16.mxu0 0
    %2135 = vmatpush1.bf16.xpose.msra.mxu0 0
    %2136 = vmatprep.subr.bf16.mxu0 0
    %2137 = vmatpush1.bf16.xpose.msra.mxu0 0
    %2138 = vmatprep.subr.bf16.mxu0 0
    %2139 = vmatpush1.bf16.xpose.msra.mxu0 0
    %2140 = vmatprep.subr.bf16.mxu0 0
    %2141 = vmatpush1.bf16.xpose.msra.mxu0 0
    %2142 = vmatprep.subr.bf16.mxu0 0
    %2143 = vmatpush1.bf16.xpose.msra.mxu0 0
    %2144 = vmatprep.subr.bf16.mxu0 0
    %2145 = vmatpush1.bf16.xpose.msra.mxu0 0
    %2146 = vmatprep.subr.bf16.mxu0 0
    %2147 = vmatpush1.bf16.xpose.msra.mxu0 0
    %2148 = vmatprep.subr.bf16.mxu0 0
    %2149 = vmatpush1.bf16.xpose.msra.mxu0 0
    %2150 = vmatprep.subr.bf16.mxu0 0
    %2151 = vmatpush1.bf16.xpose.msra.mxu0 0
    %2152 = vmatprep.subr.bf16.mxu0 0
    %2153 = vmatpush1.bf16.xpose.msra.mxu0 0
    %2154 = vmatprep.subr.bf16.mxu0 0
    %2155 = vmatpush1.bf16.xpose.msra.mxu0 0
    %2156 = vmatprep.subr.bf16.mxu0 0
    %2157 = vmatpush1.bf16.xpose.msra.mxu0 0
    %2158 = vmatprep.subr.bf16.mxu0 0
    %2159 = vmatpush1.bf16.xpose.msra.mxu0 0
    %2160 = vmatprep.subr.bf16.mxu0 0
    %2161 = vmatpush1.bf16.xpose.msra.mxu0 0
    %2162 = vmatprep.subr.bf16.mxu0 0
    %2163 = vmatpush1.bf16.xpose.msra.mxu0 0
    %2164 = vmatprep.mubr.bf16.mxu0 0
    %2165 = vmatmul.mubr.bf16.gmra.mrb[0].mxu0 %v2127
    %v2166 = vpop.f32.mrb[0].mxu0
    %v2167 = vadd.f32 %v1795, %v2166
    %v2168 = vpop.f32.mrb[0].mxu0
    %v2169 = vpop.f32.mrb[0].mxu0
    %v2170 = vpop.f32.mrb[0].mxu0
    %2171 = vdwg.mxu0
    %v2172 = vsel %vm518, %v1845, -inf
    %2173 = vmax.xlane.f32.xlu0 %v2172
    %v2174 = vpop.xlane.xlu0 %2173
    %v2175 = vsel %vm518, %v1891, -inf
    %2176 = vmax.xlane.f32.xlu0 %v2175
    %v2177 = vpop.xlane.xlu0 %2176
    %v2178 = vsel %vm518, %v1937, -inf
    %2179 = vmax.xlane.f32.xlu0 %v2178
    %v2180 = vpop.xlane.xlu0 %2179
    %v2181 = vsel %vm518, %v1983, -inf
    %2182 = vmax.xlane.f32.xlu0 %v2181
    %v2183 = vpop.xlane.xlu0 %2182
    %v2184 = vsel %vm518, %v2029, -inf
    %2185 = vmax.xlane.f32.xlu0 %v2184
    %v2186 = vpop.xlane.xlu0 %2185
    %v2187 = vsel %vm518, %v2075, -inf
    %2188 = vmax.xlane.f32.xlu0 %v2187
    %v2189 = vpop.xlane.xlu0 %2188
    %v2190 = vsel %vm518, %v2121, -inf
    %2191 = vmax.xlane.f32.xlu0 %v2190
    %v2192 = vpop.xlane.xlu0 %2191
    %v2193 = vsel %vm518, %v2167, -inf
    %2194 = vmax.xlane.f32.xlu0 %v2193
    %v2195 = vpop.xlane.xlu0 %2194
    %v2196 = vsub.f32 %v1845, %v2174
    %v2197 = vsub.f32 %v1891, %v2177
    %v2198 = vsub.f32 %v1937, %v2180
    %v2199 = vsub.f32 %v1983, %v2183
    %v2200 = vsub.f32 %v2029, %v2186
    %v2201 = vsub.f32 %v2075, %v2189
    %v2202 = vsub.f32 %v2121, %v2192
    %v2203 = vsub.f32 %v2167, %v2195
    %v2204 = vmul.f32 %v2196, 1.442695
    %v2205 = vpow.pop %v2204
    %v2206 = vmul.f32 %v2197, 1.442695
    %v2207 = vpow.pop %v2206
    %v2208 = vmul.f32 %v2198, 1.442695
    %v2209 = vpow.pop %v2208
    %v2210 = vmul.f32 %v2199, 1.442695
    %v2211 = vpow.pop %v2210
    %v2212 = vmul.f32 %v2200, 1.442695
    %v2213 = vpow.pop %v2212
    %v2214 = vmul.f32 %v2201, 1.442695
    %v2215 = vpow.pop %v2214
    %v2216 = vmul.f32 %v2202, 1.442695
    %v2217 = vpow.pop %v2216
    %v2218 = vmul.f32 %v2203, 1.442695
    %v2219 = vpow.pop %v2218
    %v2220 = vsel %vm518, %v2205, 0.0
    %2221 = vadd.xlane.f32.xlu0 %v2220
    %v2222 = vpop.xlane.xlu0 %2221
    %v2223 = vsel %vm518, %v2207, 0.0
    %2224 = vadd.xlane.f32.xlu0 %v2223
    %v2225 = vpop.xlane.xlu0 %2224
    %v2226 = vsel %vm518, %v2209, 0.0
    %2227 = vadd.xlane.f32.xlu0 %v2226
    %v2228 = vpop.xlane.xlu0 %2227
    %v2229 = vsel %vm518, %v2211, 0.0
    %2230 = vadd.xlane.f32.xlu0 %v2229
    %v2231 = vpop.xlane.xlu0 %2230
    %v2232 = vsel %vm518, %v2213, 0.0
    %2233 = vadd.xlane.f32.xlu0 %v2232
    %v2234 = vpop.xlane.xlu0 %2233
    %v2235 = vsel %vm518, %v2215, 0.0
    %2236 = vadd.xlane.f32.xlu0 %v2235
    %v2237 = vpop.xlane.xlu0 %2236
    %v2238 = vsel %vm518, %v2217, 0.0
    %2239 = vadd.xlane.f32.xlu0 %v2238
    %v2240 = vpop.xlane.xlu0 %2239
    %v2241 = vsel %vm518, %v2219, 0.0
    %2242 = vadd.xlane.f32.xlu0 %v2241
    %v2243 = vpop.xlane.xlu0 %2242
    %v2244 = vrcp.pop %v2222
    %v2245 = vrcp.pop %v2225
    %v2246 = vrcp.pop %v2228
    %v2247 = vrcp.pop %v2231
    %v2248 = vrcp.pop %v2234
    %v2249 = vrcp.pop %v2237
    %v2250 = vrcp.pop %v2240
    %v2251 = vrcp.pop %v2243
    %v2252 = vmul.f32 %v2205, %v2244
    %v2253 = vmul.f32 %v2207, %v2245
    %v2254 = vmul.f32 %v2209, %v2246
    %v2255 = vmul.f32 %v2211, %v2247
    %v2256 = vmul.f32 %v2213, %v2248
    %v2257 = vmul.f32 %v2215, %v2249
    %v2258 = vmul.f32 %v2217, %v2250
    %v2259 = vmul.f32 %v2219, %v2251
    %v2260 = vpack.c.bf16 %v2252, %v2252
    %v2261 = vpack.c.bf16 %v2253, %v2253
    %v2262 = vpack.c.bf16 %v2254, %v2254
    %v2263 = vpack.c.bf16 %v2255, %v2255
    %v2264 = vpack.c.bf16 %v2256, %v2256
    %v2265 = vpack.c.bf16 %v2257, %v2257
    %v2266 = vpack.c.bf16 %v2258, %v2258
    %v2267 = vpack.c.bf16 %v2259, %v2259
    %2269 = vrot.lane.b32.xlu0 %v1748, 96
    %v2270 = vpop.permute.xlu0 %2269
    %v2272 = vsel %vm518, %v2260, 0
    %v2275 = vsel %vm989, %v2270, 0
    %2277 = vmatprep.subr.bf16.mxu0 0
    %2278 = vmatpush1.bf16.msra.mxu0 %v2275
    %2279 = vmatprep.subr.bf16.mxu0 0
    %2280 = vmatpush1.bf16.msra.mxu0 0
    %2281 = vmatprep.subr.bf16.mxu0 0
    %2282 = vmatpush1.bf16.msra.mxu0 0
    %2283 = vmatprep.subr.bf16.mxu0 0
    %2284 = vmatpush1.bf16.msra.mxu0 0
    %2285 = vmatprep.subr.bf16.mxu0 0
    %2286 = vmatpush1.bf16.msra.mxu0 0
    %2287 = vmatprep.subr.bf16.mxu0 0
    %2288 = vmatpush1.bf16.msra.mxu0 0
    %2289 = vmatprep.subr.bf16.mxu0 0
    %2290 = vmatpush1.bf16.msra.mxu0 0
    %2291 = vmatprep.subr.bf16.mxu0 0
    %2292 = vmatpush1.bf16.msra.mxu0 0
    %2293 = vmatprep.subr.bf16.mxu0 0
    %2294 = vmatpush1.bf16.msra.mxu0 0
    %2295 = vmatprep.subr.bf16.mxu0 0
    %2296 = vmatpush1.bf16.msra.mxu0 0
    %2297 = vmatprep.subr.bf16.mxu0 0
    %2298 = vmatpush1.bf16.msra.mxu0 0
    %2299 = vmatprep.subr.bf16.mxu0 0
    %2300 = vmatpush1.bf16.msra.mxu0 0
    %2301 = vmatprep.subr.bf16.mxu0 0
    %2302 = vmatpush1.bf16.msra.mxu0 0
    %2303 = vmatprep.subr.bf16.mxu0 0
    %2304 = vmatpush1.bf16.msra.mxu0 0
    %2305 = vmatprep.subr.bf16.mxu0 0
    %2306 = vmatpush1.bf16.msra.mxu0 0
    %2307 = vmatprep.subr.bf16.mxu0 0
    %2308 = vmatpush1.bf16.msra.mxu0 0
    %2309 = vmatprep.mubr.bf16.mxu0 0
    %2310 = vmatmul.mubr.bf16.gmra.mrb[0].mxu0 %v2272
    %v2311 = vpop.f32.mrb[0].mxu0
    %v2312 = vadd.f32 0.0, %v2311
    %v2313 = vpop.f32.mrb[0].mxu0
    %v2314 = vpop.f32.mrb[0].mxu0
    %v2315 = vpop.f32.mrb[0].mxu0
    %2316 = vdwg.mxu0
    %2318 = vrot.lane.b32.xlu0 %v1749, 96
    %v2319 = vpop.permute.xlu0 %2318
    %v2321 = vsel %vm518, %v2261, 0
    %v2324 = vsel %vm989, %v2319, 0
    %2326 = vmatprep.subr.bf16.mxu0 0
    %2327 = vmatpush1.bf16.msra.mxu0 %v2324
    %2328 = vmatprep.subr.bf16.mxu0 0
    %2329 = vmatpush1.bf16.msra.mxu0 0
    %2330 = vmatprep.subr.bf16.mxu0 0
    %2331 = vmatpush1.bf16.msra.mxu0 0
    %2332 = vmatprep.subr.bf16.mxu0 0
    %2333 = vmatpush1.bf16.msra.mxu0 0
    %2334 = vmatprep.subr.bf16.mxu0 0
    %2335 = vmatpush1.bf16.msra.mxu0 0
    %2336 = vmatprep.subr.bf16.mxu0 0
    %2337 = vmatpush1.bf16.msra.mxu0 0
    %2338 = vmatprep.subr.bf16.mxu0 0
    %2339 = vmatpush1.bf16.msra.mxu0 0
    %2340 = vmatprep.subr.bf16.mxu0 0
    %2341 = vmatpush1.bf16.msra.mxu0 0
    %2342 = vmatprep.subr.bf16.mxu0 0
    %2343 = vmatpush1.bf16.msra.mxu0 0
    %2344 = vmatprep.subr.bf16.mxu0 0
    %2345 = vmatpush1.bf16.msra.mxu0 0
    %2346 = vmatprep.subr.bf16.mxu0 0
    %2347 = vmatpush1.bf16.msra.mxu0 0
    %2348 = vmatprep.subr.bf16.mxu0 0
    %2349 = vmatpush1.bf16.msra.mxu0 0
    %2350 = vmatprep.subr.bf16.mxu0 0
    %2351 = vmatpush1.bf16.msra.mxu0 0
    %2352 = vmatprep.subr.bf16.mxu0 0
    %2353 = vmatpush1.bf16.msra.mxu0 0
    %2354 = vmatprep.subr.bf16.mxu0 0
    %2355 = vmatpush1.bf16.msra.mxu0 0
    %2356 = vmatprep.subr.bf16.mxu0 0
    %2357 = vmatpush1.bf16.msra.mxu0 0
    %2358 = vmatprep.mubr.bf16.mxu0 0
    %2359 = vmatmul.mubr.bf16.gmra.mrb[0].mxu0 %v2321
    %v2360 = vpop.f32.mrb[0].mxu0
    %v2361 = vadd.f32 0.0, %v2360
    %v2362 = vpop.f32.mrb[0].mxu0
    %v2363 = vpop.f32.mrb[0].mxu0
    %v2364 = vpop.f32.mrb[0].mxu0
    %2365 = vdwg.mxu0
    %2367 = vrot.lane.b32.xlu0 %v1750, 96
    %v2368 = vpop.permute.xlu0 %2367
    %v2370 = vsel %vm518, %v2262, 0
    %v2373 = vsel %vm989, %v2368, 0
    %2375 = vmatprep.subr.bf16.mxu0 0
    %2376 = vmatpush1.bf16.msra.mxu0 %v2373
    %2377 = vmatprep.subr.bf16.mxu0 0
    %2378 = vmatpush1.bf16.msra.mxu0 0
    %2379 = vmatprep.subr.bf16.mxu0 0
    %2380 = vmatpush1.bf16.msra.mxu0 0
    %2381 = vmatprep.subr.bf16.mxu0 0
    %2382 = vmatpush1.bf16.msra.mxu0 0
    %2383 = vmatprep.subr.bf16.mxu0 0
    %2384 = vmatpush1.bf16.msra.mxu0 0
    %2385 = vmatprep.subr.bf16.mxu0 0
    %2386 = vmatpush1.bf16.msra.mxu0 0
    %2387 = vmatprep.subr.bf16.mxu0 0
    %2388 = vmatpush1.bf16.msra.mxu0 0
    %2389 = vmatprep.subr.bf16.mxu0 0
    %2390 = vmatpush1.bf16.msra.mxu0 0
    %2391 = vmatprep.subr.bf16.mxu0 0
    %2392 = vmatpush1.bf16.msra.mxu0 0
    %2393 = vmatprep.subr.bf16.mxu0 0
    %2394 = vmatpush1.bf16.msra.mxu0 0
    %2395 = vmatprep.subr.bf16.mxu0 0
    %2396 = vmatpush1.bf16.msra.mxu0 0
    %2397 = vmatprep.subr.bf16.mxu0 0
    %2398 = vmatpush1.bf16.msra.mxu0 0
    %2399 = vmatprep.subr.bf16.mxu0 0
    %2400 = vmatpush1.bf16.msra.mxu0 0
    %2401 = vmatprep.subr.bf16.mxu0 0
    %2402 = vmatpush1.bf16.msra.mxu0 0
    %2403 = vmatprep.subr.bf16.mxu0 0
    %2404 = vmatpush1.bf16.msra.mxu0 0
    %2405 = vmatprep.subr.bf16.mxu0 0
    %2406 = vmatpush1.bf16.msra.mxu0 0
    %2407 = vmatprep.mubr.bf16.mxu0 0
    %2408 = vmatmul.mubr.bf16.gmra.mrb[0].mxu0 %v2370
    %v2409 = vpop.f32.mrb[0].mxu0
    %v2410 = vadd.f32 0.0, %v2409
    %v2411 = vpop.f32.mrb[0].mxu0
    %v2412 = vpop.f32.mrb[0].mxu0
    %v2413 = vpop.f32.mrb[0].mxu0
    %2414 = vdwg.mxu0
    %2416 = vrot.lane.b32.xlu0 %v1751, 96
    %v2417 = vpop.permute.xlu0 %2416
    %v2419 = vsel %vm518, %v2263, 0
    %v2422 = vsel %vm989, %v2417, 0
    %2424 = vmatprep.subr.bf16.mxu0 0
    %2425 = vmatpush1.bf16.msra.mxu0 %v2422
    %2426 = vmatprep.subr.bf16.mxu0 0
    %2427 = vmatpush1.bf16.msra.mxu0 0
    %2428 = vmatprep.subr.bf16.mxu0 0
    %2429 = vmatpush1.bf16.msra.mxu0 0
    %2430 = vmatprep.subr.bf16.mxu0 0
    %2431 = vmatpush1.bf16.msra.mxu0 0
    %2432 = vmatprep.subr.bf16.mxu0 0
    %2433 = vmatpush1.bf16.msra.mxu0 0
    %2434 = vmatprep.subr.bf16.mxu0 0
    %2435 = vmatpush1.bf16.msra.mxu0 0
    %2436 = vmatprep.subr.bf16.mxu0 0
    %2437 = vmatpush1.bf16.msra.mxu0 0
    %2438 = vmatprep.subr.bf16.mxu0 0
    %2439 = vmatpush1.bf16.msra.mxu0 0
    %2440 = vmatprep.subr.bf16.mxu0 0
    %2441 = vmatpush1.bf16.msra.mxu0 0
    %2442 = vmatprep.subr.bf16.mxu0 0
    %2443 = vmatpush1.bf16.msra.mxu0 0
    %2444 = vmatprep.subr.bf16.mxu0 0
    %2445 = vmatpush1.bf16.msra.mxu0 0
    %2446 = vmatprep.subr.bf16.mxu0 0
    %2447 = vmatpush1.bf16.msra.mxu0 0
    %2448 = vmatprep.subr.bf16.mxu0 0
    %2449 = vmatpush1.bf16.msra.mxu0 0
    %2450 = vmatprep.subr.bf16.mxu0 0
    %2451 = vmatpush1.bf16.msra.mxu0 0
    %2452 = vmatprep.subr.bf16.mxu0 0
    %2453 = vmatpush1.bf16.msra.mxu0 0
    %2454 = vmatprep.subr.bf16.mxu0 0
    %2455 = vmatpush1.bf16.msra.mxu0 0
    %2456 = vmatprep.mubr.bf16.mxu0 0
    %2457 = vmatmul.mubr.bf16.gmra.mrb[0].mxu0 %v2419
    %v2458 = vpop.f32.mrb[0].mxu0
    %v2459 = vadd.f32 0.0, %v2458
    %v2460 = vpop.f32.mrb[0].mxu0
    %v2461 = vpop.f32.mrb[0].mxu0
    %v2462 = vpop.f32.mrb[0].mxu0
    %2463 = vdwg.mxu0
    %2465 = vrot.lane.b32.xlu0 %v1752, 96
    %v2466 = vpop.permute.xlu0 %2465
    %v2468 = vsel %vm518, %v2264, 0
    %v2471 = vsel %vm989, %v2466, 0
    %2473 = vmatprep.subr.bf16.mxu0 0
    %2474 = vmatpush1.bf16.msra.mxu0 %v2471
    %2475 = vmatprep.subr.bf16.mxu0 0
    %2476 = vmatpush1.bf16.msra.mxu0 0
    %2477 = vmatprep.subr.bf16.mxu0 0
    %2478 = vmatpush1.bf16.msra.mxu0 0
    %2479 = vmatprep.subr.bf16.mxu0 0
    %2480 = vmatpush1.bf16.msra.mxu0 0
    %2481 = vmatprep.subr.bf16.mxu0 0
    %2482 = vmatpush1.bf16.msra.mxu0 0
    %2483 = vmatprep.subr.bf16.mxu0 0
    %2484 = vmatpush1.bf16.msra.mxu0 0
    %2485 = vmatprep.subr.bf16.mxu0 0
    %2486 = vmatpush1.bf16.msra.mxu0 0
    %2487 = vmatprep.subr.bf16.mxu0 0
    %2488 = vmatpush1.bf16.msra.mxu0 0
    %2489 = vmatprep.subr.bf16.mxu0 0
    %2490 = vmatpush1.bf16.msra.mxu0 0
    %2491 = vmatprep.subr.bf16.mxu0 0
    %2492 = vmatpush1.bf16.msra.mxu0 0
    %2493 = vmatprep.subr.bf16.mxu0 0
    %2494 = vmatpush1.bf16.msra.mxu0 0
    %2495 = vmatprep.subr.bf16.mxu0 0
    %2496 = vmatpush1.bf16.msra.mxu0 0
    %2497 = vmatprep.subr.bf16.mxu0 0
    %2498 = vmatpush1.bf16.msra.mxu0 0
    %2499 = vmatprep.subr.bf16.mxu0 0
    %2500 = vmatpush1.bf16.msra.mxu0 0
    %2501 = vmatprep.subr.bf16.mxu0 0
    %2502 = vmatpush1.bf16.msra.mxu0 0
    %2503 = vmatprep.subr.bf16.mxu0 0
    %2504 = vmatpush1.bf16.msra.mxu0 0
    %2505 = vmatprep.mubr.bf16.mxu0 0
    %2506 = vmatmul.mubr.bf16.gmra.mrb[0].mxu0 %v2468
    %v2507 = vpop.f32.mrb[0].mxu0
    %v2508 = vadd.f32 0.0, %v2507
    %v2509 = vpop.f32.mrb[0].mxu0
    %v2510 = vpop.f32.mrb[0].mxu0
    %v2511 = vpop.f32.mrb[0].mxu0
    %2512 = vdwg.mxu0
    %2514 = vrot.lane.b32.xlu0 %v1753, 96
    %v2515 = vpop.permute.xlu0 %2514
    %v2517 = vsel %vm518, %v2265, 0
    %v2520 = vsel %vm989, %v2515, 0
    %2522 = vmatprep.subr.bf16.mxu0 0
    %2523 = vmatpush1.bf16.msra.mxu0 %v2520
    %2524 = vmatprep.subr.bf16.mxu0 0
    %2525 = vmatpush1.bf16.msra.mxu0 0
    %2526 = vmatprep.subr.bf16.mxu0 0
    %2527 = vmatpush1.bf16.msra.mxu0 0
    %2528 = vmatprep.subr.bf16.mxu0 0
    %2529 = vmatpush1.bf16.msra.mxu0 0
    %2530 = vmatprep.subr.bf16.mxu0 0
    %2531 = vmatpush1.bf16.msra.mxu0 0
    %2532 = vmatprep.subr.bf16.mxu0 0
    %2533 = vmatpush1.bf16.msra.mxu0 0
    %2534 = vmatprep.subr.bf16.mxu0 0
    %2535 = vmatpush1.bf16.msra.mxu0 0
    %2536 = vmatprep.subr.bf16.mxu0 0
    %2537 = vmatpush1.bf16.msra.mxu0 0
    %2538 = vmatprep.subr.bf16.mxu0 0
    %2539 = vmatpush1.bf16.msra.mxu0 0
    %2540 = vmatprep.subr.bf16.mxu0 0
    %2541 = vmatpush1.bf16.msra.mxu0 0
    %2542 = vmatprep.subr.bf16.mxu0 0
    %2543 = vmatpush1.bf16.msra.mxu0 0
    %2544 = vmatprep.subr.bf16.mxu0 0
    %2545 = vmatpush1.bf16.msra.mxu0 0
    %2546 = vmatprep.subr.bf16.mxu0 0
    %2547 = vmatpush1.bf16.msra.mxu0 0
    %2548 = vmatprep.subr.bf16.mxu0 0
    %2549 = vmatpush1.bf16.msra.mxu0 0
    %2550 = vmatprep.subr.bf16.mxu0 0
    %2551 = vmatpush1.bf16.msra.mxu0 0
    %2552 = vmatprep.subr.bf16.mxu0 0
    %2553 = vmatpush1.bf16.msra.mxu0 0
    %2554 = vmatprep.mubr.bf16.mxu0 0
    %2555 = vmatmul.mubr.bf16.gmra.mrb[0].mxu0 %v2517
    %v2556 = vpop.f32.mrb[0].mxu0
    %v2557 = vadd.f32 0.0, %v2556
    %v2558 = vpop.f32.mrb[0].mxu0
    %v2559 = vpop.f32.mrb[0].mxu0
    %v2560 = vpop.f32.mrb[0].mxu0
    %2561 = vdwg.mxu0
    %2563 = vrot.lane.b32.xlu0 %v1754, 96
    %v2564 = vpop.permute.xlu0 %2563
    %v2566 = vsel %vm518, %v2266, 0
    %v2569 = vsel %vm989, %v2564, 0
    %2571 = vmatprep.subr.bf16.mxu0 0
    %2572 = vmatpush1.bf16.msra.mxu0 %v2569
    %2573 = vmatprep.subr.bf16.mxu0 0
    %2574 = vmatpush1.bf16.msra.mxu0 0
    %2575 = vmatprep.subr.bf16.mxu0 0
    %2576 = vmatpush1.bf16.msra.mxu0 0
    %2577 = vmatprep.subr.bf16.mxu0 0
    %2578 = vmatpush1.bf16.msra.mxu0 0
    %2579 = vmatprep.subr.bf16.mxu0 0
    %2580 = vmatpush1.bf16.msra.mxu0 0
    %2581 = vmatprep.subr.bf16.mxu0 0
    %2582 = vmatpush1.bf16.msra.mxu0 0
    %2583 = vmatprep.subr.bf16.mxu0 0
    %2584 = vmatpush1.bf16.msra.mxu0 0
    %2585 = vmatprep.subr.bf16.mxu0 0
    %2586 = vmatpush1.bf16.msra.mxu0 0
    %2587 = vmatprep.subr.bf16.mxu0 0
    %2588 = vmatpush1.bf16.msra.mxu0 0
    %2589 = vmatprep.subr.bf16.mxu0 0
    %2590 = vmatpush1.bf16.msra.mxu0 0
    %2591 = vmatprep.subr.bf16.mxu0 0
    %2592 = vmatpush1.bf16.msra.mxu0 0
    %2593 = vmatprep.subr.bf16.mxu0 0
    %2594 = vmatpush1.bf16.msra.mxu0 0
    %2595 = vmatprep.subr.bf16.mxu0 0
    %2596 = vmatpush1.bf16.msra.mxu0 0
    %2597 = vmatprep.subr.bf16.mxu0 0
    %2598 = vmatpush1.bf16.msra.mxu0 0
    %2599 = vmatprep.subr.bf16.mxu0 0
    %2600 = vmatpush1.bf16.msra.mxu0 0
    %2601 = vmatprep.subr.bf16.mxu0 0
    %2602 = vmatpush1.bf16.msra.mxu0 0
    %2603 = vmatprep.mubr.bf16.mxu0 0
    %2604 = vmatmul.mubr.bf16.gmra.mrb[0].mxu0 %v2566
    %v2605 = vpop.f32.mrb[0].mxu0
    %v2606 = vadd.f32 0.0, %v2605
    %v2607 = vpop.f32.mrb[0].mxu0
    %v2608 = vpop.f32.mrb[0].mxu0
    %v2609 = vpop.f32.mrb[0].mxu0
    %2610 = vdwg.mxu0
    %2612 = vrot.lane.b32.xlu0 %v1755, 96
    %v2613 = vpop.permute.xlu0 %2612
    %v2615 = vsel %vm518, %v2267, 0
    %v2618 = vsel %vm989, %v2613, 0
    %2620 = vmatprep.subr.bf16.mxu0 0
    %2621 = vmatpush1.bf16.msra.mxu0 %v2618
    %2622 = vmatprep.subr.bf16.mxu0 0
    %2623 = vmatpush1.bf16.msra.mxu0 0
    %2624 = vmatprep.subr.bf16.mxu0 0
    %2625 = vmatpush1.bf16.msra.mxu0 0
    %2626 = vmatprep.subr.bf16.mxu0 0
    %2627 = vmatpush1.bf16.msra.mxu0 0
    %2628 = vmatprep.subr.bf16.mxu0 0
    %2629 = vmatpush1.bf16.msra.mxu0 0
    %2630 = vmatprep.subr.bf16.mxu0 0
    %2631 = vmatpush1.bf16.msra.mxu0 0
    %2632 = vmatprep.subr.bf16.mxu0 0
    %2633 = vmatpush1.bf16.msra.mxu0 0
    %2634 = vmatprep.subr.bf16.mxu0 0
    %2635 = vmatpush1.bf16.msra.mxu0 0
    %2636 = vmatprep.subr.bf16.mxu0 0
    %2637 = vmatpush1.bf16.msra.mxu0 0
    %2638 = vmatprep.subr.bf16.mxu0 0
    %2639 = vmatpush1.bf16.msra.mxu0 0
    %2640 = vmatprep.subr.bf16.mxu0 0
    %2641 = vmatpush1.bf16.msra.mxu0 0
    %2642 = vmatprep.subr.bf16.mxu0 0
    %2643 = vmatpush1.bf16.msra.mxu0 0
    %2644 = vmatprep.subr.bf16.mxu0 0
    %2645 = vmatpush1.bf16.msra.mxu0 0
    %2646 = vmatprep.subr.bf16.mxu0 0
    %2647 = vmatpush1.bf16.msra.mxu0 0
    %2648 = vmatprep.subr.bf16.mxu0 0
    %2649 = vmatpush1.bf16.msra.mxu0 0
    %2650 = vmatprep.subr.bf16.mxu0 0
    %2651 = vmatpush1.bf16.msra.mxu0 0
    %2652 = vmatprep.mubr.bf16.mxu0 0
    %2653 = vmatmul.mubr.bf16.gmra.mrb[0].mxu0 %v2615
    %v2654 = vpop.f32.mrb[0].mxu0
    %v2655 = vadd.f32 0.0, %v2654
    %v2656 = vpop.f32.mrb[0].mxu0
    %v2657 = vpop.f32.mrb[0].mxu0
    %v2658 = vpop.f32.mrb[0].mxu0
    %2659 = vdwg.mxu0
    %2662 = vrot.lane.b32.xlu0 %v2361, 8
    %v2663 = vpop.permute.xlu0 %2662
    %2664 = vrot.lane.b32.xlu0 %v2557, 8
    %v2665 = vpop.permute.xlu0 %2664
    %2670 = vrot.lane.b32.xlu0 %v2410, 16
    %v2671 = vpop.permute.xlu0 %2670
    %2672 = vrot.lane.b32.xlu0 %v2606, 16
    %v2673 = vpop.permute.xlu0 %2672
    %2678 = vrot.lane.b32.xlu0 %v2459, 24
    %v2679 = vpop.permute.xlu0 %2678
    %2680 = vrot.lane.b32.xlu0 %v2655, 24
    %v2681 = vpop.permute.xlu0 %2680
    %v2684 = vsel %vm518, %v2312, %v2663
    %v2685 = vsel %vm518, %v2508, %v2665
    %v2686 = vsel %vm1402, %v2684, %v2671
    %v2687 = vsel %vm1402, %v2685, %v2673
    %v2688 = vsel %vm1405, %v2686, %v2679
    %v2689 = vsel %vm1405, %v2687, %v2681
    %v2690 = vpack.c.bf16 %v2689, %v2688
    %v2692 = vlaneseq
    %v2693 = vshrl.u32 %v2692, 7
    %v2694 = vsub.s32 0, %v2693
    %v2695 = vrot.slane %v1563, %v2694
    %v2701 = vunpack.c.l.b16 %v1559
    %v2702 = vunpack.c.l.b16 %v1560
    %v2703 = vunpack.c.l.b16 %v1561
    %v2704 = vunpack.c.l.b16 %v1562
    %v2705 = vpack.c.b16 %v2702, %v2701
    %v2706 = vpack.c.b16 %v2704, %v2703
    %v2710 = vsel %vm241, %v2690, 0
    %2712 = vmatprep.subr.bf16.mxu0 0
    %2713 = vmatpush1.bf16.msra.mxu0 %v2705
    %2714 = vmatprep.subr.bf16.mxu0 0
    %2715 = vmatpush1.bf16.msra.mxu0 %v2706
    %2716 = vmatprep.subr.bf16.mxu0 0
    %2717 = vmatpush1.bf16.msra.mxu0 0
    %2718 = vmatprep.subr.bf16.mxu0 0
    %2719 = vmatpush1.bf16.msra.mxu0 0
    %2720 = vmatprep.subr.bf16.mxu0 0
    %2721 = vmatpush1.bf16.msra.mxu0 0
    %2722 = vmatprep.subr.bf16.mxu0 0
    %2723 = vmatpush1.bf16.msra.mxu0 0
    %2724 = vmatprep.subr.bf16.mxu0 0
    %2725 = vmatpush1.bf16.msra.mxu0 0
    %2726 = vmatprep.subr.bf16.mxu0 0
    %2727 = vmatpush1.bf16.msra.mxu0 0
    %2728 = vmatprep.subr.bf16.mxu0 0
    %2729 = vmatpush1.bf16.msra.mxu0 0
    %2730 = vmatprep.subr.bf16.mxu0 0
    %2731 = vmatpush1.bf16.msra.mxu0 0
    %2732 = vmatprep.subr.bf16.mxu0 0
    %2733 = vmatpush1.bf16.msra.mxu0 0
    %2734 = vmatprep.subr.bf16.mxu0 0
    %2735 = vmatpush1.bf16.msra.mxu0 0
    %2736 = vmatprep.subr.bf16.mxu0 0
    %2737 = vmatpush1.bf16.msra.mxu0 0
    %2738 = vmatprep.subr.bf16.mxu0 0
    %2739 = vmatpush1.bf16.msra.mxu0 0
    %2740 = vmatprep.subr.bf16.mxu0 0
    %2741 = vmatpush1.bf16.msra.mxu0 0
    %2742 = vmatprep.subr.bf16.mxu0 0
    %2743 = vmatpush1.bf16.msra.mxu0 0
    %2744 = vmatprep.mubr.bf16.mxu0 0
    %2745 = vmatmul.mubr.bf16.gmra.mrb[0].mxu0 %v2710
    %v2746 = vpop.f32.mrb[0].mxu0
    %v2747 = vadd.f32 %v2695, %v2746
    %v2748 = vpop.f32.mrb[0].mxu0
    %v2749 = vpop.f32.mrb[0].mxu0
    %v2750 = vadd.f32 %v2695, %v2749
    %v2751 = vpop.f32.mrb[0].mxu0
    %2752 = vdwg.mxu0
    %v2753 = vadd.f32 %v1471, %v2747
    %v2754 = vadd.f32 %v1472, %v2750
    %v2755 = vsel %vm241, %v2753, 0.0
    %2756 = vadd.xlane.f32.xlu0 %v2755
    %v2757 = vpop.xlane.xlu0 %2756
    %v2758 = vsel %vm241, %v2754, 0.0
    %2759 = vadd.xlane.f32.xlu0 %v2758
    %v2760 = vpop.xlane.xlu0 %2759
    %v2761 = vmul.f32 %v2757, %v248
    %v2762 = vmul.f32 %v2760, %v248
    %v2763 = vsub.f32 %v2753, %v2761
    %v2764 = vsub.f32 %v2754, %v2762
    %v2765 = vmul.f32 %v2763, %v2763
    %v2766 = vmul.f32 %v2764, %v2764
    %v2767 = vsel %vm241, %v2765, 0.0
    %2768 = vadd.xlane.f32.xlu0 %v2767
    %v2769 = vpop.xlane.xlu0 %2768
    %v2770 = vsel %vm241, %v2766, 0.0
    %2771 = vadd.xlane.f32.xlu0 %v2770
    %v2772 = vpop.xlane.xlu0 %2771
    %v2773 = vmul.f32 %v2769, %v248
    %v2774 = vmul.f32 %v2772, %v248
    %v2775 = vadd.f32 %v2773, 1e-05
    %v2776 = vadd.f32 %v2774, 1e-05
    %v2777 = vrsqrt.pop %v2775
    %v2778 = vrsqrt.pop %v2776
    %v2779 = vmul.f32 %v2763, %v2777
    %v2780 = vmul.f32 %v2764, %v2778
    %v2781 = vlaneseq
    %v2782 = vshrl.u32 %v2781, 7
    %v2783 = vsub.s32 4, %v2782
    %v2784 = vrot.slane %v233, %v2783
    %v2785 = vmul.f32 %v2779, %v2784
    %v2786 = vmul.f32 %v2780, %v2784
    %v2787 = vlaneseq
    %v2788 = vshrl.u32 %v2787, 7
    %v2789 = vsub.s32 4, %v2788
    %v2790 = vrot.slane %v234, %v2789
    %v2791 = vadd.f32 %v2785, %v2790
    %v2792 = vadd.f32 %v2786, %v2790
    %v2793 = vpack.c.bf16 %v2792, %v2791
    %v2794 = vld [vmem:[%s18] sm:$0xf]
    %v2795 = vld [vmem:[%s18 + $0x4] sm:$0xf]
    %v2796 = vld [vmem:[%s18 + $0x8] sm:$0xf]
    %v2797 = vld [vmem:[%s18 + $0xc] sm:$0xf]
    %v2798 = vld [vmem:[%s19] sm:$0x1]
    %v2800 = vlaneseq
    %v2801 = vshrl.u32 %v2800, 7
    %v2802 = vsub.s32 0, %v2801
    %v2803 = vrot.slane %v2798, %v2802
    %v2809 = vunpack.c.l.b16 %v2794
    %v2810 = vunpack.c.l.b16 %v2795
    %v2811 = vunpack.c.l.b16 %v2796
    %v2812 = vunpack.c.l.b16 %v2797
    %v2813 = vpack.c.b16 %v2810, %v2809
    %v2814 = vpack.c.b16 %v2812, %v2811
    %v2818 = vsel %vm241, %v2793, 0
    %2820 = vmatprep.subr.bf16.mxu0 0
    %2821 = vmatpush1.bf16.msra.mxu0 %v2813
    %2822 = vmatprep.subr.bf16.mxu0 0
    %2823 = vmatpush1.bf16.msra.mxu0 %v2814
    %2824 = vmatprep.subr.bf16.mxu0 0
    %2825 = vmatpush1.bf16.msra.mxu0 0
    %2826 = vmatprep.subr.bf16.mxu0 0
    %2827 = vmatpush1.bf16.msra.mxu0 0
    %2828 = vmatprep.subr.bf16.mxu0 0
    %2829 = vmatpush1.bf16.msra.mxu0 0
    %2830 = vmatprep.subr.bf16.mxu0 0
    %2831 = vmatpush1.bf16.msra.mxu0 0
    %2832 = vmatprep.subr.bf16.mxu0 0
    %2833 = vmatpush1.bf16.msra.mxu0 0
    %2834 = vmatprep.subr.bf16.mxu0 0
    %2835 = vmatpush1.bf16.msra.mxu0 0
    %2836 = vmatprep.subr.bf16.mxu0 0
    %2837 = vmatpush1.bf16.msra.mxu0 0
    %2838 = vmatprep.subr.bf16.mxu0 0
    %2839 = vmatpush1.bf16.msra.mxu0 0
    %2840 = vmatprep.subr.bf16.mxu0 0
    %2841 = vmatpush1.bf16.msra.mxu0 0
    %2842 = vmatprep.subr.bf16.mxu0 0
    %2843 = vmatpush1.bf16.msra.mxu0 0
    %2844 = vmatprep.subr.bf16.mxu0 0
    %2845 = vmatpush1.bf16.msra.mxu0 0
    %2846 = vmatprep.subr.bf16.mxu0 0
    %2847 = vmatpush1.bf16.msra.mxu0 0
    %2848 = vmatprep.subr.bf16.mxu0 0
    %2849 = vmatpush1.bf16.msra.mxu0 0
    %2850 = vmatprep.subr.bf16.mxu0 0
    %2851 = vmatpush1.bf16.msra.mxu0 0
    %2852 = vmatprep.mubr.bf16.mxu0 0
    %2853 = vmatmul.mubr.bf16.gmra.mrb[0].mxu0 %v2818
    %v2854 = vpop.f32.mrb[0].mxu0
    %v2855 = vadd.f32 %v2803, %v2854
    %v2856 = vpop.f32.mrb[0].mxu0
    %v2857 = vpop.f32.mrb[0].mxu0
    %v2858 = vadd.f32 %v2803, %v2857
    %v2859 = vpop.f32.mrb[0].mxu0
    %2860 = vdwg.mxu0
    %v2861 = vxor.u32 %v2855, 2147483648
    %v2862 = vxor.u32 %v2858, 2147483648
    %v2863 = vmul.f32 %v2861, 1.442695
    %v2864 = vpow.pop %v2863
    %v2865 = vmul.f32 %v2862, 1.442695
    %v2866 = vpow.pop %v2865
    %v2867 = vadd.f32 %v2864, 1.0
    %v2868 = vadd.f32 %v2866, 1.0
    %v2869 = vrcp.pop %v2867
    %v2870 = vmul.f32 1.0, %v2869
    %v2871 = vrcp.pop %v2868
    %v2872 = vmul.f32 1.0, %v2871
    %v2873 = vmul.f32 %v2855, %v2870
    %v2874 = vmul.f32 %v2858, %v2872
    %2877 = vrot.lane.b32.xlu0 %v2855, 64
    %v2878 = vpop.permute.xlu0 %2877
    %2879 = vrot.lane.b32.xlu0 %v2858, 64
    %v2880 = vpop.permute.xlu0 %2879
    %v2883 = vmul.f32 %v2873, %v2878
    %v2884 = vmul.f32 %v2874, %v2880
    %v2885 = vpack.c.bf16 %v2884, %v2883
    %v2886 = vld [vmem:[%s20] sm:$0xf]
    %v2887 = vld [vmem:[%s20 + $0x4] sm:$0xf]
    %v2888 = vld [vmem:[%s20 + $0x8] sm:$0xf]
    %v2889 = vld [vmem:[%s20 + $0xc] sm:$0xf]
    %v2890 = vld [vmem:[%s20 + $0x10] sm:$0xf]
    %v2891 = vld [vmem:[%s20 + $0x14] sm:$0xf]
    %v2892 = vld [vmem:[%s20 + $0x18] sm:$0xf]
    %v2893 = vld [vmem:[%s20 + $0x1c] sm:$0xf]
    %v2894 = vld [vmem:[%s21] sm:$0x1]
    %v2896 = vlaneseq
    %v2897 = vshrl.u32 %v2896, 7
    %v2898 = vsub.s32 0, %v2897
    %v2899 = vrot.slane %v2894, %v2898
    %v2909 = vunpack.c.l.b16 %v2886
    %v2910 = vunpack.c.l.b16 %v2887
    %v2911 = vunpack.c.l.b16 %v2888
    %v2912 = vunpack.c.l.b16 %v2889
    %v2913 = vunpack.c.l.b16 %v2890
    %v2914 = vunpack.c.l.b16 %v2891
    %v2915 = vunpack.c.l.b16 %v2892
    %v2916 = vunpack.c.l.b16 %v2893
    %v2917 = vpack.c.b16 %v2910, %v2909
    %v2918 = vpack.c.b16 %v2912, %v2911
    %v2919 = vpack.c.b16 %v2914, %v2913
    %v2920 = vpack.c.b16 %v2916, %v2915
    %vm2925 = vcmask 523264
    %v2927 = vsel %vm2925, %v2885, 0
    %2929 = vmatprep.subr.bf16.mxu0 0
    %2930 = vmatpush1.bf16.msra.mxu0 %v2917
    %2931 = vmatprep.subr.bf16.mxu0 0
    %2932 = vmatpush1.bf16.msra.mxu0 %v2918
    %2933 = vmatprep.subr.bf16.mxu0 0
    %2934 = vmatpush1.bf16.msra.mxu0 %v2919
    %2935 = vmatprep.subr.bf16.mxu0 0
    %2936 = vmatpush1.bf16.msra.mxu0 %v2920
    %2937 = vmatprep.subr.bf16.mxu0 0
    %2938 = vmatpush1.bf16.msra.mxu0 0
    %2939 = vmatprep.subr.bf16.mxu0 0
    %2940 = vmatpush1.bf16.msra.mxu0 0
    %2941 = vmatprep.subr.bf16.mxu0 0
    %2942 = vmatpush1.bf16.msra.mxu0 0
    %2943 = vmatprep.subr.bf16.mxu0 0
    %2944 = vmatpush1.bf16.msra.mxu0 0
    %2945 = vmatprep.subr.bf16.mxu0 0
    %2946 = vmatpush1.bf16.msra.mxu0 0
    %2947 = vmatprep.subr.bf16.mxu0 0
    %2948 = vmatpush1.bf16.msra.mxu0 0
    %2949 = vmatprep.subr.bf16.mxu0 0
    %2950 = vmatpush1.bf16.msra.mxu0 0
    %2951 = vmatprep.subr.bf16.mxu0 0
    %2952 = vmatpush1.bf16.msra.mxu0 0
    %2953 = vmatprep.subr.bf16.mxu0 0
    %2954 = vmatpush1.bf16.msra.mxu0 0
    %2955 = vmatprep.subr.bf16.mxu0 0
    %2956 = vmatpush1.bf16.msra.mxu0 0
    %2957 = vmatprep.subr.bf16.mxu0 0
    %2958 = vmatpush1.bf16.msra.mxu0 0
    %2959 = vmatprep.subr.bf16.mxu0 0
    %2960 = vmatpush1.bf16.msra.mxu0 0
    %2961 = vmatprep.mubr.bf16.mxu0 0
    %2962 = vmatmul.mubr.bf16.gmra.mrb[0].mxu0 %v2927
    %v2963 = vpop.f32.mrb[0].mxu0
    %v2964 = vadd.f32 %v2899, %v2963
    %v2965 = vpop.f32.mrb[0].mxu0
    %v2966 = vpop.f32.mrb[0].mxu0
    %v2967 = vadd.f32 %v2899, %v2966
    %v2968 = vpop.f32.mrb[0].mxu0
    %2969 = vdwg.mxu0
    %v2970 = vadd.f32 %v2753, %v2964
    %v2971 = vadd.f32 %v2754, %v2967
    %2972 = vst.msk [vmem:[#allocation23] sm:$0xff] %vm241, %v2970
    %2973 = vst.msk [vmem:[#allocation23 + $0x8] sm:$0xff] %vm241, %v2971
    // Predicated region
    $region142: #{tpu_custom_call.1} parent=1 // pred_check
      _
    $region143: #{tpu_custom_call.1} parent=1 // pred_check_branch
      %2975 = sbr.rel (0) target = $region145
    $region144: #{tpu_custom_call.1} parent=1 // pred_region
      %s2977 = ssub.s32 256, 256
      %2978 = vsyncadd [#allocation4], %s2977
      %s2979 = sshll.u32 [#allocation23], 4
      %s2980 = int_to_ptr.vmem [resolvable:$true] %s2979
      %2985 = dma.vmem_to_hbm [thread:$0]  %s2980, 256, %s22, [#allocation4], 128, 128, 8
    $region145: #{tpu_custom_call.1} parent=1 // pred_fallthru
      _
    // Predicated region
    $region146: #{tpu_custom_call.1} parent=1 // pred_check
      _
    $region147: #{tpu_custom_call.1} parent=1 // pred_check_branch
      %2987 = sbr.rel (0) target = $region149
    $region148: #{tpu_custom_call.1} parent=1 // pred_region
      %2988 = dma.done [#allocation4], 256
    $region149: #{tpu_custom_call.1} parent=1 // pred_fallthru
      _
    %2989 = vsyncpa [#allocation3], 1
    %2990 = vsyncpa [#allocation6], 1
    %2991 = vsyncpa [#allocation9], 1
    %2992 = vsyncpa [#allocation12], 1
    %2993 = vsyncpa [#allocation15], 1
    %2994 = vsyncpa [#allocation18], 1
    %2995 = vsyncpa [#allocation21], 1
    %2996 = vsyncpa [#allocation4], 1

</llo_original>
